<compile_context>
chip_gen: v7x
topology: tpu7x:2x2x1
jax: 0.10.0
libtpu: 0.0.40
codegen_flags: <defaults>
</compile_context>

<pallas_src>
import jax
import jax.numpy as jnp
from jax.experimental import pallas as pl
from jax.experimental.pallas import tpu as pltpu

# ----------------------------- model config ---------------------------------
N_MODELS = 2
EMBED_DIM = 32
DETER_DIM = 32
STOC_DIM = 8
HIDDEN_DIM = 32
ACTION_DIM = 4
BATCH = 8            # multiple of 8 -> full sublane groups
SEQ_LEN = 8
LN_EPS = 1e-3
DIST_DIM = 2 * STOC_DIM          # mean | std (discrete=False)

# --- field-aligned input slab (T, 4, B, 32): each field starts at lane 0 -----
F_EMB, F_ACT, F_MASK, F_NOISE = 0, 1, 2, 3
N_FIELDS = 4
FIELD_W = 32                      # = EMBED_DIM = HIDDEN_DIM = DETER_DIM

# --- f32 aux slab (16, 128): biases + LayerNorm params -----------------------
R_PRE_B = 0
R_LNR_G, R_LNR_B = 1, 2
R_LNU_G, R_LNU_B = 3, 4
R_LNN_G, R_LNN_B = 5, 6
R_B1 = 7                          # [prior_b1 (32) | post_b1 (32)]
R_B2 = 8                          # [prior_b2 (16) | post_b2 (16)]
AUX_ROWS, AUX_COLS = 16, 128

# --- packed output slab (T, B, 128): full-lane stores ------------------------
OUT_DET = 0
OUT_PM = OUT_DET + DETER_DIM      # 32
OUT_PS = OUT_PM + STOC_DIM        # 40
OUT_QM = OUT_PS + STOC_DIM        # 48
OUT_QS = OUT_QM + STOC_DIM        # 56
OUT_ST = OUT_QS + STOC_DIM        # 64
OUT_USED = OUT_ST + STOC_DIM      # 72
OUT_WIDTH = 128                   # padded to one full lane group


# ----------------------------- shared math -----------------------------------
def bf16_dot(a, b):
    """MXU matmul: bf16 operands, f32 accumulation."""
    return jnp.dot(a.astype(jnp.bfloat16), b.astype(jnp.bfloat16),
                   preferred_element_type=jnp.float32)


def f32_dot(a, b):
    """Full-precision matmul (reference only, matches PyTorch f32 numerics)."""
    return jnp.dot(a, b, precision=jax.lax.Precision.HIGHEST)


def layer_norm(v, g, b):
    mu = jnp.mean(v, axis=-1, keepdims=True)
    var = jnp.mean(jnp.square(v - mu), axis=-1, keepdims=True)
    return (v - mu) * jax.lax.rsqrt(var + LN_EPS) * g + b


# ------------------------------- kernel --------------------------------------
def rssm_seq_kernel(seq_ref, state0_ref, wpre_ref, wgate_ref, w1_ref, w2_ref,
                    aux_ref, out_ref):
    T, B = out_ref.shape[0], out_ref.shape[1]
    D, S, H = DETER_DIM, STOC_DIM, HIDDEN_DIM

    # ---- loop-invariant unpacking (hoisted out of the time loop) ------------
    w_pre = wpre_ref[...]            # (16, 32)  bf16
    w_gate = wgate_ref[...]          # (64, 128) bf16
    w1 = w1_ref[...]                 # (64, 64)  bf16
    w2 = w2_ref[...]                 # (64, 32)  bf16

    aux = aux_ref[...]               # (16, 128) f32
    bc = lambda v: jnp.broadcast_to(v, (B, v.shape[-1]))   # hoisted broadcasts
    pre_b = bc(aux[R_PRE_B:R_PRE_B + 1, :H])
    lnr_g, lnr_b = bc(aux[R_LNR_G:R_LNR_G + 1, :D]), bc(aux[R_LNR_B:R_LNR_B + 1, :D])
    lnu_g, lnu_b = bc(aux[R_LNU_G:R_LNU_G + 1, :D]), bc(aux[R_LNU_B:R_LNU_B + 1, :D])
    lnn_g, lnn_b = bc(aux[R_LNN_G:R_LNN_G + 1, :D]), bc(aux[R_LNN_B:R_LNN_B + 1, :D])
    b1 = bc(aux[R_B1:R_B1 + 1, :2 * H])
    b2 = bc(aux[R_B2:R_B2 + 1, :2 * DIST_DIM])
    out_pad = jnp.zeros((B, OUT_WIDTH - OUT_USED), jnp.float32)

    st0 = state0_ref[...]
    deter0 = st0[:, :D]
    stoc0 = st0[:, D:D + S]

    def step(t, carry):
        deter, stoc = carry
        blk = seq_ref[t]                       # (4, B, 32) f32
        embed = blk[F_EMB]                     # (B, 32)
        act8 = blk[F_ACT][:, :S]               # (B, 8) = [action(4) | 0(4)]
        mask = blk[F_MASK]                     # (B, 32) mask broadcast over lanes
        noise = blk[F_NOISE][:, :S]            # (B, 8)

        # hidden_state *= mask
        deter = deter * mask
        stoc = stoc * mask[:, :S]

        # x = relu(pre_gru(cat([prev_latent, action], -1)))   (one fused matmul)
        sa = jnp.concatenate([stoc, act8], axis=-1)                  # (B, 16)
        x = jnp.maximum(bf16_dot(sa, w_pre) + pre_b, 0.0)            # (B, 32)

        # NormGRUCell: all gate matmuls fused into one (B,64)@(64,128):
        #   cols [0:D)   reset_i+reset_h    cols [2D:3D) newval_i
        #   cols [D:2D)  update_i+update_h  cols [3D:4D) newval_h
        xd = jnp.concatenate([x, deter], axis=-1)                    # (B, 64)
        g = bf16_dot(xd, w_gate)                                     # (B, 128)
        reset = jax.nn.sigmoid(layer_norm(g[:, 0:D], lnr_g, lnr_b))
        update = jax.nn.sigmoid(layer_norm(g[:, D:2 * D], lnu_g, lnu_b))
        newval = jnp.tanh(layer_norm(g[:, 2 * D:3 * D] + reset * g[:, 3 * D:4 * D],
                                     lnn_g, lnn_b))
        h = update * newval + (1.0 - update) * deter                 # new deter

        # prior & post hidden layers fused: [h | embed] @ [[PW1, QW1h],[0, QW1e]]
        he = jnp.concatenate([h, embed], axis=-1)                    # (B, 64)
        pq = jnp.maximum(bf16_dot(he, w1) + b1, 0.0)                 # (B, 64) = [ph|qh]

        # prior & post heads fused: [ph | qh] @ blockdiag(PW2, QW2)
        dist = bf16_dot(pq, w2) + b2                                 # (B, 32)
        prior_mean = dist[:, 0:S]
        prior_std = jax.nn.softplus(dist[:, S:2 * S]) + 0.1
        post_mean = dist[:, 2 * S:3 * S]
        post_std = jax.nn.softplus(dist[:, 3 * S:4 * S]) + 0.1

        # Normal(mean, std).rsample() with host-supplied standard-normal noise
        stoc_new = post_mean + post_std * noise

        # single full-lane (128-wide) store per step into the resident output
        out_ref[t] = jnp.concatenate(
            [h, prior_mean, prior_std, post_mean, post_std, stoc_new, out_pad],
            axis=-1)
        return h, stoc_new

    jax.lax.fori_loop(0, T, step, (deter0, stoc0), unroll=True)


# ------------------------- params & one-time packing --------------------------
def init_params(key):
    """Deterministic parameter init (stand-in for rssm_weight_init)."""
    ks = jax.random.split(key, 16)
    scale = 0.1
    p = {}
    pre_in = STOC_DIM + ACTION_DIM
    p["pre_w"] = scale * jax.random.normal(ks[0], (HIDDEN_DIM, pre_in), jnp.float32)
    p["pre_b"] = scale * jax.random.normal(ks[1], (HIDDEN_DIM,), jnp.float32)
    p["gru_w_ih"] = scale * jax.random.normal(ks[2], (3 * DETER_DIM, HIDDEN_DIM), jnp.float32)
    p["gru_w_hh"] = scale * jax.random.normal(ks[3], (3 * DETER_DIM, DETER_DIM), jnp.float32)
    for name in ("reset", "update", "newval"):
        p[f"ln_{name}_g"] = jnp.ones((DETER_DIM,), jnp.float32)
        p[f"ln_{name}_b"] = jnp.zeros((DETER_DIM,), jnp.float32)
    p["prior_w1"] = scale * jax.random.normal(ks[4], (N_MODELS, HIDDEN_DIM, DETER_DIM), jnp.float32)
    p["prior_b1"] = scale * jax.random.normal(ks[5], (N_MODELS, HIDDEN_DIM), jnp.float32)
    p["prior_w2"] = scale * jax.random.normal(ks[6], (N_MODELS, DIST_DIM, HIDDEN_DIM), jnp.float32)
    p["prior_b2"] = scale * jax.random.normal(ks[7], (N_MODELS, DIST_DIM), jnp.float32)
    p["post_w1"] = scale * jax.random.normal(ks[8], (HIDDEN_DIM, DETER_DIM + EMBED_DIM), jnp.float32)
    p["post_b1"] = scale * jax.random.normal(ks[9], (HIDDEN_DIM,), jnp.float32)
    p["post_w2"] = scale * jax.random.normal(ks[10], (DIST_DIM, HIDDEN_DIM), jnp.float32)
    p["post_b2"] = scale * jax.random.normal(ks[11], (DIST_DIM,), jnp.float32)
    return p


def pack_params(params, model_idx=0):
    """One-time packing: K-concat / block-diagonal weight blocks + bf16 cast.
    Done once at init, NOT in the per-call hot path."""
    H, D, S, A, E = HIDDEN_DIM, DETER_DIM, STOC_DIM, ACTION_DIM, EMBED_DIM
    DD = DIST_DIM

    # pre_gru: LHS = [stoc(8) | action(4) | 0(4)]  ->  (16, H)
    preT = params["pre_w"].T                                   # (S+A, H)
    w_pre = jnp.zeros((2 * S, H), jnp.float32)
    w_pre = w_pre.at[0:S].set(preT[:S])
    w_pre = w_pre.at[S:S + A].set(preT[S:])

    # gates: LHS = [x(32) | deter(32)] -> (64, 128)
    ihT = params["gru_w_ih"].T                                 # (H, 3D) cols [r|u|n]
    hhT = params["gru_w_hh"].T                                 # (D, 3D)
    w_gate = jnp.zeros((H + D, 4 * D), jnp.float32)
    w_gate = w_gate.at[:H, 0:D].set(ihT[:, 0:D])               # reset_i
    w_gate = w_gate.at[:H, D:2 * D].set(ihT[:, D:2 * D])       # update_i
    w_gate = w_gate.at[:H, 2 * D:3 * D].set(ihT[:, 2 * D:3 * D])  # newval_i
    w_gate = w_gate.at[H:, 0:D].set(hhT[:, 0:D])               # reset_h
    w_gate = w_gate.at[H:, D:2 * D].set(hhT[:, D:2 * D])       # update_h
    w_gate = w_gate.at[H:, 3 * D:4 * D].set(hhT[:, 2 * D:3 * D])  # newval_h

    # hidden layers: LHS = [h(32) | embed(32)] -> (64, 64) = [[PW1, QW1h],[0, QW1e]]
    w1 = jnp.zeros((D + E, 2 * H), jnp.float32)
    w1 = w1.at[:D, 0:H].set(params["prior_w1"][model_idx].T)   # (D, H)
    postT = params["post_w1"].T                                # (D+E, H)
    w1 = w1.at[:D, H:2 * H].set(postT[:D])
    w1 = w1.at[D:, H:2 * H].set(postT[D:])

    # heads: LHS = [ph(32) | qh(32)] -> (64, 32) = blockdiag(PW2.T, QW2.T)
    w2 = jnp.zeros((2 * H, 2 * DD), jnp.float32)
    w2 = w2.at[:H, 0:DD].set(params["prior_w2"][model_idx].T)
    w2 = w2.at[H:, DD:2 * DD].set(params["post_w2"].T)

    aux = jnp.zeros((AUX_ROWS, AUX_COLS), jnp.float32)
    aux = aux.at[R_PRE_B, :H].set(params["pre_b"])
    aux = aux.at[R_LNR_G, :D].set(params["ln_reset_g"])
    aux = aux.at[R_LNR_B, :D].set(params["ln_reset_b"])
    aux = aux.at[R_LNU_G, :D].set(params["ln_update_g"])
    aux = aux.at[R_LNU_B, :D].set(params["ln_update_b"])
    aux = aux.at[R_LNN_G, :D].set(params["ln_newval_g"])
    aux = aux.at[R_LNN_B, :D].set(params["ln_newval_b"])
    aux = aux.at[R_B1, :H].set(params["prior_b1"][model_idx])
    aux = aux.at[R_B1, H:2 * H].set(params["post_b1"])
    aux = aux.at[R_B2, :DD].set(params["prior_b2"][model_idx])
    aux = aux.at[R_B2, DD:2 * DD].set(params["post_b2"])

    return {"w_pre": w_pre.astype(jnp.bfloat16),
            "w_gate": w_gate.astype(jnp.bfloat16),
            "w1": w1.astype(jnp.bfloat16),
            "w2": w2.astype(jnp.bfloat16),
            "aux": aux}


def pack_sequence(embeds, actions, masks, noises):
    """(T,B,E) | (T,B,A) | (T,B,1) | (T,B,S) -> (T, 4, B, 32) field-aligned slab."""
    T, B = embeds.shape[:2]
    pad = lambda a: jnp.pad(a, ((0, 0), (0, 0), (0, FIELD_W - a.shape[-1])))
    return jnp.stack([pad(embeds), pad(actions),
                      jnp.broadcast_to(masks, (T, B, FIELD_W)), pad(noises)], axis=1)


# ------------------------------- wrappers -------------------------------------
@jax.jit
def rssm_sequence_forward(packed, seq_in, state0):
    T, _, B, _ = seq_in.shape
    vmem = pl.BlockSpec(memory_space=pltpu.MemorySpace.VMEM)   # whole array resident
    out = pl.pallas_call(
        rssm_seq_kernel,
        out_shape=jax.ShapeDtypeStruct((T, B, OUT_WIDTH), jnp.float32),
        in_specs=[vmem] * 7,
        out_specs=vmem,
    )(seq_in, state0, packed["w_pre"], packed["w_gate"],
      packed["w1"], packed["w2"], packed["aux"])

    post_stats = {"mean": out[..., OUT_QM:OUT_QM + STOC_DIM],
                  "std": out[..., OUT_QS:OUT_QS + STOC_DIM]}
    prior_stats = {"mean": out[..., OUT_PM:OUT_PM + STOC_DIM],
                   "std": out[..., OUT_PS:OUT_PS + STOC_DIM]}
    state = {"deter": out[..., OUT_DET:OUT_DET + DETER_DIM],
             "stoc": out[..., OUT_ST:OUT_ST + STOC_DIM]}
    return post_stats, prior_stats, state


def rssm_cell_forward(packed, embedding, action, mask, deter, stoc, noise):
    """Single-step forward (exact RSSMCell.forward semantics): T=1 call."""
    seq_in = pack_sequence(embedding[None], action[None], mask[None], noise[None])
    state0 = jnp.concatenate([deter, stoc], axis=-1)
    post, prior, state = rssm_sequence_forward(packed, seq_in, state0)
    squeeze = lambda tree: jax.tree.map(lambda v: v[0], tree)
    return squeeze(post), squeeze(prior), squeeze(state)


# --------------------------- pure-JAX references ------------------------------
def rssm_cell_reference(params, embedding, action, mask, deter, stoc, noise,
                        model_idx=0, dot=bf16_dot):
    S, D = STOC_DIM, DETER_DIM
    deter = deter * mask
    stoc = stoc * mask
    x = jnp.concatenate([stoc, action], -1)
    x = jax.nn.relu(dot(x, params["pre_w"].T) + params["pre_b"])
    gi = dot(x, params["gru_w_ih"].T)
    gh = dot(deter, params["gru_w_hh"].T)
    reset = jax.nn.sigmoid(layer_norm(gi[:, :D] + gh[:, :D],
                                      params["ln_reset_g"], params["ln_reset_b"]))
    update = jax.nn.sigmoid(layer_norm(gi[:, D:2 * D] + gh[:, D:2 * D],
                                       params["ln_update_g"], params["ln_update_b"]))
    newval = jnp.tanh(layer_norm(gi[:, 2 * D:] + reset * gh[:, 2 * D:],
                                 params["ln_newval_g"], params["ln_newval_b"]))
    h = update * newval + (1.0 - update) * deter
    ph = jax.nn.relu(dot(h, params["prior_w1"][model_idx].T) + params["prior_b1"][model_idx])
    prior = dot(ph, params["prior_w2"][model_idx].T) + params["prior_b2"][model_idx]
    qh = jax.nn.relu(dot(jnp.concatenate([h, embedding], -1), params["post_w1"].T)
                     + params["post_b1"])
    post = dot(qh, params["post_w2"].T) + params["post_b2"]
    pm, ps = prior[:, :S], jax.nn.softplus(prior[:, S:]) + 0.1
    qm, qs = post[:, :S], jax.nn.softplus(post[:, S:]) + 0.1
    return ({"mean": qm, "std": qs}, {"mean": pm, "std": ps},
            {"deter": h, "stoc": qm + qs * noise})


def rssm_sequence_reference(params, embeds, actions, masks, noises, deter, stoc,
                            model_idx=0, dot=bf16_dot):
    posts, priors, states = [], [], []
    for t in range(embeds.shape[0]):
        post, prior, state = rssm_cell_reference(
            params, embeds[t], actions[t], masks[t], deter, stoc, noises[t],
            model_idx, dot)
        deter, stoc = state["deter"], state["stoc"]
        posts.append(post); priors.append(prior); states.append(state)
    stack = lambda lst: {k: jnp.stack([d[k] for d in lst]) for k in lst[0]}
    return stack(posts), stack(priors), stack(states)


# ---------------------------------- main --------------------------------------
if __name__ == "__main__":
    key = jax.random.PRNGKey(0)
    kp, ke, ka, kd, ks, kn = jax.random.split(key, 6)

    params = init_params(kp)
    packed = pack_params(params, model_idx=0)

    T, B = SEQ_LEN, BATCH
    embeds = jax.random.normal(ke, (T, B, EMBED_DIM), jnp.float32)
    actions = jax.random.normal(ka, (T, B, ACTION_DIM), jnp.float32)
    masks = jnp.ones((T, B, 1), jnp.float32).at[3].set(0.0)   # exercise the mask reset
    noises = jax.random.normal(kn, (T, B, STOC_DIM), jnp.float32)
    deter0 = 0.1 * jax.random.normal(kd, (B, DETER_DIM), jnp.float32)
    stoc0 = 0.1 * jax.random.normal(ks, (B, STOC_DIM), jnp.float32)

    seq_in = pack_sequence(embeds, actions, masks, noises)
    state0 = jnp.concatenate([deter0, stoc0], axis=-1)

    got_post, got_prior, got_state = jax.block_until_ready(
        rssm_sequence_forward(packed, seq_in, state0))

    def check(a, b, tol):
        assert a.shape == b.shape, (a.shape, b.shape)
        assert jnp.allclose(a, b, rtol=tol, atol=tol), float(jnp.max(jnp.abs(a - b)))

    # Tight check vs. a reference using the same bf16-operand / f32-accumulate matmuls.
    ref_post, ref_prior, ref_state = rssm_sequence_reference(
        params, embeds, actions, masks, noises, deter0, stoc0, model_idx=0, dot=bf16_dot)
    for got, ref in ((got_post, ref_post), (got_prior, ref_prior), (got_state, ref_state)):
        for k in ref:
            check(got[k], ref[k], 5e-3)

    # Loose sanity check vs. a full-f32 (Precision.HIGHEST) reference, i.e. the
    # original PyTorch numerics; bounds bf16-operand drift over the 8-step recurrence.
    f32_post, f32_prior, f32_state = rssm_sequence_reference(
        params, embeds, actions, masks, noises, deter0, stoc0, model_idx=0, dot=f32_dot)
    for got, ref in ((got_post, f32_post), (got_prior, f32_prior), (got_state, f32_state)):
        for k in ref:
            check(got[k], ref[k], 1e-1)

    # Single-step API (T=1) -- exact RSSMCell.forward semantics.
    p1, pr1, st1 = jax.block_until_ready(
        rssm_cell_forward(packed, embeds[0], actions[0], masks[0], deter0, stoc0, noises[0]))
    rp1, rpr1, rst1 = rssm_cell_reference(
        params, embeds[0], actions[0], masks[0], deter0, stoc0, noises[0],
        model_idx=0, dot=bf16_dot)
    check(p1["mean"], rp1["mean"], 5e-3)
    check(p1["std"], rp1["std"], 5e-3)
    check(pr1["mean"], rpr1["mean"], 5e-3)
    check(pr1["std"], rpr1["std"], 5e-3)
    check(st1["deter"], rst1["deter"], 5e-3)
    check(st1["stoc"], rst1["stoc"], 5e-3)

    print("KERNEL_OK")
</pallas_src>

<mosaic_0001>
module attributes {stable_mosaic.version = 11 : i64} {
  func.func @rssm_seq_kernel(%arg0: memref<8x4x8x32xf32, #tpu.memory_space<vmem>>, %arg1: memref<8x40xf32, #tpu.memory_space<vmem>>, %arg2: memref<16x32xbf16, #tpu.memory_space<vmem>>, %arg3: memref<64x128xbf16, #tpu.memory_space<vmem>>, %arg4: memref<64x64xbf16, #tpu.memory_space<vmem>>, %arg5: memref<64x32xbf16, #tpu.memory_space<vmem>>, %arg6: memref<16x128xf32, #tpu.memory_space<vmem>>, %arg7: memref<8x8x128xf32, #tpu.memory_space<vmem>>) attributes {dimension_semantics = [], scalar_prefetch = 0 : i64, scratch_operands = 0 : i64, tpu.core_type = #tpu.core_type<tc>} {
    %c0 = arith.constant 0 : index
    %c0_0 = arith.constant 0 : index
    %0 = vector.load %arg2[%c0, %c0_0] : memref<16x32xbf16, #tpu.memory_space<vmem>>, vector<16x32xbf16>
    %c0_1 = arith.constant 0 : index
    %c0_2 = arith.constant 0 : index
    %1 = vector.load %arg3[%c0_1, %c0_2] : memref<64x128xbf16, #tpu.memory_space<vmem>>, vector<64x128xbf16>
    %c0_3 = arith.constant 0 : index
    %c0_4 = arith.constant 0 : index
    %2 = vector.load %arg4[%c0_3, %c0_4] : memref<64x64xbf16, #tpu.memory_space<vmem>>, vector<64x64xbf16>
    %c0_5 = arith.constant 0 : index
    %c0_6 = arith.constant 0 : index
    %3 = vector.load %arg5[%c0_5, %c0_6] : memref<64x32xbf16, #tpu.memory_space<vmem>>, vector<64x32xbf16>
    %c0_7 = arith.constant 0 : index
    %c0_8 = arith.constant 0 : index
    %4 = vector.load %arg6[%c0_7, %c0_8] : memref<16x128xf32, #tpu.memory_space<vmem>>, vector<16x128xf32>
    %5 = vector.extract_strided_slice %4 {offsets = [0, 0], sizes = [1, 32], strides = [1, 1]} : vector<16x128xf32> to vector<1x32xf32>
    %6 = vector.shape_cast %5 : vector<1x32xf32> to vector<1x32xf32>
    %7 = vector.broadcast %6 : vector<1x32xf32> to vector<8x32xf32>
    %8 = vector.extract_strided_slice %4 {offsets = [1, 0], sizes = [1, 32], strides = [1, 1]} : vector<16x128xf32> to vector<1x32xf32>
    %9 = vector.shape_cast %8 : vector<1x32xf32> to vector<1x32xf32>
    %10 = vector.broadcast %9 : vector<1x32xf32> to vector<8x32xf32>
    %11 = vector.extract_strided_slice %4 {offsets = [2, 0], sizes = [1, 32], strides = [1, 1]} : vector<16x128xf32> to vector<1x32xf32>
    %12 = vector.shape_cast %11 : vector<1x32xf32> to vector<1x32xf32>
    %13 = vector.broadcast %12 : vector<1x32xf32> to vector<8x32xf32>
    %14 = vector.extract_strided_slice %4 {offsets = [3, 0], sizes = [1, 32], strides = [1, 1]} : vector<16x128xf32> to vector<1x32xf32>
    %15 = vector.shape_cast %14 : vector<1x32xf32> to vector<1x32xf32>
    %16 = vector.broadcast %15 : vector<1x32xf32> to vector<8x32xf32>
    %17 = vector.extract_strided_slice %4 {offsets = [4, 0], sizes = [1, 32], strides = [1, 1]} : vector<16x128xf32> to vector<1x32xf32>
    %18 = vector.shape_cast %17 : vector<1x32xf32> to vector<1x32xf32>
    %19 = vector.broadcast %18 : vector<1x32xf32> to vector<8x32xf32>
    %20 = vector.extract_strided_slice %4 {offsets = [5, 0], sizes = [1, 32], strides = [1, 1]} : vector<16x128xf32> to vector<1x32xf32>
    %21 = vector.shape_cast %20 : vector<1x32xf32> to vector<1x32xf32>
    %22 = vector.broadcast %21 : vector<1x32xf32> to vector<8x32xf32>
    %23 = vector.extract_strided_slice %4 {offsets = [6, 0], sizes = [1, 32], strides = [1, 1]} : vector<16x128xf32> to vector<1x32xf32>
    %24 = vector.shape_cast %23 : vector<1x32xf32> to vector<1x32xf32>
    %25 = vector.broadcast %24 : vector<1x32xf32> to vector<8x32xf32>
    %26 = vector.extract_strided_slice %4 {offsets = [7, 0], sizes = [1, 64], strides = [1, 1]} : vector<16x128xf32> to vector<1x64xf32>
    %27 = vector.shape_cast %26 : vector<1x64xf32> to vector<1x64xf32>
    %28 = vector.broadcast %27 : vector<1x64xf32> to vector<8x64xf32>
    %29 = vector.extract_strided_slice %4 {offsets = [8, 0], sizes = [1, 32], strides = [1, 1]} : vector<16x128xf32> to vector<1x32xf32>
    %30 = vector.shape_cast %29 : vector<1x32xf32> to vector<1x32xf32>
    %31 = vector.broadcast %30 : vector<1x32xf32> to vector<8x32xf32>
    %cst = arith.constant 0.000000e+00 : f32
    %32 = vector.broadcast %cst : f32 to vector<8x56xf32>
    %c0_9 = arith.constant 0 : index
    %c0_10 = arith.constant 0 : index
    %33 = vector.load %arg1[%c0_9, %c0_10] : memref<8x40xf32, #tpu.memory_space<vmem>>, vector<8x40xf32>
    %34 = vector.extract_strided_slice %33 {offsets = [0, 0], sizes = [8, 32], strides = [1, 1]} : vector<8x40xf32> to vector<8x32xf32>
    %35 = vector.extract_strided_slice %33 {offsets = [0, 32], sizes = [8, 8], strides = [1, 1]} : vector<8x40xf32> to vector<8x8xf32>
    %c0_i32 = arith.constant 0 : i32
    %36 = arith.index_cast %c0_i32 : i32 to index
    %c0_11 = arith.constant 0 : index
    %c0_12 = arith.constant 0 : index
    %c0_13 = arith.constant 0 : index
    %37 = vector.load %arg0[%36, %c0_11, %c0_12, %c0_13] : memref<8x4x8x32xf32, #tpu.memory_space<vmem>>, vector<1x4x8x32xf32>
    %38 = vector.shape_cast %37 : vector<1x4x8x32xf32> to vector<4x8x32xf32>
    %39 = vector.extract_strided_slice %38 {offsets = [0, 0, 0], sizes = [1, 8, 32], strides = [1, 1, 1]} : vector<4x8x32xf32> to vector<1x8x32xf32>
    %40 = vector.shape_cast %39 : vector<1x8x32xf32> to vector<8x32xf32>
    %41 = vector.extract_strided_slice %38 {offsets = [1, 0, 0], sizes = [1, 8, 32], strides = [1, 1, 1]} : vector<4x8x32xf32> to vector<1x8x32xf32>
    %42 = vector.shape_cast %41 : vector<1x8x32xf32> to vector<8x32xf32>
    %43 = vector.extract_strided_slice %42 {offsets = [0, 0], sizes = [8, 8], strides = [1, 1]} : vector<8x32xf32> to vector<8x8xf32>
    %44 = vector.extract_strided_slice %38 {offsets = [2, 0, 0], sizes = [1, 8, 32], strides = [1, 1, 1]} : vector<4x8x32xf32> to vector<1x8x32xf32>
    %45 = vector.shape_cast %44 : vector<1x8x32xf32> to vector<8x32xf32>
    %46 = vector.extract_strided_slice %38 {offsets = [3, 0, 0], sizes = [1, 8, 32], strides = [1, 1, 1]} : vector<4x8x32xf32> to vector<1x8x32xf32>
    %47 = vector.shape_cast %46 : vector<1x8x32xf32> to vector<8x32xf32>
    %48 = vector.extract_strided_slice %47 {offsets = [0, 0], sizes = [8, 8], strides = [1, 1]} : vector<8x32xf32> to vector<8x8xf32>
    %49 = arith.mulf %34, %45 : vector<8x32xf32>
    %50 = vector.extract_strided_slice %45 {offsets = [0, 0], sizes = [8, 8], strides = [1, 1]} : vector<8x32xf32> to vector<8x8xf32>
    %51 = arith.mulf %35, %50 : vector<8x8xf32>
    %52 = tpu.concatenate %51, %43 in 1 : vector<8x8xf32>, vector<8x8xf32> -> vector<8x16xf32>
    %53 = arith.truncf %52 : vector<8x16xf32> to vector<8x16xbf16>
    %cst_14 = arith.constant dense<0.000000e+00> : vector<8x32xf32>
    %54 = tpu.matmul %53, %0, %cst_14 {dimension_numbers = #tpu.dot_dimension_numbers<[1], [0], [0], [1], [0, 0, 1, 1], [], []>} : vector<8x16xbf16>, vector<16x32xbf16>, vector<8x32xf32> -> vector<8x32xf32>
    %55 = arith.addf %54, %7 : vector<8x32xf32>
    %cst_15 = arith.constant 0.000000e+00 : f32
    %56 = vector.broadcast %cst_15 : f32 to vector<8x32xf32>
    %57 = arith.maximumf %55, %56 : vector<8x32xf32>
    %58 = tpu.concatenate %57, %49 in 1 : vector<8x32xf32>, vector<8x32xf32> -> vector<8x64xf32>
    %59 = arith.truncf %58 : vector<8x64xf32> to vector<8x64xbf16>
    %cst_16 = arith.constant dense<0.000000e+00> : vector<8x128xf32>
    %60 = tpu.matmul %59, %1, %cst_16 {dimension_numbers = #tpu.dot_dimension_numbers<[1], [0], [0], [1], [0, 0, 1, 1], [], []>} : vector<8x64xbf16>, vector<64x128xbf16>, vector<8x128xf32> -> vector<8x128xf32>
    %61 = vector.extract_strided_slice %60 {offsets = [0, 0], sizes = [8, 32], strides = [1, 1]} : vector<8x128xf32> to vector<8x32xf32>
    %cst_17 = arith.constant dense<0.000000e+00> : vector<8xf32>
    %62 = vector.multi_reduction <add>, %61, %cst_17 [1] : vector<8x32xf32> to vector<8xf32>
    %63 = vector.shape_cast %62 : vector<8xf32> to vector<8x1xf32>
    %cst_18 = arith.constant 3.200000e+01 : f32
    %64 = vector.broadcast %cst_18 : f32 to vector<8x1xf32>
    %65 = arith.divf %63, %64 : vector<8x1xf32>
    %66 = vector.broadcast %65 : vector<8x1xf32> to vector<8x32xf32>
    %67 = arith.subf %61, %66 : vector<8x32xf32>
    %68 = arith.mulf %67, %67 : vector<8x32xf32>
    %cst_19 = arith.constant dense<0.000000e+00> : vector<8xf32>
    %69 = vector.multi_reduction <add>, %68, %cst_19 [1] : vector<8x32xf32> to vector<8xf32>
    %70 = vector.shape_cast %69 : vector<8xf32> to vector<8x1xf32>
    %cst_20 = arith.constant 3.200000e+01 : f32
    %71 = vector.broadcast %cst_20 : f32 to vector<8x1xf32>
    %72 = arith.divf %70, %71 : vector<8x1xf32>
    %73 = vector.broadcast %65 : vector<8x1xf32> to vector<8x32xf32>
    %74 = arith.subf %61, %73 : vector<8x32xf32>
    %cst_21 = arith.constant 1.000000e-03 : f32
    %75 = vector.broadcast %cst_21 : f32 to vector<8x1xf32>
    %76 = arith.addf %72, %75 : vector<8x1xf32>
    %77 = math.rsqrt %76 : vector<8x1xf32>
    %78 = vector.broadcast %77 : vector<8x1xf32> to vector<8x32xf32>
    %79 = arith.mulf %74, %78 : vector<8x32xf32>
    %80 = arith.mulf %79, %10 : vector<8x32xf32>
    %81 = arith.addf %80, %13 : vector<8x32xf32>
    %82 = arith.negf %81 : vector<8x32xf32>
    %83 = math.exp %82 : vector<8x32xf32>
    %cst_22 = arith.constant 1.000000e+00 : f32
    %84 = vector.broadcast %cst_22 : f32 to vector<8x32xf32>
    %85 = arith.addf %84, %83 : vector<8x32xf32>
    %86 = arith.divf %84, %85 : vector<8x32xf32>
    %87 = vector.extract_strided_slice %60 {offsets = [0, 32], sizes = [8, 32], strides = [1, 1]} : vector<8x128xf32> to vector<8x32xf32>
    %cst_23 = arith.constant dense<0.000000e+00> : vector<8xf32>
    %88 = vector.multi_reduction <add>, %87, %cst_23 [1] : vector<8x32xf32> to vector<8xf32>
    %89 = vector.shape_cast %88 : vector<8xf32> to vector<8x1xf32>
    %cst_24 = arith.constant 3.200000e+01 : f32
    %90 = vector.broadcast %cst_24 : f32 to vector<8x1xf32>
    %91 = arith.divf %89, %90 : vector<8x1xf32>
    %92 = vector.broadcast %91 : vector<8x1xf32> to vector<8x32xf32>
    %93 = arith.subf %87, %92 : vector<8x32xf32>
    %94 = arith.mulf %93, %93 : vector<8x32xf32>
    %cst_25 = arith.constant dense<0.000000e+00> : vector<8xf32>
    %95 = vector.multi_reduction <add>, %94, %cst_25 [1] : vector<8x32xf32> to vector<8xf32>
    %96 = vector.shape_cast %95 : vector<8xf32> to vector<8x1xf32>
    %cst_26 = arith.constant 3.200000e+01 : f32
    %97 = vector.broadcast %cst_26 : f32 to vector<8x1xf32>
    %98 = arith.divf %96, %97 : vector<8x1xf32>
    %99 = vector.broadcast %91 : vector<8x1xf32> to vector<8x32xf32>
    %100 = arith.subf %87, %99 : vector<8x32xf32>
    %cst_27 = arith.constant 1.000000e-03 : f32
    %101 = vector.broadcast %cst_27 : f32 to vector<8x1xf32>
    %102 = arith.addf %98, %101 : vector<8x1xf32>
    %103 = math.rsqrt %102 : vector<8x1xf32>
    %104 = vector.broadcast %103 : vector<8x1xf32> to vector<8x32xf32>
    %105 = arith.mulf %100, %104 : vector<8x32xf32>
    %106 = arith.mulf %105, %16 : vector<8x32xf32>
    %107 = arith.addf %106, %19 : vector<8x32xf32>
    %108 = arith.negf %107 : vector<8x32xf32>
    %109 = math.exp %108 : vector<8x32xf32>
    %cst_28 = arith.constant 1.000000e+00 : f32
    %110 = vector.broadcast %cst_28 : f32 to vector<8x32xf32>
    %111 = arith.addf %110, %109 : vector<8x32xf32>
    %112 = arith.divf %110, %111 : vector<8x32xf32>
    %113 = vector.extract_strided_slice %60 {offsets = [0, 64], sizes = [8, 32], strides = [1, 1]} : vector<8x128xf32> to vector<8x32xf32>
    %114 = vector.extract_strided_slice %60 {offsets = [0, 96], sizes = [8, 32], strides = [1, 1]} : vector<8x128xf32> to vector<8x32xf32>
    %115 = arith.mulf %86, %114 : vector<8x32xf32>
    %116 = arith.addf %113, %115 : vector<8x32xf32>
    %cst_29 = arith.constant dense<0.000000e+00> : vector<8xf32>
    %117 = vector.multi_reduction <add>, %116, %cst_29 [1] : vector<8x32xf32> to vector<8xf32>
    %118 = vector.shape_cast %117 : vector<8xf32> to vector<8x1xf32>
    %cst_30 = arith.constant 3.200000e+01 : f32
    %119 = vector.broadcast %cst_30 : f32 to vector<8x1xf32>
    %120 = arith.divf %118, %119 : vector<8x1xf32>
    %121 = vector.broadcast %120 : vector<8x1xf32> to vector<8x32xf32>
    %122 = arith.subf %116, %121 : vector<8x32xf32>
    %123 = arith.mulf %122, %122 : vector<8x32xf32>
    %cst_31 = arith.constant dense<0.000000e+00> : vector<8xf32>
    %124 = vector.multi_reduction <add>, %123, %cst_31 [1] : vector<8x32xf32> to vector<8xf32>
    %125 = vector.shape_cast %124 : vector<8xf32> to vector<8x1xf32>
    %cst_32 = arith.constant 3.200000e+01 : f32
    %126 = vector.broadcast %cst_32 : f32 to vector<8x1xf32>
    %127 = arith.divf %125, %126 : vector<8x1xf32>
    %128 = vector.broadcast %120 : vector<8x1xf32> to vector<8x32xf32>
    %129 = arith.subf %116, %128 : vector<8x32xf32>
    %cst_33 = arith.constant 1.000000e-03 : f32
    %130 = vector.broadcast %cst_33 : f32 to vector<8x1xf32>
    %131 = arith.addf %127, %130 : vector<8x1xf32>
    %132 = math.rsqrt %131 : vector<8x1xf32>
    %133 = vector.broadcast %132 : vector<8x1xf32> to vector<8x32xf32>
    %134 = arith.mulf %129, %133 : vector<8x32xf32>
    %135 = arith.mulf %134, %22 : vector<8x32xf32>
    %136 = arith.addf %135, %25 : vector<8x32xf32>
    %137 = math.tanh %136 : vector<8x32xf32>
    %138 = arith.mulf %112, %137 : vector<8x32xf32>
    %cst_34 = arith.constant 1.000000e+00 : f32
    %139 = vector.broadcast %cst_34 : f32 to vector<8x32xf32>
    %140 = arith.subf %139, %112 : vector<8x32xf32>
    %141 = arith.mulf %140, %49 : vector<8x32xf32>
    %142 = arith.addf %138, %141 : vector<8x32xf32>
    %143 = tpu.concatenate %142, %40 in 1 : vector<8x32xf32>, vector<8x32xf32> -> vector<8x64xf32>
    %144 = arith.truncf %143 : vector<8x64xf32> to vector<8x64xbf16>
    %cst_35 = arith.constant dense<0.000000e+00> : vector<8x64xf32>
    %145 = tpu.matmul %144, %2, %cst_35 {dimension_numbers = #tpu.dot_dimension_numbers<[1], [0], [0], [1], [0, 0, 1, 1], [], []>} : vector<8x64xbf16>, vector<64x64xbf16>, vector<8x64xf32> -> vector<8x64xf32>
    %146 = arith.addf %145, %28 : vector<8x64xf32>
    %cst_36 = arith.constant 0.000000e+00 : f32
    %147 = vector.broadcast %cst_36 : f32 to vector<8x64xf32>
    %148 = arith.maximumf %146, %147 : vector<8x64xf32>
    %149 = arith.truncf %148 : vector<8x64xf32> to vector<8x64xbf16>
    %cst_37 = arith.constant dense<0.000000e+00> : vector<8x32xf32>
    %150 = tpu.matmul %149, %3, %cst_37 {dimension_numbers = #tpu.dot_dimension_numbers<[1], [0], [0], [1], [0, 0, 1, 1], [], []>} : vector<8x64xbf16>, vector<64x32xbf16>, vector<8x32xf32> -> vector<8x32xf32>
    %151 = arith.addf %150, %31 : vector<8x32xf32>
    %152 = vector.extract_strided_slice %151 {offsets = [0, 0], sizes = [8, 8], strides = [1, 1]} : vector<8x32xf32> to vector<8x8xf32>
    %153 = vector.extract_strided_slice %151 {offsets = [0, 8], sizes = [8, 8], strides = [1, 1]} : vector<8x32xf32> to vector<8x8xf32>
    %cst_38 = arith.constant 0.000000e+00 : f32
    %154 = vector.broadcast %cst_38 : f32 to vector<8x8xf32>
    %155 = arith.maximumf %153, %154 : vector<8x8xf32>
    %156 = vector.broadcast %cst_38 : f32 to vector<8x8xf32>
    %157 = arith.subf %153, %156 : vector<8x8xf32>
    %158 = arith.cmpf one, %157, %157 : vector<8x8xf32>
    %159 = vector.broadcast %cst_38 : f32 to vector<8x8xf32>
    %160 = arith.addf %153, %159 : vector<8x8xf32>
    %161 = math.absf %157 : vector<8x8xf32>
    %cst_39 = arith.constant 0.000000e+00 : f32
    %162 = vector.broadcast %cst_39 : f32 to vector<8x8xf32>
    %163 = arith.subf %162, %161 : vector<8x8xf32>
    %164 = math.exp %163 : vector<8x8xf32>
    %165 = math.log1p %164 : vector<8x8xf32>
    %166 = arith.addf %155, %165 : vector<8x8xf32>
    %167 = arith.select %158, %160, %166 : vector<8x8xi1>, vector<8x8xf32>
    %cst_40 = arith.constant 1.000000e-01 : f32
    %168 = vector.broadcast %cst_40 : f32 to vector<8x8xf32>
    %169 = arith.addf %167, %168 : vector<8x8xf32>
    %170 = vector.extract_strided_slice %151 {offsets = [0, 16], sizes = [8, 8], strides = [1, 1]} : vector<8x32xf32> to vector<8x8xf32>
    %171 = vector.extract_strided_slice %151 {offsets = [0, 24], sizes = [8, 8], strides = [1, 1]} : vector<8x32xf32> to vector<8x8xf32>
    %cst_41 = arith.constant 0.000000e+00 : f32
    %172 = vector.broadcast %cst_41 : f32 to vector<8x8xf32>
    %173 = arith.maximumf %171, %172 : vector<8x8xf32>
    %174 = vector.broadcast %cst_41 : f32 to vector<8x8xf32>
    %175 = arith.subf %171, %174 : vector<8x8xf32>
    %176 = arith.cmpf one, %175, %175 : vector<8x8xf32>
    %177 = vector.broadcast %cst_41 : f32 to vector<8x8xf32>
    %178 = arith.addf %171, %177 : vector<8x8xf32>
    %179 = math.absf %175 : vector<8x8xf32>
    %cst_42 = arith.constant 0.000000e+00 : f32
    %180 = vector.broadcast %cst_42 : f32 to vector<8x8xf32>
    %181 = arith.subf %180, %179 : vector<8x8xf32>
    %182 = math.exp %181 : vector<8x8xf32>
    %183 = math.log1p %182 : vector<8x8xf32>
    %184 = arith.addf %173, %183 : vector<8x8xf32>
    %185 = arith.select %176, %178, %184 : vector<8x8xi1>, vector<8x8xf32>
    %cst_43 = arith.constant 1.000000e-01 : f32
    %186 = vector.broadcast %cst_43 : f32 to vector<8x8xf32>
    %187 = arith.addf %185, %186 : vector<8x8xf32>
    %188 = arith.mulf %187, %48 : vector<8x8xf32>
    %189 = arith.addf %170, %188 : vector<8x8xf32>
    %190 = tpu.concatenate %142, %152, %169, %170, %187, %189, %32 in 1 : vector<8x32xf32>, vector<8x8xf32>, vector<8x8xf32>, vector<8x8xf32>, vector<8x8xf32>, vector<8x8xf32>, vector<8x56xf32> -> vector<8x128xf32>
    %191 = arith.index_cast %c0_i32 : i32 to index
    %c0_44 = arith.constant 0 : index
    %c0_45 = arith.constant 0 : index
    %192 = vector.load %arg7[%191, %c0_44, %c0_45] : memref<8x8x128xf32, #tpu.memory_space<vmem>>, vector<1x8x128xf32>
    %193 = vector.shape_cast %192 : vector<1x8x128xf32> to vector<8x128xf32>
    %194 = vector.shape_cast %190 : vector<8x128xf32> to vector<1x8x128xf32>
    tpu.vector_store %arg7[%191, %c0_44, %c0_45], %194 {strides = array<i32>} : memref<8x8x128xf32, #tpu.memory_space<vmem>>, vector<1x8x128xf32>,
    %c1_i32 = arith.constant 1 : i32
    %195 = arith.index_cast %c1_i32 : i32 to index
    %c0_46 = arith.constant 0 : index
    %c0_47 = arith.constant 0 : index
    %c0_48 = arith.constant 0 : index
    %196 = vector.load %arg0[%195, %c0_46, %c0_47, %c0_48] : memref<8x4x8x32xf32, #tpu.memory_space<vmem>>, vector<1x4x8x32xf32>
    %197 = vector.shape_cast %196 : vector<1x4x8x32xf32> to vector<4x8x32xf32>
    %198 = vector.extract_strided_slice %197 {offsets = [0, 0, 0], sizes = [1, 8, 32], strides = [1, 1, 1]} : vector<4x8x32xf32> to vector<1x8x32xf32>
    %199 = vector.shape_cast %198 : vector<1x8x32xf32> to vector<8x32xf32>
    %200 = vector.extract_strided_slice %197 {offsets = [1, 0, 0], sizes = [1, 8, 32], strides = [1, 1, 1]} : vector<4x8x32xf32> to vector<1x8x32xf32>
    %201 = vector.shape_cast %200 : vector<1x8x32xf32> to vector<8x32xf32>
    %202 = vector.extract_strided_slice %201 {offsets = [0, 0], sizes = [8, 8], strides = [1, 1]} : vector<8x32xf32> to vector<8x8xf32>
    %203 = vector.extract_strided_slice %197 {offsets = [2, 0, 0], sizes = [1, 8, 32], strides = [1, 1, 1]} : vector<4x8x32xf32> to vector<1x8x32xf32>
    %204 = vector.shape_cast %203 : vector<1x8x32xf32> to vector<8x32xf32>
    %205 = vector.extract_strided_slice %197 {offsets = [3, 0, 0], sizes = [1, 8, 32], strides = [1, 1, 1]} : vector<4x8x32xf32> to vector<1x8x32xf32>
    %206 = vector.shape_cast %205 : vector<1x8x32xf32> to vector<8x32xf32>
    %207 = vector.extract_strided_slice %206 {offsets = [0, 0], sizes = [8, 8], strides = [1, 1]} : vector<8x32xf32> to vector<8x8xf32>
    %208 = arith.mulf %142, %204 : vector<8x32xf32>
    %209 = vector.extract_strided_slice %204 {offsets = [0, 0], sizes = [8, 8], strides = [1, 1]} : vector<8x32xf32> to vector<8x8xf32>
    %210 = arith.mulf %189, %209 : vector<8x8xf32>
    %211 = tpu.concatenate %210, %202 in 1 : vector<8x8xf32>, vector<8x8xf32> -> vector<8x16xf32>
    %212 = arith.truncf %211 : vector<8x16xf32> to vector<8x16xbf16>
    %cst_49 = arith.constant dense<0.000000e+00> : vector<8x32xf32>
    %213 = tpu.matmul %212, %0, %cst_49 {dimension_numbers = #tpu.dot_dimension_numbers<[1], [0], [0], [1], [0, 0, 1, 1], [], []>} : vector<8x16xbf16>, vector<16x32xbf16>, vector<8x32xf32> -> vector<8x32xf32>
    %214 = arith.addf %213, %7 : vector<8x32xf32>
    %cst_50 = arith.constant 0.000000e+00 : f32
    %215 = vector.broadcast %cst_50 : f32 to vector<8x32xf32>
    %216 = arith.maximumf %214, %215 : vector<8x32xf32>
    %217 = tpu.concatenate %216, %208 in 1 : vector<8x32xf32>, vector<8x32xf32> -> vector<8x64xf32>
    %218 = arith.truncf %217 : vector<8x64xf32> to vector<8x64xbf16>
    %cst_51 = arith.constant dense<0.000000e+00> : vector<8x128xf32>
    %219 = tpu.matmul %218, %1, %cst_51 {dimension_numbers = #tpu.dot_dimension_numbers<[1], [0], [0], [1], [0, 0, 1, 1], [], []>} : vector<8x64xbf16>, vector<64x128xbf16>, vector<8x128xf32> -> vector<8x128xf32>
    %220 = vector.extract_strided_slice %219 {offsets = [0, 0], sizes = [8, 32], strides = [1, 1]} : vector<8x128xf32> to vector<8x32xf32>
    %cst_52 = arith.constant dense<0.000000e+00> : vector<8xf32>
    %221 = vector.multi_reduction <add>, %220, %cst_52 [1] : vector<8x32xf32> to vector<8xf32>
    %222 = vector.shape_cast %221 : vector<8xf32> to vector<8x1xf32>
    %cst_53 = arith.constant 3.200000e+01 : f32
    %223 = vector.broadcast %cst_53 : f32 to vector<8x1xf32>
    %224 = arith.divf %222, %223 : vector<8x1xf32>
    %225 = vector.broadcast %224 : vector<8x1xf32> to vector<8x32xf32>
    %226 = arith.subf %220, %225 : vector<8x32xf32>
    %227 = arith.mulf %226, %226 : vector<8x32xf32>
    %cst_54 = arith.constant dense<0.000000e+00> : vector<8xf32>
    %228 = vector.multi_reduction <add>, %227, %cst_54 [1] : vector<8x32xf32> to vector<8xf32>
    %229 = vector.shape_cast %228 : vector<8xf32> to vector<8x1xf32>
    %cst_55 = arith.constant 3.200000e+01 : f32
    %230 = vector.broadcast %cst_55 : f32 to vector<8x1xf32>
    %231 = arith.divf %229, %230 : vector<8x1xf32>
    %232 = vector.broadcast %224 : vector<8x1xf32> to vector<8x32xf32>
    %233 = arith.subf %220, %232 : vector<8x32xf32>
    %cst_56 = arith.constant 1.000000e-03 : f32
    %234 = vector.broadcast %cst_56 : f32 to vector<8x1xf32>
    %235 = arith.addf %231, %234 : vector<8x1xf32>
    %236 = math.rsqrt %235 : vector<8x1xf32>
    %237 = vector.broadcast %236 : vector<8x1xf32> to vector<8x32xf32>
    %238 = arith.mulf %233, %237 : vector<8x32xf32>
    %239 = arith.mulf %238, %10 : vector<8x32xf32>
    %240 = arith.addf %239, %13 : vector<8x32xf32>
    %241 = arith.negf %240 : vector<8x32xf32>
    %242 = math.exp %241 : vector<8x32xf32>
    %cst_57 = arith.constant 1.000000e+00 : f32
    %243 = vector.broadcast %cst_57 : f32 to vector<8x32xf32>
    %244 = arith.addf %243, %242 : vector<8x32xf32>
    %245 = arith.divf %243, %244 : vector<8x32xf32>
    %246 = vector.extract_strided_slice %219 {offsets = [0, 32], sizes = [8, 32], strides = [1, 1]} : vector<8x128xf32> to vector<8x32xf32>
    %cst_58 = arith.constant dense<0.000000e+00> : vector<8xf32>
    %247 = vector.multi_reduction <add>, %246, %cst_58 [1] : vector<8x32xf32> to vector<8xf32>
    %248 = vector.shape_cast %247 : vector<8xf32> to vector<8x1xf32>
    %cst_59 = arith.constant 3.200000e+01 : f32
    %249 = vector.broadcast %cst_59 : f32 to vector<8x1xf32>
    %250 = arith.divf %248, %249 : vector<8x1xf32>
    %251 = vector.broadcast %250 : vector<8x1xf32> to vector<8x32xf32>
    %252 = arith.subf %246, %251 : vector<8x32xf32>
    %253 = arith.mulf %252, %252 : vector<8x32xf32>
    %cst_60 = arith.constant dense<0.000000e+00> : vector<8xf32>
    %254 = vector.multi_reduction <add>, %253, %cst_60 [1] : vector<8x32xf32> to vector<8xf32>
    %255 = vector.shape_cast %254 : vector<8xf32> to vector<8x1xf32>
    %cst_61 = arith.constant 3.200000e+01 : f32
    %256 = vector.broadcast %cst_61 : f32 to vector<8x1xf32>
    %257 = arith.divf %255, %256 : vector<8x1xf32>
    %258 = vector.broadcast %250 : vector<8x1xf32> to vector<8x32xf32>
    %259 = arith.subf %246, %258 : vector<8x32xf32>
    %cst_62 = arith.constant 1.000000e-03 : f32
    %260 = vector.broadcast %cst_62 : f32 to vector<8x1xf32>
    %261 = arith.addf %257, %260 : vector<8x1xf32>
    %262 = math.rsqrt %261 : vector<8x1xf32>
    %263 = vector.broadcast %262 : vector<8x1xf32> to vector<8x32xf32>
    %264 = arith.mulf %259, %263 : vector<8x32xf32>
    %265 = arith.mulf %264, %16 : vector<8x32xf32>
    %266 = arith.addf %265, %19 : vector<8x32xf32>
    %267 = arith.negf %266 : vector<8x32xf32>
    %268 = math.exp %267 : vector<8x32xf32>
    %cst_63 = arith.constant 1.000000e+00 : f32
    %269 = vector.broadcast %cst_63 : f32 to vector<8x32xf32>
    %270 = arith.addf %269, %268 : vector<8x32xf32>
    %271 = arith.divf %269, %270 : vector<8x32xf32>
    %272 = vector.extract_strided_slice %219 {offsets = [0, 64], sizes = [8, 32], strides = [1, 1]} : vector<8x128xf32> to vector<8x32xf32>
    %273 = vector.extract_strided_slice %219 {offsets = [0, 96], sizes = [8, 32], strides = [1, 1]} : vector<8x128xf32> to vector<8x32xf32>
    %274 = arith.mulf %245, %273 : vector<8x32xf32>
    %275 = arith.addf %272, %274 : vector<8x32xf32>
    %cst_64 = arith.constant dense<0.000000e+00> : vector<8xf32>
    %276 = vector.multi_reduction <add>, %275, %cst_64 [1] : vector<8x32xf32> to vector<8xf32>
    %277 = vector.shape_cast %276 : vector<8xf32> to vector<8x1xf32>
    %cst_65 = arith.constant 3.200000e+01 : f32
    %278 = vector.broadcast %cst_65 : f32 to vector<8x1xf32>
    %279 = arith.divf %277, %278 : vector<8x1xf32>
    %280 = vector.broadcast %279 : vector<8x1xf32> to vector<8x32xf32>
    %281 = arith.subf %275, %280 : vector<8x32xf32>
    %282 = arith.mulf %281, %281 : vector<8x32xf32>
    %cst_66 = arith.constant dense<0.000000e+00> : vector<8xf32>
    %283 = vector.multi_reduction <add>, %282, %cst_66 [1] : vector<8x32xf32> to vector<8xf32>
    %284 = vector.shape_cast %283 : vector<8xf32> to vector<8x1xf32>
    %cst_67 = arith.constant 3.200000e+01 : f32
    %285 = vector.broadcast %cst_67 : f32 to vector<8x1xf32>
    %286 = arith.divf %284, %285 : vector<8x1xf32>
    %287 = vector.broadcast %279 : vector<8x1xf32> to vector<8x32xf32>
    %288 = arith.subf %275, %287 : vector<8x32xf32>
    %cst_68 = arith.constant 1.000000e-03 : f32
    %289 = vector.broadcast %cst_68 : f32 to vector<8x1xf32>
    %290 = arith.addf %286, %289 : vector<8x1xf32>
    %291 = math.rsqrt %290 : vector<8x1xf32>
    %292 = vector.broadcast %291 : vector<8x1xf32> to vector<8x32xf32>
    %293 = arith.mulf %288, %292 : vector<8x32xf32>
    %294 = arith.mulf %293, %22 : vector<8x32xf32>
    %295 = arith.addf %294, %25 : vector<8x32xf32>
    %296 = math.tanh %295 : vector<8x32xf32>
    %297 = arith.mulf %271, %296 : vector<8x32xf32>
    %cst_69 = arith.constant 1.000000e+00 : f32
    %298 = vector.broadcast %cst_69 : f32 to vector<8x32xf32>
    %299 = arith.subf %298, %271 : vector<8x32xf32>
    %300 = arith.mulf %299, %208 : vector<8x32xf32>
    %301 = arith.addf %297, %300 : vector<8x32xf32>
    %302 = tpu.concatenate %301, %199 in 1 : vector<8x32xf32>, vector<8x32xf32> -> vector<8x64xf32>
    %303 = arith.truncf %302 : vector<8x64xf32> to vector<8x64xbf16>
    %cst_70 = arith.constant dense<0.000000e+00> : vector<8x64xf32>
    %304 = tpu.matmul %303, %2, %cst_70 {dimension_numbers = #tpu.dot_dimension_numbers<[1], [0], [0], [1], [0, 0, 1, 1], [], []>} : vector<8x64xbf16>, vector<64x64xbf16>, vector<8x64xf32> -> vector<8x64xf32>
    %305 = arith.addf %304, %28 : vector<8x64xf32>
    %cst_71 = arith.constant 0.000000e+00 : f32
    %306 = vector.broadcast %cst_71 : f32 to vector<8x64xf32>
    %307 = arith.maximumf %305, %306 : vector<8x64xf32>
    %308 = arith.truncf %307 : vector<8x64xf32> to vector<8x64xbf16>
    %cst_72 = arith.constant dense<0.000000e+00> : vector<8x32xf32>
    %309 = tpu.matmul %308, %3, %cst_72 {dimension_numbers = #tpu.dot_dimension_numbers<[1], [0], [0], [1], [0, 0, 1, 1], [], []>} : vector<8x64xbf16>, vector<64x32xbf16>, vector<8x32xf32> -> vector<8x32xf32>
    %310 = arith.addf %309, %31 : vector<8x32xf32>
    %311 = vector.extract_strided_slice %310 {offsets = [0, 0], sizes = [8, 8], strides = [1, 1]} : vector<8x32xf32> to vector<8x8xf32>
    %312 = vector.extract_strided_slice %310 {offsets = [0, 8], sizes = [8, 8], strides = [1, 1]} : vector<8x32xf32> to vector<8x8xf32>
    %cst_73 = arith.constant 0.000000e+00 : f32
    %313 = vector.broadcast %cst_73 : f32 to vector<8x8xf32>
    %314 = arith.maximumf %312, %313 : vector<8x8xf32>
    %315 = vector.broadcast %cst_73 : f32 to vector<8x8xf32>
    %316 = arith.subf %312, %315 : vector<8x8xf32>
    %317 = arith.cmpf one, %316, %316 : vector<8x8xf32>
    %318 = vector.broadcast %cst_73 : f32 to vector<8x8xf32>
    %319 = arith.addf %312, %318 : vector<8x8xf32>
    %320 = math.absf %316 : vector<8x8xf32>
    %cst_74 = arith.constant 0.000000e+00 : f32
    %321 = vector.broadcast %cst_74 : f32 to vector<8x8xf32>
    %322 = arith.subf %321, %320 : vector<8x8xf32>
    %323 = math.exp %322 : vector<8x8xf32>
    %324 = math.log1p %323 : vector<8x8xf32>
    %325 = arith.addf %314, %324 : vector<8x8xf32>
    %326 = arith.select %317, %319, %325 : vector<8x8xi1>, vector<8x8xf32>
    %cst_75 = arith.constant 1.000000e-01 : f32
    %327 = vector.broadcast %cst_75 : f32 to vector<8x8xf32>
    %328 = arith.addf %326, %327 : vector<8x8xf32>
    %329 = vector.extract_strided_slice %310 {offsets = [0, 16], sizes = [8, 8], strides = [1, 1]} : vector<8x32xf32> to vector<8x8xf32>
    %330 = vector.extract_strided_slice %310 {offsets = [0, 24], sizes = [8, 8], strides = [1, 1]} : vector<8x32xf32> to vector<8x8xf32>
    %cst_76 = arith.constant 0.000000e+00 : f32
    %331 = vector.broadcast %cst_76 : f32 to vector<8x8xf32>
    %332 = arith.maximumf %330, %331 : vector<8x8xf32>
    %333 = vector.broadcast %cst_76 : f32 to vector<8x8xf32>
    %334 = arith.subf %330, %333 : vector<8x8xf32>
    %335 = arith.cmpf one, %334, %334 : vector<8x8xf32>
    %336 = vector.broadcast %cst_76 : f32 to vector<8x8xf32>
    %337 = arith.addf %330, %336 : vector<8x8xf32>
    %338 = math.absf %334 : vector<8x8xf32>
    %cst_77 = arith.constant 0.000000e+00 : f32
    %339 = vector.broadcast %cst_77 : f32 to vector<8x8xf32>
    %340 = arith.subf %339, %338 : vector<8x8xf32>
    %341 = math.exp %340 : vector<8x8xf32>
    %342 = math.log1p %341 : vector<8x8xf32>
    %343 = arith.addf %332, %342 : vector<8x8xf32>
    %344 = arith.select %335, %337, %343 : vector<8x8xi1>, vector<8x8xf32>
    %cst_78 = arith.constant 1.000000e-01 : f32
    %345 = vector.broadcast %cst_78 : f32 to vector<8x8xf32>
    %346 = arith.addf %344, %345 : vector<8x8xf32>
    %347 = arith.mulf %346, %207 : vector<8x8xf32>
    %348 = arith.addf %329, %347 : vector<8x8xf32>
    %349 = tpu.concatenate %301, %311, %328, %329, %346, %348, %32 in 1 : vector<8x32xf32>, vector<8x8xf32>, vector<8x8xf32>, vector<8x8xf32>, vector<8x8xf32>, vector<8x8xf32>, vector<8x56xf32> -> vector<8x128xf32>
    %350 = arith.index_cast %c1_i32 : i32 to index
    %c0_79 = arith.constant 0 : index
    %c0_80 = arith.constant 0 : index
    %351 = vector.load %arg7[%350, %c0_79, %c0_80] : memref<8x8x128xf32, #tpu.memory_space<vmem>>, vector<1x8x128xf32>
    %352 = vector.shape_cast %351 : vector<1x8x128xf32> to vector<8x128xf32>
    %353 = vector.shape_cast %349 : vector<8x128xf32> to vector<1x8x128xf32>
    tpu.vector_store %arg7[%350, %c0_79, %c0_80], %353 {strides = array<i32>} : memref<8x8x128xf32, #tpu.memory_space<vmem>>, vector<1x8x128xf32>,
    %c2_i32 = arith.constant 2 : i32
    %354 = arith.index_cast %c2_i32 : i32 to index
    %c0_81 = arith.constant 0 : index
    %c0_82 = arith.constant 0 : index
    %c0_83 = arith.constant 0 : index
    %355 = vector.load %arg0[%354, %c0_81, %c0_82, %c0_83] : memref<8x4x8x32xf32, #tpu.memory_space<vmem>>, vector<1x4x8x32xf32>
    %356 = vector.shape_cast %355 : vector<1x4x8x32xf32> to vector<4x8x32xf32>
    %357 = vector.extract_strided_slice %356 {offsets = [0, 0, 0], sizes = [1, 8, 32], strides = [1, 1, 1]} : vector<4x8x32xf32> to vector<1x8x32xf32>
    %358 = vector.shape_cast %357 : vector<1x8x32xf32> to vector<8x32xf32>
    %359 = vector.extract_strided_slice %356 {offsets = [1, 0, 0], sizes = [1, 8, 32], strides = [1, 1, 1]} : vector<4x8x32xf32> to vector<1x8x32xf32>
    %360 = vector.shape_cast %359 : vector<1x8x32xf32> to vector<8x32xf32>
    %361 = vector.extract_strided_slice %360 {offsets = [0, 0], sizes = [8, 8], strides = [1, 1]} : vector<8x32xf32> to vector<8x8xf32>
    %362 = vector.extract_strided_slice %356 {offsets = [2, 0, 0], sizes = [1, 8, 32], strides = [1, 1, 1]} : vector<4x8x32xf32> to vector<1x8x32xf32>
    %363 = vector.shape_cast %362 : vector<1x8x32xf32> to vector<8x32xf32>
    %364 = vector.extract_strided_slice %356 {offsets = [3, 0, 0], sizes = [1, 8, 32], strides = [1, 1, 1]} : vector<4x8x32xf32> to vector<1x8x32xf32>
    %365 = vector.shape_cast %364 : vector<1x8x32xf32> to vector<8x32xf32>
    %366 = vector.extract_strided_slice %365 {offsets = [0, 0], sizes = [8, 8], strides = [1, 1]} : vector<8x32xf32> to vector<8x8xf32>
    %367 = arith.mulf %301, %363 : vector<8x32xf32>
    %368 = vector.extract_strided_slice %363 {offsets = [0, 0], sizes = [8, 8], strides = [1, 1]} : vector<8x32xf32> to vector<8x8xf32>
    %369 = arith.mulf %348, %368 : vector<8x8xf32>
    %370 = tpu.concatenate %369, %361 in 1 : vector<8x8xf32>, vector<8x8xf32> -> vector<8x16xf32>
    %371 = arith.truncf %370 : vector<8x16xf32> to vector<8x16xbf16>
    %cst_84 = arith.constant dense<0.000000e+00> : vector<8x32xf32>
    %372 = tpu.matmul %371, %0, %cst_84 {dimension_numbers = #tpu.dot_dimension_numbers<[1], [0], [0], [1], [0, 0, 1, 1], [], []>} : vector<8x16xbf16>, vector<16x32xbf16>, vector<8x32xf32> -> vector<8x32xf32>
    %373 = arith.addf %372, %7 : vector<8x32xf32>
    %cst_85 = arith.constant 0.000000e+00 : f32
    %374 = vector.broadcast %cst_85 : f32 to vector<8x32xf32>
    %375 = arith.maximumf %373, %374 : vector<8x32xf32>
    %376 = tpu.concatenate %375, %367 in 1 : vector<8x32xf32>, vector<8x32xf32> -> vector<8x64xf32>
    %377 = arith.truncf %376 : vector<8x64xf32> to vector<8x64xbf16>
    %cst_86 = arith.constant dense<0.000000e+00> : vector<8x128xf32>
    %378 = tpu.matmul %377, %1, %cst_86 {dimension_numbers = #tpu.dot_dimension_numbers<[1], [0], [0], [1], [0, 0, 1, 1], [], []>} : vector<8x64xbf16>, vector<64x128xbf16>, vector<8x128xf32> -> vector<8x128xf32>
    %379 = vector.extract_strided_slice %378 {offsets = [0, 0], sizes = [8, 32], strides = [1, 1]} : vector<8x128xf32> to vector<8x32xf32>
    %cst_87 = arith.constant dense<0.000000e+00> : vector<8xf32>
    %380 = vector.multi_reduction <add>, %379, %cst_87 [1] : vector<8x32xf32> to vector<8xf32>
    %381 = vector.shape_cast %380 : vector<8xf32> to vector<8x1xf32>
    %cst_88 = arith.constant 3.200000e+01 : f32
    %382 = vector.broadcast %cst_88 : f32 to vector<8x1xf32>
    %383 = arith.divf %381, %382 : vector<8x1xf32>
    %384 = vector.broadcast %383 : vector<8x1xf32> to vector<8x32xf32>
    %385 = arith.subf %379, %384 : vector<8x32xf32>
    %386 = arith.mulf %385, %385 : vector<8x32xf32>
    %cst_89 = arith.constant dense<0.000000e+00> : vector<8xf32>
    %387 = vector.multi_reduction <add>, %386, %cst_89 [1] : vector<8x32xf32> to vector<8xf32>
    %388 = vector.shape_cast %387 : vector<8xf32> to vector<8x1xf32>
    %cst_90 = arith.constant 3.200000e+01 : f32
    %389 = vector.broadcast %cst_90 : f32 to vector<8x1xf32>
    %390 = arith.divf %388, %389 : vector<8x1xf32>
    %391 = vector.broadcast %383 : vector<8x1xf32> to vector<8x32xf32>
    %392 = arith.subf %379, %391 : vector<8x32xf32>
    %cst_91 = arith.constant 1.000000e-03 : f32
    %393 = vector.broadcast %cst_91 : f32 to vector<8x1xf32>
    %394 = arith.addf %390, %393 : vector<8x1xf32>
    %395 = math.rsqrt %394 : vector<8x1xf32>
    %396 = vector.broadcast %395 : vector<8x1xf32> to vector<8x32xf32>
    %397 = arith.mulf %392, %396 : vector<8x32xf32>
    %398 = arith.mulf %397, %10 : vector<8x32xf32>
    %399 = arith.addf %398, %13 : vector<8x32xf32>
    %400 = arith.negf %399 : vector<8x32xf32>
    %401 = math.exp %400 : vector<8x32xf32>
    %cst_92 = arith.constant 1.000000e+00 : f32
    %402 = vector.broadcast %cst_92 : f32 to vector<8x32xf32>
    %403 = arith.addf %402, %401 : vector<8x32xf32>
    %404 = arith.divf %402, %403 : vector<8x32xf32>
    %405 = vector.extract_strided_slice %378 {offsets = [0, 32], sizes = [8, 32], strides = [1, 1]} : vector<8x128xf32> to vector<8x32xf32>
    %cst_93 = arith.constant dense<0.000000e+00> : vector<8xf32>
    %406 = vector.multi_reduction <add>, %405, %cst_93 [1] : vector<8x32xf32> to vector<8xf32>
    %407 = vector.shape_cast %406 : vector<8xf32> to vector<8x1xf32>
    %cst_94 = arith.constant 3.200000e+01 : f32
    %408 = vector.broadcast %cst_94 : f32 to vector<8x1xf32>
    %409 = arith.divf %407, %408 : vector<8x1xf32>
    %410 = vector.broadcast %409 : vector<8x1xf32> to vector<8x32xf32>
    %411 = arith.subf %405, %410 : vector<8x32xf32>
    %412 = arith.mulf %411, %411 : vector<8x32xf32>
    %cst_95 = arith.constant dense<0.000000e+00> : vector<8xf32>
    %413 = vector.multi_reduction <add>, %412, %cst_95 [1] : vector<8x32xf32> to vector<8xf32>
    %414 = vector.shape_cast %413 : vector<8xf32> to vector<8x1xf32>
    %cst_96 = arith.constant 3.200000e+01 : f32
    %415 = vector.broadcast %cst_96 : f32 to vector<8x1xf32>
    %416 = arith.divf %414, %415 : vector<8x1xf32>
    %417 = vector.broadcast %409 : vector<8x1xf32> to vector<8x32xf32>
    %418 = arith.subf %405, %417 : vector<8x32xf32>
    %cst_97 = arith.constant 1.000000e-03 : f32
    %419 = vector.broadcast %cst_97 : f32 to vector<8x1xf32>
    %420 = arith.addf %416, %419 : vector<8x1xf32>
    %421 = math.rsqrt %420 : vector<8x1xf32>
    %422 = vector.broadcast %421 : vector<8x1xf32> to vector<8x32xf32>
    %423 = arith.mulf %418, %422 : vector<8x32xf32>
    %424 = arith.mulf %423, %16 : vector<8x32xf32>
    %425 = arith.addf %424, %19 : vector<8x32xf32>
    %426 = arith.negf %425 : vector<8x32xf32>
    %427 = math.exp %426 : vector<8x32xf32>
    %cst_98 = arith.constant 1.000000e+00 : f32
    %428 = vector.broadcast %cst_98 : f32 to vector<8x32xf32>
    %429 = arith.addf %428, %427 : vector<8x32xf32>
    %430 = arith.divf %428, %429 : vector<8x32xf32>
    %431 = vector.extract_strided_slice %378 {offsets = [0, 64], sizes = [8, 32], strides = [1, 1]} : vector<8x128xf32> to vector<8x32xf32>
    %432 = vector.extract_strided_slice %378 {offsets = [0, 96], sizes = [8, 32], strides = [1, 1]} : vector<8x128xf32> to vector<8x32xf32>
    %433 = arith.mulf %404, %432 : vector<8x32xf32>
    %434 = arith.addf %431, %433 : vector<8x32xf32>
    %cst_99 = arith.constant dense<0.000000e+00> : vector<8xf32>
    %435 = vector.multi_reduction <add>, %434, %cst_99 [1] : vector<8x32xf32> to vector<8xf32>
    %436 = vector.shape_cast %435 : vector<8xf32> to vector<8x1xf32>
    %cst_100 = arith.constant 3.200000e+01 : f32
    %437 = vector.broadcast %cst_100 : f32 to vector<8x1xf32>
    %438 = arith.divf %436, %437 : vector<8x1xf32>
    %439 = vector.broadcast %438 : vector<8x1xf32> to vector<8x32xf32>
    %440 = arith.subf %434, %439 : vector<8x32xf32>
    %441 = arith.mulf %440, %440 : vector<8x32xf32>
    %cst_101 = arith.constant dense<0.000000e+00> : vector<8xf32>
    %442 = vector.multi_reduction <add>, %441, %cst_101 [1] : vector<8x32xf32> to vector<8xf32>
    %443 = vector.shape_cast %442 : vector<8xf32> to vector<8x1xf32>
    %cst_102 = arith.constant 3.200000e+01 : f32
    %444 = vector.broadcast %cst_102 : f32 to vector<8x1xf32>
    %445 = arith.divf %443, %444 : vector<8x1xf32>
    %446 = vector.broadcast %438 : vector<8x1xf32> to vector<8x32xf32>
    %447 = arith.subf %434, %446 : vector<8x32xf32>
    %cst_103 = arith.constant 1.000000e-03 : f32
    %448 = vector.broadcast %cst_103 : f32 to vector<8x1xf32>
    %449 = arith.addf %445, %448 : vector<8x1xf32>
    %450 = math.rsqrt %449 : vector<8x1xf32>
    %451 = vector.broadcast %450 : vector<8x1xf32> to vector<8x32xf32>
    %452 = arith.mulf %447, %451 : vector<8x32xf32>
    %453 = arith.mulf %452, %22 : vector<8x32xf32>
    %454 = arith.addf %453, %25 : vector<8x32xf32>
    %455 = math.tanh %454 : vector<8x32xf32>
    %456 = arith.mulf %430, %455 : vector<8x32xf32>
    %cst_104 = arith.constant 1.000000e+00 : f32
    %457 = vector.broadcast %cst_104 : f32 to vector<8x32xf32>
    %458 = arith.subf %457, %430 : vector<8x32xf32>
    %459 = arith.mulf %458, %367 : vector<8x32xf32>
    %460 = arith.addf %456, %459 : vector<8x32xf32>
    %461 = tpu.concatenate %460, %358 in 1 : vector<8x32xf32>, vector<8x32xf32> -> vector<8x64xf32>
    %462 = arith.truncf %461 : vector<8x64xf32> to vector<8x64xbf16>
    %cst_105 = arith.constant dense<0.000000e+00> : vector<8x64xf32>
    %463 = tpu.matmul %462, %2, %cst_105 {dimension_numbers = #tpu.dot_dimension_numbers<[1], [0], [0], [1], [0, 0, 1, 1], [], []>} : vector<8x64xbf16>, vector<64x64xbf16>, vector<8x64xf32> -> vector<8x64xf32>
    %464 = arith.addf %463, %28 : vector<8x64xf32>
    %cst_106 = arith.constant 0.000000e+00 : f32
    %465 = vector.broadcast %cst_106 : f32 to vector<8x64xf32>
    %466 = arith.maximumf %464, %465 : vector<8x64xf32>
    %467 = arith.truncf %466 : vector<8x64xf32> to vector<8x64xbf16>
    %cst_107 = arith.constant dense<0.000000e+00> : vector<8x32xf32>
    %468 = tpu.matmul %467, %3, %cst_107 {dimension_numbers = #tpu.dot_dimension_numbers<[1], [0], [0], [1], [0, 0, 1, 1], [], []>} : vector<8x64xbf16>, vector<64x32xbf16>, vector<8x32xf32> -> vector<8x32xf32>
    %469 = arith.addf %468, %31 : vector<8x32xf32>
    %470 = vector.extract_strided_slice %469 {offsets = [0, 0], sizes = [8, 8], strides = [1, 1]} : vector<8x32xf32> to vector<8x8xf32>
    %471 = vector.extract_strided_slice %469 {offsets = [0, 8], sizes = [8, 8], strides = [1, 1]} : vector<8x32xf32> to vector<8x8xf32>
    %cst_108 = arith.constant 0.000000e+00 : f32
    %472 = vector.broadcast %cst_108 : f32 to vector<8x8xf32>
    %473 = arith.maximumf %471, %472 : vector<8x8xf32>
    %474 = vector.broadcast %cst_108 : f32 to vector<8x8xf32>
    %475 = arith.subf %471, %474 : vector<8x8xf32>
    %476 = arith.cmpf one, %475, %475 : vector<8x8xf32>
    %477 = vector.broadcast %cst_108 : f32 to vector<8x8xf32>
    %478 = arith.addf %471, %477 : vector<8x8xf32>
    %479 = math.absf %475 : vector<8x8xf32>
    %cst_109 = arith.constant 0.000000e+00 : f32
    %480 = vector.broadcast %cst_109 : f32 to vector<8x8xf32>
    %481 = arith.subf %480, %479 : vector<8x8xf32>
    %482 = math.exp %481 : vector<8x8xf32>
    %483 = math.log1p %482 : vector<8x8xf32>
    %484 = arith.addf %473, %483 : vector<8x8xf32>
    %485 = arith.select %476, %478, %484 : vector<8x8xi1>, vector<8x8xf32>
    %cst_110 = arith.constant 1.000000e-01 : f32
    %486 = vector.broadcast %cst_110 : f32 to vector<8x8xf32>
    %487 = arith.addf %485, %486 : vector<8x8xf32>
    %488 = vector.extract_strided_slice %469 {offsets = [0, 16], sizes = [8, 8], strides = [1, 1]} : vector<8x32xf32> to vector<8x8xf32>
    %489 = vector.extract_strided_slice %469 {offsets = [0, 24], sizes = [8, 8], strides = [1, 1]} : vector<8x32xf32> to vector<8x8xf32>
    %cst_111 = arith.constant 0.000000e+00 : f32
    %490 = vector.broadcast %cst_111 : f32 to vector<8x8xf32>
    %491 = arith.maximumf %489, %490 : vector<8x8xf32>
    %492 = vector.broadcast %cst_111 : f32 to vector<8x8xf32>
    %493 = arith.subf %489, %492 : vector<8x8xf32>
    %494 = arith.cmpf one, %493, %493 : vector<8x8xf32>
    %495 = vector.broadcast %cst_111 : f32 to vector<8x8xf32>
    %496 = arith.addf %489, %495 : vector<8x8xf32>
    %497 = math.absf %493 : vector<8x8xf32>
    %cst_112 = arith.constant 0.000000e+00 : f32
    %498 = vector.broadcast %cst_112 : f32 to vector<8x8xf32>
    %499 = arith.subf %498, %497 : vector<8x8xf32>
    %500 = math.exp %499 : vector<8x8xf32>
    %501 = math.log1p %500 : vector<8x8xf32>
    %502 = arith.addf %491, %501 : vector<8x8xf32>
    %503 = arith.select %494, %496, %502 : vector<8x8xi1>, vector<8x8xf32>
    %cst_113 = arith.constant 1.000000e-01 : f32
    %504 = vector.broadcast %cst_113 : f32 to vector<8x8xf32>
    %505 = arith.addf %503, %504 : vector<8x8xf32>
    %506 = arith.mulf %505, %366 : vector<8x8xf32>
    %507 = arith.addf %488, %506 : vector<8x8xf32>
    %508 = tpu.concatenate %460, %470, %487, %488, %505, %507, %32 in 1 : vector<8x32xf32>, vector<8x8xf32>, vector<8x8xf32>, vector<8x8xf32>, vector<8x8xf32>, vector<8x8xf32>, vector<8x56xf32> -> vector<8x128xf32>
    %509 = arith.index_cast %c2_i32 : i32 to index
    %c0_114 = arith.constant 0 : index
    %c0_115 = arith.constant 0 : index
    %510 = vector.load %arg7[%509, %c0_114, %c0_115] : memref<8x8x128xf32, #tpu.memory_space<vmem>>, vector<1x8x128xf32>
    %511 = vector.shape_cast %510 : vector<1x8x128xf32> to vector<8x128xf32>
    %512 = vector.shape_cast %508 : vector<8x128xf32> to vector<1x8x128xf32>
    tpu.vector_store %arg7[%509, %c0_114, %c0_115], %512 {strides = array<i32>} : memref<8x8x128xf32, #tpu.memory_space<vmem>>, vector<1x8x128xf32>,
    %c3_i32 = arith.constant 3 : i32
    %513 = arith.index_cast %c3_i32 : i32 to index
    %c0_116 = arith.constant 0 : index
    %c0_117 = arith.constant 0 : index
    %c0_118 = arith.constant 0 : index
    %514 = vector.load %arg0[%513, %c0_116, %c0_117, %c0_118] : memref<8x4x8x32xf32, #tpu.memory_space<vmem>>, vector<1x4x8x32xf32>
    %515 = vector.shape_cast %514 : vector<1x4x8x32xf32> to vector<4x8x32xf32>
    %516 = vector.extract_strided_slice %515 {offsets = [0, 0, 0], sizes = [1, 8, 32], strides = [1, 1, 1]} : vector<4x8x32xf32> to vector<1x8x32xf32>
    %517 = vector.shape_cast %516 : vector<1x8x32xf32> to vector<8x32xf32>
    %518 = vector.extract_strided_slice %515 {offsets = [1, 0, 0], sizes = [1, 8, 32], strides = [1, 1, 1]} : vector<4x8x32xf32> to vector<1x8x32xf32>
    %519 = vector.shape_cast %518 : vector<1x8x32xf32> to vector<8x32xf32>
    %520 = vector.extract_strided_slice %519 {offsets = [0, 0], sizes = [8, 8], strides = [1, 1]} : vector<8x32xf32> to vector<8x8xf32>
    %521 = vector.extract_strided_slice %515 {offsets = [2, 0, 0], sizes = [1, 8, 32], strides = [1, 1, 1]} : vector<4x8x32xf32> to vector<1x8x32xf32>
    %522 = vector.shape_cast %521 : vector<1x8x32xf32> to vector<8x32xf32>
    %523 = vector.extract_strided_slice %515 {offsets = [3, 0, 0], sizes = [1, 8, 32], strides = [1, 1, 1]} : vector<4x8x32xf32> to vector<1x8x32xf32>
    %524 = vector.shape_cast %523 : vector<1x8x32xf32> to vector<8x32xf32>
    %525 = vector.extract_strided_slice %524 {offsets = [0, 0], sizes = [8, 8], strides = [1, 1]} : vector<8x32xf32> to vector<8x8xf32>
    %526 = arith.mulf %460, %522 : vector<8x32xf32>
    %527 = vector.extract_strided_slice %522 {offsets = [0, 0], sizes = [8, 8], strides = [1, 1]} : vector<8x32xf32> to vector<8x8xf32>
    %528 = arith.mulf %507, %527 : vector<8x8xf32>
    %529 = tpu.concatenate %528, %520 in 1 : vector<8x8xf32>, vector<8x8xf32> -> vector<8x16xf32>
    %530 = arith.truncf %529 : vector<8x16xf32> to vector<8x16xbf16>
    %cst_119 = arith.constant dense<0.000000e+00> : vector<8x32xf32>
    %531 = tpu.matmul %530, %0, %cst_119 {dimension_numbers = #tpu.dot_dimension_numbers<[1], [0], [0], [1], [0, 0, 1, 1], [], []>} : vector<8x16xbf16>, vector<16x32xbf16>, vector<8x32xf32> -> vector<8x32xf32>
    %532 = arith.addf %531, %7 : vector<8x32xf32>
    %cst_120 = arith.constant 0.000000e+00 : f32
    %533 = vector.broadcast %cst_120 : f32 to vector<8x32xf32>
    %534 = arith.maximumf %532, %533 : vector<8x32xf32>
    %535 = tpu.concatenate %534, %526 in 1 : vector<8x32xf32>, vector<8x32xf32> -> vector<8x64xf32>
    %536 = arith.truncf %535 : vector<8x64xf32> to vector<8x64xbf16>
    %cst_121 = arith.constant dense<0.000000e+00> : vector<8x128xf32>
    %537 = tpu.matmul %536, %1, %cst_121 {dimension_numbers = #tpu.dot_dimension_numbers<[1], [0], [0], [1], [0, 0, 1, 1], [], []>} : vector<8x64xbf16>, vector<64x128xbf16>, vector<8x128xf32> -> vector<8x128xf32>
    %538 = vector.extract_strided_slice %537 {offsets = [0, 0], sizes = [8, 32], strides = [1, 1]} : vector<8x128xf32> to vector<8x32xf32>
    %cst_122 = arith.constant dense<0.000000e+00> : vector<8xf32>
    %539 = vector.multi_reduction <add>, %538, %cst_122 [1] : vector<8x32xf32> to vector<8xf32>
    %540 = vector.shape_cast %539 : vector<8xf32> to vector<8x1xf32>
    %cst_123 = arith.constant 3.200000e+01 : f32
    %541 = vector.broadcast %cst_123 : f32 to vector<8x1xf32>
    %542 = arith.divf %540, %541 : vector<8x1xf32>
    %543 = vector.broadcast %542 : vector<8x1xf32> to vector<8x32xf32>
    %544 = arith.subf %538, %543 : vector<8x32xf32>
    %545 = arith.mulf %544, %544 : vector<8x32xf32>
    %cst_124 = arith.constant dense<0.000000e+00> : vector<8xf32>
    %546 = vector.multi_reduction <add>, %545, %cst_124 [1] : vector<8x32xf32> to vector<8xf32>
    %547 = vector.shape_cast %546 : vector<8xf32> to vector<8x1xf32>
    %cst_125 = arith.constant 3.200000e+01 : f32
    %548 = vector.broadcast %cst_125 : f32 to vector<8x1xf32>
    %549 = arith.divf %547, %548 : vector<8x1xf32>
    %550 = vector.broadcast %542 : vector<8x1xf32> to vector<8x32xf32>
    %551 = arith.subf %538, %550 : vector<8x32xf32>
    %cst_126 = arith.constant 1.000000e-03 : f32
    %552 = vector.broadcast %cst_126 : f32 to vector<8x1xf32>
    %553 = arith.addf %549, %552 : vector<8x1xf32>
    %554 = math.rsqrt %553 : vector<8x1xf32>
    %555 = vector.broadcast %554 : vector<8x1xf32> to vector<8x32xf32>
    %556 = arith.mulf %551, %555 : vector<8x32xf32>
    %557 = arith.mulf %556, %10 : vector<8x32xf32>
    %558 = arith.addf %557, %13 : vector<8x32xf32>
    %559 = arith.negf %558 : vector<8x32xf32>
    %560 = math.exp %559 : vector<8x32xf32>
    %cst_127 = arith.constant 1.000000e+00 : f32
    %561 = vector.broadcast %cst_127 : f32 to vector<8x32xf32>
    %562 = arith.addf %561, %560 : vector<8x32xf32>
    %563 = arith.divf %561, %562 : vector<8x32xf32>
    %564 = vector.extract_strided_slice %537 {offsets = [0, 32], sizes = [8, 32], strides = [1, 1]} : vector<8x128xf32> to vector<8x32xf32>
    %cst_128 = arith.constant dense<0.000000e+00> : vector<8xf32>
    %565 = vector.multi_reduction <add>, %564, %cst_128 [1] : vector<8x32xf32> to vector<8xf32>
    %566 = vector.shape_cast %565 : vector<8xf32> to vector<8x1xf32>
    %cst_129 = arith.constant 3.200000e+01 : f32
    %567 = vector.broadcast %cst_129 : f32 to vector<8x1xf32>
    %568 = arith.divf %566, %567 : vector<8x1xf32>
    %569 = vector.broadcast %568 : vector<8x1xf32> to vector<8x32xf32>
    %570 = arith.subf %564, %569 : vector<8x32xf32>
    %571 = arith.mulf %570, %570 : vector<8x32xf32>
    %cst_130 = arith.constant dense<0.000000e+00> : vector<8xf32>
    %572 = vector.multi_reduction <add>, %571, %cst_130 [1] : vector<8x32xf32> to vector<8xf32>
    %573 = vector.shape_cast %572 : vector<8xf32> to vector<8x1xf32>
    %cst_131 = arith.constant 3.200000e+01 : f32
    %574 = vector.broadcast %cst_131 : f32 to vector<8x1xf32>
    %575 = arith.divf %573, %574 : vector<8x1xf32>
    %576 = vector.broadcast %568 : vector<8x1xf32> to vector<8x32xf32>
    %577 = arith.subf %564, %576 : vector<8x32xf32>
    %cst_132 = arith.constant 1.000000e-03 : f32
    %578 = vector.broadcast %cst_132 : f32 to vector<8x1xf32>
    %579 = arith.addf %575, %578 : vector<8x1xf32>
    %580 = math.rsqrt %579 : vector<8x1xf32>
    %581 = vector.broadcast %580 : vector<8x1xf32> to vector<8x32xf32>
    %582 = arith.mulf %577, %581 : vector<8x32xf32>
    %583 = arith.mulf %582, %16 : vector<8x32xf32>
    %584 = arith.addf %583, %19 : vector<8x32xf32>
    %585 = arith.negf %584 : vector<8x32xf32>
    %586 = math.exp %585 : vector<8x32xf32>
    %cst_133 = arith.constant 1.000000e+00 : f32
    %587 = vector.broadcast %cst_133 : f32 to vector<8x32xf32>
    %588 = arith.addf %587, %586 : vector<8x32xf32>
    %589 = arith.divf %587, %588 : vector<8x32xf32>
    %590 = vector.extract_strided_slice %537 {offsets = [0, 64], sizes = [8, 32], strides = [1, 1]} : vector<8x128xf32> to vector<8x32xf32>
    %591 = vector.extract_strided_slice %537 {offsets = [0, 96], sizes = [8, 32], strides = [1, 1]} : vector<8x128xf32> to vector<8x32xf32>
    %592 = arith.mulf %563, %591 : vector<8x32xf32>
    %593 = arith.addf %590, %592 : vector<8x32xf32>
    %cst_134 = arith.constant dense<0.000000e+00> : vector<8xf32>
    %594 = vector.multi_reduction <add>, %593, %cst_134 [1] : vector<8x32xf32> to vector<8xf32>
    %595 = vector.shape_cast %594 : vector<8xf32> to vector<8x1xf32>
    %cst_135 = arith.constant 3.200000e+01 : f32
    %596 = vector.broadcast %cst_135 : f32 to vector<8x1xf32>
    %597 = arith.divf %595, %596 : vector<8x1xf32>
    %598 = vector.broadcast %597 : vector<8x1xf32> to vector<8x32xf32>
    %599 = arith.subf %593, %598 : vector<8x32xf32>
    %600 = arith.mulf %599, %599 : vector<8x32xf32>
    %cst_136 = arith.constant dense<0.000000e+00> : vector<8xf32>
    %601 = vector.multi_reduction <add>, %600, %cst_136 [1] : vector<8x32xf32> to vector<8xf32>
    %602 = vector.shape_cast %601 : vector<8xf32> to vector<8x1xf32>
    %cst_137 = arith.constant 3.200000e+01 : f32
    %603 = vector.broadcast %cst_137 : f32 to vector<8x1xf32>
    %604 = arith.divf %602, %603 : vector<8x1xf32>
    %605 = vector.broadcast %597 : vector<8x1xf32> to vector<8x32xf32>
    %606 = arith.subf %593, %605 : vector<8x32xf32>
    %cst_138 = arith.constant 1.000000e-03 : f32
    %607 = vector.broadcast %cst_138 : f32 to vector<8x1xf32>
    %608 = arith.addf %604, %607 : vector<8x1xf32>
    %609 = math.rsqrt %608 : vector<8x1xf32>
    %610 = vector.broadcast %609 : vector<8x1xf32> to vector<8x32xf32>
    %611 = arith.mulf %606, %610 : vector<8x32xf32>
    %612 = arith.mulf %611, %22 : vector<8x32xf32>
    %613 = arith.addf %612, %25 : vector<8x32xf32>
    %614 = math.tanh %613 : vector<8x32xf32>
    %615 = arith.mulf %589, %614 : vector<8x32xf32>
    %cst_139 = arith.constant 1.000000e+00 : f32
    %616 = vector.broadcast %cst_139 : f32 to vector<8x32xf32>
    %617 = arith.subf %616, %589 : vector<8x32xf32>
    %618 = arith.mulf %617, %526 : vector<8x32xf32>
    %619 = arith.addf %615, %618 : vector<8x32xf32>
    %620 = tpu.concatenate %619, %517 in 1 : vector<8x32xf32>, vector<8x32xf32> -> vector<8x64xf32>
    %621 = arith.truncf %620 : vector<8x64xf32> to vector<8x64xbf16>
    %cst_140 = arith.constant dense<0.000000e+00> : vector<8x64xf32>
    %622 = tpu.matmul %621, %2, %cst_140 {dimension_numbers = #tpu.dot_dimension_numbers<[1], [0], [0], [1], [0, 0, 1, 1], [], []>} : vector<8x64xbf16>, vector<64x64xbf16>, vector<8x64xf32> -> vector<8x64xf32>
    %623 = arith.addf %622, %28 : vector<8x64xf32>
    %cst_141 = arith.constant 0.000000e+00 : f32
    %624 = vector.broadcast %cst_141 : f32 to vector<8x64xf32>
    %625 = arith.maximumf %623, %624 : vector<8x64xf32>
    %626 = arith.truncf %625 : vector<8x64xf32> to vector<8x64xbf16>
    %cst_142 = arith.constant dense<0.000000e+00> : vector<8x32xf32>
    %627 = tpu.matmul %626, %3, %cst_142 {dimension_numbers = #tpu.dot_dimension_numbers<[1], [0], [0], [1], [0, 0, 1, 1], [], []>} : vector<8x64xbf16>, vector<64x32xbf16>, vector<8x32xf32> -> vector<8x32xf32>
    %628 = arith.addf %627, %31 : vector<8x32xf32>
    %629 = vector.extract_strided_slice %628 {offsets = [0, 0], sizes = [8, 8], strides = [1, 1]} : vector<8x32xf32> to vector<8x8xf32>
    %630 = vector.extract_strided_slice %628 {offsets = [0, 8], sizes = [8, 8], strides = [1, 1]} : vector<8x32xf32> to vector<8x8xf32>
    %cst_143 = arith.constant 0.000000e+00 : f32
    %631 = vector.broadcast %cst_143 : f32 to vector<8x8xf32>
    %632 = arith.maximumf %630, %631 : vector<8x8xf32>
    %633 = vector.broadcast %cst_143 : f32 to vector<8x8xf32>
    %634 = arith.subf %630, %633 : vector<8x8xf32>
    %635 = arith.cmpf one, %634, %634 : vector<8x8xf32>
    %636 = vector.broadcast %cst_143 : f32 to vector<8x8xf32>
    %637 = arith.addf %630, %636 : vector<8x8xf32>
    %638 = math.absf %634 : vector<8x8xf32>
    %cst_144 = arith.constant 0.000000e+00 : f32
    %639 = vector.broadcast %cst_144 : f32 to vector<8x8xf32>
    %640 = arith.subf %639, %638 : vector<8x8xf32>
    %641 = math.exp %640 : vector<8x8xf32>
    %642 = math.log1p %641 : vector<8x8xf32>
    %643 = arith.addf %632, %642 : vector<8x8xf32>
    %644 = arith.select %635, %637, %643 : vector<8x8xi1>, vector<8x8xf32>
    %cst_145 = arith.constant 1.000000e-01 : f32
    %645 = vector.broadcast %cst_145 : f32 to vector<8x8xf32>
    %646 = arith.addf %644, %645 : vector<8x8xf32>
    %647 = vector.extract_strided_slice %628 {offsets = [0, 16], sizes = [8, 8], strides = [1, 1]} : vector<8x32xf32> to vector<8x8xf32>
    %648 = vector.extract_strided_slice %628 {offsets = [0, 24], sizes = [8, 8], strides = [1, 1]} : vector<8x32xf32> to vector<8x8xf32>
    %cst_146 = arith.constant 0.000000e+00 : f32
    %649 = vector.broadcast %cst_146 : f32 to vector<8x8xf32>
    %650 = arith.maximumf %648, %649 : vector<8x8xf32>
    %651 = vector.broadcast %cst_146 : f32 to vector<8x8xf32>
    %652 = arith.subf %648, %651 : vector<8x8xf32>
    %653 = arith.cmpf one, %652, %652 : vector<8x8xf32>
    %654 = vector.broadcast %cst_146 : f32 to vector<8x8xf32>
    %655 = arith.addf %648, %654 : vector<8x8xf32>
    %656 = math.absf %652 : vector<8x8xf32>
    %cst_147 = arith.constant 0.000000e+00 : f32
    %657 = vector.broadcast %cst_147 : f32 to vector<8x8xf32>
    %658 = arith.subf %657, %656 : vector<8x8xf32>
    %659 = math.exp %658 : vector<8x8xf32>
    %660 = math.log1p %659 : vector<8x8xf32>
    %661 = arith.addf %650, %660 : vector<8x8xf32>
    %662 = arith.select %653, %655, %661 : vector<8x8xi1>, vector<8x8xf32>
    %cst_148 = arith.constant 1.000000e-01 : f32
    %663 = vector.broadcast %cst_148 : f32 to vector<8x8xf32>
    %664 = arith.addf %662, %663 : vector<8x8xf32>
    %665 = arith.mulf %664, %525 : vector<8x8xf32>
    %666 = arith.addf %647, %665 : vector<8x8xf32>
    %667 = tpu.concatenate %619, %629, %646, %647, %664, %666, %32 in 1 : vector<8x32xf32>, vector<8x8xf32>, vector<8x8xf32>, vector<8x8xf32>, vector<8x8xf32>, vector<8x8xf32>, vector<8x56xf32> -> vector<8x128xf32>
    %668 = arith.index_cast %c3_i32 : i32 to index
    %c0_149 = arith.constant 0 : index
    %c0_150 = arith.constant 0 : index
    %669 = vector.load %arg7[%668, %c0_149, %c0_150] : memref<8x8x128xf32, #tpu.memory_space<vmem>>, vector<1x8x128xf32>
    %670 = vector.shape_cast %669 : vector<1x8x128xf32> to vector<8x128xf32>
    %671 = vector.shape_cast %667 : vector<8x128xf32> to vector<1x8x128xf32>
    tpu.vector_store %arg7[%668, %c0_149, %c0_150], %671 {strides = array<i32>} : memref<8x8x128xf32, #tpu.memory_space<vmem>>, vector<1x8x128xf32>,
    %c4_i32 = arith.constant 4 : i32
    %672 = arith.index_cast %c4_i32 : i32 to index
    %c0_151 = arith.constant 0 : index
    %c0_152 = arith.constant 0 : index
    %c0_153 = arith.constant 0 : index
    %673 = vector.load %arg0[%672, %c0_151, %c0_152, %c0_153] : memref<8x4x8x32xf32, #tpu.memory_space<vmem>>, vector<1x4x8x32xf32>
    %674 = vector.shape_cast %673 : vector<1x4x8x32xf32> to vector<4x8x32xf32>
    %675 = vector.extract_strided_slice %674 {offsets = [0, 0, 0], sizes = [1, 8, 32], strides = [1, 1, 1]} : vector<4x8x32xf32> to vector<1x8x32xf32>
    %676 = vector.shape_cast %675 : vector<1x8x32xf32> to vector<8x32xf32>
    %677 = vector.extract_strided_slice %674 {offsets = [1, 0, 0], sizes = [1, 8, 32], strides = [1, 1, 1]} : vector<4x8x32xf32> to vector<1x8x32xf32>
    %678 = vector.shape_cast %677 : vector<1x8x32xf32> to vector<8x32xf32>
    %679 = vector.extract_strided_slice %678 {offsets = [0, 0], sizes = [8, 8], strides = [1, 1]} : vector<8x32xf32> to vector<8x8xf32>
    %680 = vector.extract_strided_slice %674 {offsets = [2, 0, 0], sizes = [1, 8, 32], strides = [1, 1, 1]} : vector<4x8x32xf32> to vector<1x8x32xf32>
    %681 = vector.shape_cast %680 : vector<1x8x32xf32> to vector<8x32xf32>
    %682 = vector.extract_strided_slice %674 {offsets = [3, 0, 0], sizes = [1, 8, 32], strides = [1, 1, 1]} : vector<4x8x32xf32> to vector<1x8x32xf32>
    %683 = vector.shape_cast %682 : vector<1x8x32xf32> to vector<8x32xf32>
    %684 = vector.extract_strided_slice %683 {offsets = [0, 0], sizes = [8, 8], strides = [1, 1]} : vector<8x32xf32> to vector<8x8xf32>
    %685 = arith.mulf %619, %681 : vector<8x32xf32>
    %686 = vector.extract_strided_slice %681 {offsets = [0, 0], sizes = [8, 8], strides = [1, 1]} : vector<8x32xf32> to vector<8x8xf32>
    %687 = arith.mulf %666, %686 : vector<8x8xf32>
    %688 = tpu.concatenate %687, %679 in 1 : vector<8x8xf32>, vector<8x8xf32> -> vector<8x16xf32>
    %689 = arith.truncf %688 : vector<8x16xf32> to vector<8x16xbf16>
    %cst_154 = arith.constant dense<0.000000e+00> : vector<8x32xf32>
    %690 = tpu.matmul %689, %0, %cst_154 {dimension_numbers = #tpu.dot_dimension_numbers<[1], [0], [0], [1], [0, 0, 1, 1], [], []>} : vector<8x16xbf16>, vector<16x32xbf16>, vector<8x32xf32> -> vector<8x32xf32>
    %691 = arith.addf %690, %7 : vector<8x32xf32>
    %cst_155 = arith.constant 0.000000e+00 : f32
    %692 = vector.broadcast %cst_155 : f32 to vector<8x32xf32>
    %693 = arith.maximumf %691, %692 : vector<8x32xf32>
    %694 = tpu.concatenate %693, %685 in 1 : vector<8x32xf32>, vector<8x32xf32> -> vector<8x64xf32>
    %695 = arith.truncf %694 : vector<8x64xf32> to vector<8x64xbf16>
    %cst_156 = arith.constant dense<0.000000e+00> : vector<8x128xf32>
    %696 = tpu.matmul %695, %1, %cst_156 {dimension_numbers = #tpu.dot_dimension_numbers<[1], [0], [0], [1], [0, 0, 1, 1], [], []>} : vector<8x64xbf16>, vector<64x128xbf16>, vector<8x128xf32> -> vector<8x128xf32>
    %697 = vector.extract_strided_slice %696 {offsets = [0, 0], sizes = [8, 32], strides = [1, 1]} : vector<8x128xf32> to vector<8x32xf32>
    %cst_157 = arith.constant dense<0.000000e+00> : vector<8xf32>
    %698 = vector.multi_reduction <add>, %697, %cst_157 [1] : vector<8x32xf32> to vector<8xf32>
    %699 = vector.shape_cast %698 : vector<8xf32> to vector<8x1xf32>
    %cst_158 = arith.constant 3.200000e+01 : f32
    %700 = vector.broadcast %cst_158 : f32 to vector<8x1xf32>
    %701 = arith.divf %699, %700 : vector<8x1xf32>
    %702 = vector.broadcast %701 : vector<8x1xf32> to vector<8x32xf32>
    %703 = arith.subf %697, %702 : vector<8x32xf32>
    %704 = arith.mulf %703, %703 : vector<8x32xf32>
    %cst_159 = arith.constant dense<0.000000e+00> : vector<8xf32>
    %705 = vector.multi_reduction <add>, %704, %cst_159 [1] : vector<8x32xf32> to vector<8xf32>
    %706 = vector.shape_cast %705 : vector<8xf32> to vector<8x1xf32>
    %cst_160 = arith.constant 3.200000e+01 : f32
    %707 = vector.broadcast %cst_160 : f32 to vector<8x1xf32>
    %708 = arith.divf %706, %707 : vector<8x1xf32>
    %709 = vector.broadcast %701 : vector<8x1xf32> to vector<8x32xf32>
    %710 = arith.subf %697, %709 : vector<8x32xf32>
    %cst_161 = arith.constant 1.000000e-03 : f32
    %711 = vector.broadcast %cst_161 : f32 to vector<8x1xf32>
    %712 = arith.addf %708, %711 : vector<8x1xf32>
    %713 = math.rsqrt %712 : vector<8x1xf32>
    %714 = vector.broadcast %713 : vector<8x1xf32> to vector<8x32xf32>
    %715 = arith.mulf %710, %714 : vector<8x32xf32>
    %716 = arith.mulf %715, %10 : vector<8x32xf32>
    %717 = arith.addf %716, %13 : vector<8x32xf32>
    %718 = arith.negf %717 : vector<8x32xf32>
    %719 = math.exp %718 : vector<8x32xf32>
    %cst_162 = arith.constant 1.000000e+00 : f32
    %720 = vector.broadcast %cst_162 : f32 to vector<8x32xf32>
    %721 = arith.addf %720, %719 : vector<8x32xf32>
    %722 = arith.divf %720, %721 : vector<8x32xf32>
    %723 = vector.extract_strided_slice %696 {offsets = [0, 32], sizes = [8, 32], strides = [1, 1]} : vector<8x128xf32> to vector<8x32xf32>
    %cst_163 = arith.constant dense<0.000000e+00> : vector<8xf32>
    %724 = vector.multi_reduction <add>, %723, %cst_163 [1] : vector<8x32xf32> to vector<8xf32>
    %725 = vector.shape_cast %724 : vector<8xf32> to vector<8x1xf32>
    %cst_164 = arith.constant 3.200000e+01 : f32
    %726 = vector.broadcast %cst_164 : f32 to vector<8x1xf32>
    %727 = arith.divf %725, %726 : vector<8x1xf32>
    %728 = vector.broadcast %727 : vector<8x1xf32> to vector<8x32xf32>
    %729 = arith.subf %723, %728 : vector<8x32xf32>
    %730 = arith.mulf %729, %729 : vector<8x32xf32>
    %cst_165 = arith.constant dense<0.000000e+00> : vector<8xf32>
    %731 = vector.multi_reduction <add>, %730, %cst_165 [1] : vector<8x32xf32> to vector<8xf32>
    %732 = vector.shape_cast %731 : vector<8xf32> to vector<8x1xf32>
    %cst_166 = arith.constant 3.200000e+01 : f32
    %733 = vector.broadcast %cst_166 : f32 to vector<8x1xf32>
    %734 = arith.divf %732, %733 : vector<8x1xf32>
    %735 = vector.broadcast %727 : vector<8x1xf32> to vector<8x32xf32>
    %736 = arith.subf %723, %735 : vector<8x32xf32>
    %cst_167 = arith.constant 1.000000e-03 : f32
    %737 = vector.broadcast %cst_167 : f32 to vector<8x1xf32>
    %738 = arith.addf %734, %737 : vector<8x1xf32>
    %739 = math.rsqrt %738 : vector<8x1xf32>
    %740 = vector.broadcast %739 : vector<8x1xf32> to vector<8x32xf32>
    %741 = arith.mulf %736, %740 : vector<8x32xf32>
    %742 = arith.mulf %741, %16 : vector<8x32xf32>
    %743 = arith.addf %742, %19 : vector<8x32xf32>
    %744 = arith.negf %743 : vector<8x32xf32>
    %745 = math.exp %744 : vector<8x32xf32>
    %cst_168 = arith.constant 1.000000e+00 : f32
    %746 = vector.broadcast %cst_168 : f32 to vector<8x32xf32>
    %747 = arith.addf %746, %745 : vector<8x32xf32>
    %748 = arith.divf %746, %747 : vector<8x32xf32>
    %749 = vector.extract_strided_slice %696 {offsets = [0, 64], sizes = [8, 32], strides = [1, 1]} : vector<8x128xf32> to vector<8x32xf32>
    %750 = vector.extract_strided_slice %696 {offsets = [0, 96], sizes = [8, 32], strides = [1, 1]} : vector<8x128xf32> to vector<8x32xf32>
    %751 = arith.mulf %722, %750 : vector<8x32xf32>
    %752 = arith.addf %749, %751 : vector<8x32xf32>
    %cst_169 = arith.constant dense<0.000000e+00> : vector<8xf32>
    %753 = vector.multi_reduction <add>, %752, %cst_169 [1] : vector<8x32xf32> to vector<8xf32>
    %754 = vector.shape_cast %753 : vector<8xf32> to vector<8x1xf32>
    %cst_170 = arith.constant 3.200000e+01 : f32
    %755 = vector.broadcast %cst_170 : f32 to vector<8x1xf32>
    %756 = arith.divf %754, %755 : vector<8x1xf32>
    %757 = vector.broadcast %756 : vector<8x1xf32> to vector<8x32xf32>
    %758 = arith.subf %752, %757 : vector<8x32xf32>
    %759 = arith.mulf %758, %758 : vector<8x32xf32>
    %cst_171 = arith.constant dense<0.000000e+00> : vector<8xf32>
    %760 = vector.multi_reduction <add>, %759, %cst_171 [1] : vector<8x32xf32> to vector<8xf32>
    %761 = vector.shape_cast %760 : vector<8xf32> to vector<8x1xf32>
    %cst_172 = arith.constant 3.200000e+01 : f32
    %762 = vector.broadcast %cst_172 : f32 to vector<8x1xf32>
    %763 = arith.divf %761, %762 : vector<8x1xf32>
    %764 = vector.broadcast %756 : vector<8x1xf32> to vector<8x32xf32>
    %765 = arith.subf %752, %764 : vector<8x32xf32>
    %cst_173 = arith.constant 1.000000e-03 : f32
    %766 = vector.broadcast %cst_173 : f32 to vector<8x1xf32>
    %767 = arith.addf %763, %766 : vector<8x1xf32>
    %768 = math.rsqrt %767 : vector<8x1xf32>
    %769 = vector.broadcast %768 : vector<8x1xf32> to vector<8x32xf32>
    %770 = arith.mulf %765, %769 : vector<8x32xf32>
    %771 = arith.mulf %770, %22 : vector<8x32xf32>
    %772 = arith.addf %771, %25 : vector<8x32xf32>
    %773 = math.tanh %772 : vector<8x32xf32>
    %774 = arith.mulf %748, %773 : vector<8x32xf32>
    %cst_174 = arith.constant 1.000000e+00 : f32
    %775 = vector.broadcast %cst_174 : f32 to vector<8x32xf32>
    %776 = arith.subf %775, %748 : vector<8x32xf32>
    %777 = arith.mulf %776, %685 : vector<8x32xf32>
    %778 = arith.addf %774, %777 : vector<8x32xf32>
    %779 = tpu.concatenate %778, %676 in 1 : vector<8x32xf32>, vector<8x32xf32> -> vector<8x64xf32>
    %780 = arith.truncf %779 : vector<8x64xf32> to vector<8x64xbf16>
    %cst_175 = arith.constant dense<0.000000e+00> : vector<8x64xf32>
    %781 = tpu.matmul %780, %2, %cst_175 {dimension_numbers = #tpu.dot_dimension_numbers<[1], [0], [0], [1], [0, 0, 1, 1], [], []>} : vector<8x64xbf16>, vector<64x64xbf16>, vector<8x64xf32> -> vector<8x64xf32>
    %782 = arith.addf %781, %28 : vector<8x64xf32>
    %cst_176 = arith.constant 0.000000e+00 : f32
    %783 = vector.broadcast %cst_176 : f32 to vector<8x64xf32>
    %784 = arith.maximumf %782, %783 : vector<8x64xf32>
    %785 = arith.truncf %784 : vector<8x64xf32> to vector<8x64xbf16>
    %cst_177 = arith.constant dense<0.000000e+00> : vector<8x32xf32>
    %786 = tpu.matmul %785, %3, %cst_177 {dimension_numbers = #tpu.dot_dimension_numbers<[1], [0], [0], [1], [0, 0, 1, 1], [], []>} : vector<8x64xbf16>, vector<64x32xbf16>, vector<8x32xf32> -> vector<8x32xf32>
    %787 = arith.addf %786, %31 : vector<8x32xf32>
    %788 = vector.extract_strided_slice %787 {offsets = [0, 0], sizes = [8, 8], strides = [1, 1]} : vector<8x32xf32> to vector<8x8xf32>
    %789 = vector.extract_strided_slice %787 {offsets = [0, 8], sizes = [8, 8], strides = [1, 1]} : vector<8x32xf32> to vector<8x8xf32>
    %cst_178 = arith.constant 0.000000e+00 : f32
    %790 = vector.broadcast %cst_178 : f32 to vector<8x8xf32>
    %791 = arith.maximumf %789, %790 : vector<8x8xf32>
    %792 = vector.broadcast %cst_178 : f32 to vector<8x8xf32>
    %793 = arith.subf %789, %792 : vector<8x8xf32>
    %794 = arith.cmpf one, %793, %793 : vector<8x8xf32>
    %795 = vector.broadcast %cst_178 : f32 to vector<8x8xf32>
    %796 = arith.addf %789, %795 : vector<8x8xf32>
    %797 = math.absf %793 : vector<8x8xf32>
    %cst_179 = arith.constant 0.000000e+00 : f32
    %798 = vector.broadcast %cst_179 : f32 to vector<8x8xf32>
    %799 = arith.subf %798, %797 : vector<8x8xf32>
    %800 = math.exp %799 : vector<8x8xf32>
    %801 = math.log1p %800 : vector<8x8xf32>
    %802 = arith.addf %791, %801 : vector<8x8xf32>
    %803 = arith.select %794, %796, %802 : vector<8x8xi1>, vector<8x8xf32>
    %cst_180 = arith.constant 1.000000e-01 : f32
    %804 = vector.broadcast %cst_180 : f32 to vector<8x8xf32>
    %805 = arith.addf %803, %804 : vector<8x8xf32>
    %806 = vector.extract_strided_slice %787 {offsets = [0, 16], sizes = [8, 8], strides = [1, 1]} : vector<8x32xf32> to vector<8x8xf32>
    %807 = vector.extract_strided_slice %787 {offsets = [0, 24], sizes = [8, 8], strides = [1, 1]} : vector<8x32xf32> to vector<8x8xf32>
    %cst_181 = arith.constant 0.000000e+00 : f32
    %808 = vector.broadcast %cst_181 : f32 to vector<8x8xf32>
    %809 = arith.maximumf %807, %808 : vector<8x8xf32>
    %810 = vector.broadcast %cst_181 : f32 to vector<8x8xf32>
    %811 = arith.subf %807, %810 : vector<8x8xf32>
    %812 = arith.cmpf one, %811, %811 : vector<8x8xf32>
    %813 = vector.broadcast %cst_181 : f32 to vector<8x8xf32>
    %814 = arith.addf %807, %813 : vector<8x8xf32>
    %815 = math.absf %811 : vector<8x8xf32>
    %cst_182 = arith.constant 0.000000e+00 : f32
    %816 = vector.broadcast %cst_182 : f32 to vector<8x8xf32>
    %817 = arith.subf %816, %815 : vector<8x8xf32>
    %818 = math.exp %817 : vector<8x8xf32>
    %819 = math.log1p %818 : vector<8x8xf32>
    %820 = arith.addf %809, %819 : vector<8x8xf32>
    %821 = arith.select %812, %814, %820 : vector<8x8xi1>, vector<8x8xf32>
    %cst_183 = arith.constant 1.000000e-01 : f32
    %822 = vector.broadcast %cst_183 : f32 to vector<8x8xf32>
    %823 = arith.addf %821, %822 : vector<8x8xf32>
    %824 = arith.mulf %823, %684 : vector<8x8xf32>
    %825 = arith.addf %806, %824 : vector<8x8xf32>
    %826 = tpu.concatenate %778, %788, %805, %806, %823, %825, %32 in 1 : vector<8x32xf32>, vector<8x8xf32>, vector<8x8xf32>, vector<8x8xf32>, vector<8x8xf32>, vector<8x8xf32>, vector<8x56xf32> -> vector<8x128xf32>
    %827 = arith.index_cast %c4_i32 : i32 to index
    %c0_184 = arith.constant 0 : index
    %c0_185 = arith.constant 0 : index
    %828 = vector.load %arg7[%827, %c0_184, %c0_185] : memref<8x8x128xf32, #tpu.memory_space<vmem>>, vector<1x8x128xf32>
    %829 = vector.shape_cast %828 : vector<1x8x128xf32> to vector<8x128xf32>
    %830 = vector.shape_cast %826 : vector<8x128xf32> to vector<1x8x128xf32>
    tpu.vector_store %arg7[%827, %c0_184, %c0_185], %830 {strides = array<i32>} : memref<8x8x128xf32, #tpu.memory_space<vmem>>, vector<1x8x128xf32>,
    %c5_i32 = arith.constant 5 : i32
    %831 = arith.index_cast %c5_i32 : i32 to index
    %c0_186 = arith.constant 0 : index
    %c0_187 = arith.constant 0 : index
    %c0_188 = arith.constant 0 : index
    %832 = vector.load %arg0[%831, %c0_186, %c0_187, %c0_188] : memref<8x4x8x32xf32, #tpu.memory_space<vmem>>, vector<1x4x8x32xf32>
    %833 = vector.shape_cast %832 : vector<1x4x8x32xf32> to vector<4x8x32xf32>
    %834 = vector.extract_strided_slice %833 {offsets = [0, 0, 0], sizes = [1, 8, 32], strides = [1, 1, 1]} : vector<4x8x32xf32> to vector<1x8x32xf32>
    %835 = vector.shape_cast %834 : vector<1x8x32xf32> to vector<8x32xf32>
    %836 = vector.extract_strided_slice %833 {offsets = [1, 0, 0], sizes = [1, 8, 32], strides = [1, 1, 1]} : vector<4x8x32xf32> to vector<1x8x32xf32>
    %837 = vector.shape_cast %836 : vector<1x8x32xf32> to vector<8x32xf32>
    %838 = vector.extract_strided_slice %837 {offsets = [0, 0], sizes = [8, 8], strides = [1, 1]} : vector<8x32xf32> to vector<8x8xf32>
    %839 = vector.extract_strided_slice %833 {offsets = [2, 0, 0], sizes = [1, 8, 32], strides = [1, 1, 1]} : vector<4x8x32xf32> to vector<1x8x32xf32>
    %840 = vector.shape_cast %839 : vector<1x8x32xf32> to vector<8x32xf32>
    %841 = vector.extract_strided_slice %833 {offsets = [3, 0, 0], sizes = [1, 8, 32], strides = [1, 1, 1]} : vector<4x8x32xf32> to vector<1x8x32xf32>
    %842 = vector.shape_cast %841 : vector<1x8x32xf32> to vector<8x32xf32>
    %843 = vector.extract_strided_slice %842 {offsets = [0, 0], sizes = [8, 8], strides = [1, 1]} : vector<8x32xf32> to vector<8x8xf32>
    %844 = arith.mulf %778, %840 : vector<8x32xf32>
    %845 = vector.extract_strided_slice %840 {offsets = [0, 0], sizes = [8, 8], strides = [1, 1]} : vector<8x32xf32> to vector<8x8xf32>
    %846 = arith.mulf %825, %845 : vector<8x8xf32>
    %847 = tpu.concatenate %846, %838 in 1 : vector<8x8xf32>, vector<8x8xf32> -> vector<8x16xf32>
    %848 = arith.truncf %847 : vector<8x16xf32> to vector<8x16xbf16>
    %cst_189 = arith.constant dense<0.000000e+00> : vector<8x32xf32>
    %849 = tpu.matmul %848, %0, %cst_189 {dimension_numbers = #tpu.dot_dimension_numbers<[1], [0], [0], [1], [0, 0, 1, 1], [], []>} : vector<8x16xbf16>, vector<16x32xbf16>, vector<8x32xf32> -> vector<8x32xf32>
    %850 = arith.addf %849, %7 : vector<8x32xf32>
    %cst_190 = arith.constant 0.000000e+00 : f32
    %851 = vector.broadcast %cst_190 : f32 to vector<8x32xf32>
    %852 = arith.maximumf %850, %851 : vector<8x32xf32>
    %853 = tpu.concatenate %852, %844 in 1 : vector<8x32xf32>, vector<8x32xf32> -> vector<8x64xf32>
    %854 = arith.truncf %853 : vector<8x64xf32> to vector<8x64xbf16>
    %cst_191 = arith.constant dense<0.000000e+00> : vector<8x128xf32>
    %855 = tpu.matmul %854, %1, %cst_191 {dimension_numbers = #tpu.dot_dimension_numbers<[1], [0], [0], [1], [0, 0, 1, 1], [], []>} : vector<8x64xbf16>, vector<64x128xbf16>, vector<8x128xf32> -> vector<8x128xf32>
    %856 = vector.extract_strided_slice %855 {offsets = [0, 0], sizes = [8, 32], strides = [1, 1]} : vector<8x128xf32> to vector<8x32xf32>
    %cst_192 = arith.constant dense<0.000000e+00> : vector<8xf32>
    %857 = vector.multi_reduction <add>, %856, %cst_192 [1] : vector<8x32xf32> to vector<8xf32>
    %858 = vector.shape_cast %857 : vector<8xf32> to vector<8x1xf32>
    %cst_193 = arith.constant 3.200000e+01 : f32
    %859 = vector.broadcast %cst_193 : f32 to vector<8x1xf32>
    %860 = arith.divf %858, %859 : vector<8x1xf32>
    %861 = vector.broadcast %860 : vector<8x1xf32> to vector<8x32xf32>
    %862 = arith.subf %856, %861 : vector<8x32xf32>
    %863 = arith.mulf %862, %862 : vector<8x32xf32>
    %cst_194 = arith.constant dense<0.000000e+00> : vector<8xf32>
    %864 = vector.multi_reduction <add>, %863, %cst_194 [1] : vector<8x32xf32> to vector<8xf32>
    %865 = vector.shape_cast %864 : vector<8xf32> to vector<8x1xf32>
    %cst_195 = arith.constant 3.200000e+01 : f32
    %866 = vector.broadcast %cst_195 : f32 to vector<8x1xf32>
    %867 = arith.divf %865, %866 : vector<8x1xf32>
    %868 = vector.broadcast %860 : vector<8x1xf32> to vector<8x32xf32>
    %869 = arith.subf %856, %868 : vector<8x32xf32>
    %cst_196 = arith.constant 1.000000e-03 : f32
    %870 = vector.broadcast %cst_196 : f32 to vector<8x1xf32>
    %871 = arith.addf %867, %870 : vector<8x1xf32>
    %872 = math.rsqrt %871 : vector<8x1xf32>
    %873 = vector.broadcast %872 : vector<8x1xf32> to vector<8x32xf32>
    %874 = arith.mulf %869, %873 : vector<8x32xf32>
    %875 = arith.mulf %874, %10 : vector<8x32xf32>
    %876 = arith.addf %875, %13 : vector<8x32xf32>
    %877 = arith.negf %876 : vector<8x32xf32>
    %878 = math.exp %877 : vector<8x32xf32>
    %cst_197 = arith.constant 1.000000e+00 : f32
    %879 = vector.broadcast %cst_197 : f32 to vector<8x32xf32>
    %880 = arith.addf %879, %878 : vector<8x32xf32>
    %881 = arith.divf %879, %880 : vector<8x32xf32>
    %882 = vector.extract_strided_slice %855 {offsets = [0, 32], sizes = [8, 32], strides = [1, 1]} : vector<8x128xf32> to vector<8x32xf32>
    %cst_198 = arith.constant dense<0.000000e+00> : vector<8xf32>
    %883 = vector.multi_reduction <add>, %882, %cst_198 [1] : vector<8x32xf32> to vector<8xf32>
    %884 = vector.shape_cast %883 : vector<8xf32> to vector<8x1xf32>
    %cst_199 = arith.constant 3.200000e+01 : f32
    %885 = vector.broadcast %cst_199 : f32 to vector<8x1xf32>
    %886 = arith.divf %884, %885 : vector<8x1xf32>
    %887 = vector.broadcast %886 : vector<8x1xf32> to vector<8x32xf32>
    %888 = arith.subf %882, %887 : vector<8x32xf32>
    %889 = arith.mulf %888, %888 : vector<8x32xf32>
    %cst_200 = arith.constant dense<0.000000e+00> : vector<8xf32>
    %890 = vector.multi_reduction <add>, %889, %cst_200 [1] : vector<8x32xf32> to vector<8xf32>
    %891 = vector.shape_cast %890 : vector<8xf32> to vector<8x1xf32>
    %cst_201 = arith.constant 3.200000e+01 : f32
    %892 = vector.broadcast %cst_201 : f32 to vector<8x1xf32>
    %893 = arith.divf %891, %892 : vector<8x1xf32>
    %894 = vector.broadcast %886 : vector<8x1xf32> to vector<8x32xf32>
    %895 = arith.subf %882, %894 : vector<8x32xf32>
    %cst_202 = arith.constant 1.000000e-03 : f32
    %896 = vector.broadcast %cst_202 : f32 to vector<8x1xf32>
    %897 = arith.addf %893, %896 : vector<8x1xf32>
    %898 = math.rsqrt %897 : vector<8x1xf32>
    %899 = vector.broadcast %898 : vector<8x1xf32> to vector<8x32xf32>
    %900 = arith.mulf %895, %899 : vector<8x32xf32>
    %901 = arith.mulf %900, %16 : vector<8x32xf32>
    %902 = arith.addf %901, %19 : vector<8x32xf32>
    %903 = arith.negf %902 : vector<8x32xf32>
    %904 = math.exp %903 : vector<8x32xf32>
    %cst_203 = arith.constant 1.000000e+00 : f32
    %905 = vector.broadcast %cst_203 : f32 to vector<8x32xf32>
    %906 = arith.addf %905, %904 : vector<8x32xf32>
    %907 = arith.divf %905, %906 : vector<8x32xf32>
    %908 = vector.extract_strided_slice %855 {offsets = [0, 64], sizes = [8, 32], strides = [1, 1]} : vector<8x128xf32> to vector<8x32xf32>
    %909 = vector.extract_strided_slice %855 {offsets = [0, 96], sizes = [8, 32], strides = [1, 1]} : vector<8x128xf32> to vector<8x32xf32>
    %910 = arith.mulf %881, %909 : vector<8x32xf32>
    %911 = arith.addf %908, %910 : vector<8x32xf32>
    %cst_204 = arith.constant dense<0.000000e+00> : vector<8xf32>
    %912 = vector.multi_reduction <add>, %911, %cst_204 [1] : vector<8x32xf32> to vector<8xf32>
    %913 = vector.shape_cast %912 : vector<8xf32> to vector<8x1xf32>
    %cst_205 = arith.constant 3.200000e+01 : f32
    %914 = vector.broadcast %cst_205 : f32 to vector<8x1xf32>
    %915 = arith.divf %913, %914 : vector<8x1xf32>
    %916 = vector.broadcast %915 : vector<8x1xf32> to vector<8x32xf32>
    %917 = arith.subf %911, %916 : vector<8x32xf32>
    %918 = arith.mulf %917, %917 : vector<8x32xf32>
    %cst_206 = arith.constant dense<0.000000e+00> : vector<8xf32>
    %919 = vector.multi_reduction <add>, %918, %cst_206 [1] : vector<8x32xf32> to vector<8xf32>
    %920 = vector.shape_cast %919 : vector<8xf32> to vector<8x1xf32>
    %cst_207 = arith.constant 3.200000e+01 : f32
    %921 = vector.broadcast %cst_207 : f32 to vector<8x1xf32>
    %922 = arith.divf %920, %921 : vector<8x1xf32>
    %923 = vector.broadcast %915 : vector<8x1xf32> to vector<8x32xf32>
    %924 = arith.subf %911, %923 : vector<8x32xf32>
    %cst_208 = arith.constant 1.000000e-03 : f32
    %925 = vector.broadcast %cst_208 : f32 to vector<8x1xf32>
    %926 = arith.addf %922, %925 : vector<8x1xf32>
    %927 = math.rsqrt %926 : vector<8x1xf32>
    %928 = vector.broadcast %927 : vector<8x1xf32> to vector<8x32xf32>
    %929 = arith.mulf %924, %928 : vector<8x32xf32>
    %930 = arith.mulf %929, %22 : vector<8x32xf32>
    %931 = arith.addf %930, %25 : vector<8x32xf32>
    %932 = math.tanh %931 : vector<8x32xf32>
    %933 = arith.mulf %907, %932 : vector<8x32xf32>
    %cst_209 = arith.constant 1.000000e+00 : f32
    %934 = vector.broadcast %cst_209 : f32 to vector<8x32xf32>
    %935 = arith.subf %934, %907 : vector<8x32xf32>
    %936 = arith.mulf %935, %844 : vector<8x32xf32>
    %937 = arith.addf %933, %936 : vector<8x32xf32>
    %938 = tpu.concatenate %937, %835 in 1 : vector<8x32xf32>, vector<8x32xf32> -> vector<8x64xf32>
    %939 = arith.truncf %938 : vector<8x64xf32> to vector<8x64xbf16>
    %cst_210 = arith.constant dense<0.000000e+00> : vector<8x64xf32>
    %940 = tpu.matmul %939, %2, %cst_210 {dimension_numbers = #tpu.dot_dimension_numbers<[1], [0], [0], [1], [0, 0, 1, 1], [], []>} : vector<8x64xbf16>, vector<64x64xbf16>, vector<8x64xf32> -> vector<8x64xf32>
    %941 = arith.addf %940, %28 : vector<8x64xf32>
    %cst_211 = arith.constant 0.000000e+00 : f32
    %942 = vector.broadcast %cst_211 : f32 to vector<8x64xf32>
    %943 = arith.maximumf %941, %942 : vector<8x64xf32>
    %944 = arith.truncf %943 : vector<8x64xf32> to vector<8x64xbf16>
    %cst_212 = arith.constant dense<0.000000e+00> : vector<8x32xf32>
    %945 = tpu.matmul %944, %3, %cst_212 {dimension_numbers = #tpu.dot_dimension_numbers<[1], [0], [0], [1], [0, 0, 1, 1], [], []>} : vector<8x64xbf16>, vector<64x32xbf16>, vector<8x32xf32> -> vector<8x32xf32>
    %946 = arith.addf %945, %31 : vector<8x32xf32>
    %947 = vector.extract_strided_slice %946 {offsets = [0, 0], sizes = [8, 8], strides = [1, 1]} : vector<8x32xf32> to vector<8x8xf32>
    %948 = vector.extract_strided_slice %946 {offsets = [0, 8], sizes = [8, 8], strides = [1, 1]} : vector<8x32xf32> to vector<8x8xf32>
    %cst_213 = arith.constant 0.000000e+00 : f32
    %949 = vector.broadcast %cst_213 : f32 to vector<8x8xf32>
    %950 = arith.maximumf %948, %949 : vector<8x8xf32>
    %951 = vector.broadcast %cst_213 : f32 to vector<8x8xf32>
    %952 = arith.subf %948, %951 : vector<8x8xf32>
    %953 = arith.cmpf one, %952, %952 : vector<8x8xf32>
    %954 = vector.broadcast %cst_213 : f32 to vector<8x8xf32>
    %955 = arith.addf %948, %954 : vector<8x8xf32>
    %956 = math.absf %952 : vector<8x8xf32>
    %cst_214 = arith.constant 0.000000e+00 : f32
    %957 = vector.broadcast %cst_214 : f32 to vector<8x8xf32>
    %958 = arith.subf %957, %956 : vector<8x8xf32>
    %959 = math.exp %958 : vector<8x8xf32>
    %960 = math.log1p %959 : vector<8x8xf32>
    %961 = arith.addf %950, %960 : vector<8x8xf32>
    %962 = arith.select %953, %955, %961 : vector<8x8xi1>, vector<8x8xf32>
    %cst_215 = arith.constant 1.000000e-01 : f32
    %963 = vector.broadcast %cst_215 : f32 to vector<8x8xf32>
    %964 = arith.addf %962, %963 : vector<8x8xf32>
    %965 = vector.extract_strided_slice %946 {offsets = [0, 16], sizes = [8, 8], strides = [1, 1]} : vector<8x32xf32> to vector<8x8xf32>
    %966 = vector.extract_strided_slice %946 {offsets = [0, 24], sizes = [8, 8], strides = [1, 1]} : vector<8x32xf32> to vector<8x8xf32>
    %cst_216 = arith.constant 0.000000e+00 : f32
    %967 = vector.broadcast %cst_216 : f32 to vector<8x8xf32>
    %968 = arith.maximumf %966, %967 : vector<8x8xf32>
    %969 = vector.broadcast %cst_216 : f32 to vector<8x8xf32>
    %970 = arith.subf %966, %969 : vector<8x8xf32>
    %971 = arith.cmpf one, %970, %970 : vector<8x8xf32>
    %972 = vector.broadcast %cst_216 : f32 to vector<8x8xf32>
    %973 = arith.addf %966, %972 : vector<8x8xf32>
    %974 = math.absf %970 : vector<8x8xf32>
    %cst_217 = arith.constant 0.000000e+00 : f32
    %975 = vector.broadcast %cst_217 : f32 to vector<8x8xf32>
    %976 = arith.subf %975, %974 : vector<8x8xf32>
    %977 = math.exp %976 : vector<8x8xf32>
    %978 = math.log1p %977 : vector<8x8xf32>
    %979 = arith.addf %968, %978 : vector<8x8xf32>
    %980 = arith.select %971, %973, %979 : vector<8x8xi1>, vector<8x8xf32>
    %cst_218 = arith.constant 1.000000e-01 : f32
    %981 = vector.broadcast %cst_218 : f32 to vector<8x8xf32>
    %982 = arith.addf %980, %981 : vector<8x8xf32>
    %983 = arith.mulf %982, %843 : vector<8x8xf32>
    %984 = arith.addf %965, %983 : vector<8x8xf32>
    %985 = tpu.concatenate %937, %947, %964, %965, %982, %984, %32 in 1 : vector<8x32xf32>, vector<8x8xf32>, vector<8x8xf32>, vector<8x8xf32>, vector<8x8xf32>, vector<8x8xf32>, vector<8x56xf32> -> vector<8x128xf32>
    %986 = arith.index_cast %c5_i32 : i32 to index
    %c0_219 = arith.constant 0 : index
    %c0_220 = arith.constant 0 : index
    %987 = vector.load %arg7[%986, %c0_219, %c0_220] : memref<8x8x128xf32, #tpu.memory_space<vmem>>, vector<1x8x128xf32>
    %988 = vector.shape_cast %987 : vector<1x8x128xf32> to vector<8x128xf32>
    %989 = vector.shape_cast %985 : vector<8x128xf32> to vector<1x8x128xf32>
    tpu.vector_store %arg7[%986, %c0_219, %c0_220], %989 {strides = array<i32>} : memref<8x8x128xf32, #tpu.memory_space<vmem>>, vector<1x8x128xf32>,
    %c6_i32 = arith.constant 6 : i32
    %990 = arith.index_cast %c6_i32 : i32 to index
    %c0_221 = arith.constant 0 : index
    %c0_222 = arith.constant 0 : index
    %c0_223 = arith.constant 0 : index
    %991 = vector.load %arg0[%990, %c0_221, %c0_222, %c0_223] : memref<8x4x8x32xf32, #tpu.memory_space<vmem>>, vector<1x4x8x32xf32>
    %992 = vector.shape_cast %991 : vector<1x4x8x32xf32> to vector<4x8x32xf32>
    %993 = vector.extract_strided_slice %992 {offsets = [0, 0, 0], sizes = [1, 8, 32], strides = [1, 1, 1]} : vector<4x8x32xf32> to vector<1x8x32xf32>
    %994 = vector.shape_cast %993 : vector<1x8x32xf32> to vector<8x32xf32>
    %995 = vector.extract_strided_slice %992 {offsets = [1, 0, 0], sizes = [1, 8, 32], strides = [1, 1, 1]} : vector<4x8x32xf32> to vector<1x8x32xf32>
    %996 = vector.shape_cast %995 : vector<1x8x32xf32> to vector<8x32xf32>
    %997 = vector.extract_strided_slice %996 {offsets = [0, 0], sizes = [8, 8], strides = [1, 1]} : vector<8x32xf32> to vector<8x8xf32>
    %998 = vector.extract_strided_slice %992 {offsets = [2, 0, 0], sizes = [1, 8, 32], strides = [1, 1, 1]} : vector<4x8x32xf32> to vector<1x8x32xf32>
    %999 = vector.shape_cast %998 : vector<1x8x32xf32> to vector<8x32xf32>
    %1000 = vector.extract_strided_slice %992 {offsets = [3, 0, 0], sizes = [1, 8, 32], strides = [1, 1, 1]} : vector<4x8x32xf32> to vector<1x8x32xf32>
    %1001 = vector.shape_cast %1000 : vector<1x8x32xf32> to vector<8x32xf32>
    %1002 = vector.extract_strided_slice %1001 {offsets = [0, 0], sizes = [8, 8], strides = [1, 1]} : vector<8x32xf32> to vector<8x8xf32>
    %1003 = arith.mulf %937, %999 : vector<8x32xf32>
    %1004 = vector.extract_strided_slice %999 {offsets = [0, 0], sizes = [8, 8], strides = [1, 1]} : vector<8x32xf32> to vector<8x8xf32>
    %1005 = arith.mulf %984, %1004 : vector<8x8xf32>
    %1006 = tpu.concatenate %1005, %997 in 1 : vector<8x8xf32>, vector<8x8xf32> -> vector<8x16xf32>
    %1007 = arith.truncf %1006 : vector<8x16xf32> to vector<8x16xbf16>
    %cst_224 = arith.constant dense<0.000000e+00> : vector<8x32xf32>
    %1008 = tpu.matmul %1007, %0, %cst_224 {dimension_numbers = #tpu.dot_dimension_numbers<[1], [0], [0], [1], [0, 0, 1, 1], [], []>} : vector<8x16xbf16>, vector<16x32xbf16>, vector<8x32xf32> -> vector<8x32xf32>
    %1009 = arith.addf %1008, %7 : vector<8x32xf32>
    %cst_225 = arith.constant 0.000000e+00 : f32
    %1010 = vector.broadcast %cst_225 : f32 to vector<8x32xf32>
    %1011 = arith.maximumf %1009, %1010 : vector<8x32xf32>
    %1012 = tpu.concatenate %1011, %1003 in 1 : vector<8x32xf32>, vector<8x32xf32> -> vector<8x64xf32>
    %1013 = arith.truncf %1012 : vector<8x64xf32> to vector<8x64xbf16>
    %cst_226 = arith.constant dense<0.000000e+00> : vector<8x128xf32>
    %1014 = tpu.matmul %1013, %1, %cst_226 {dimension_numbers = #tpu.dot_dimension_numbers<[1], [0], [0], [1], [0, 0, 1, 1], [], []>} : vector<8x64xbf16>, vector<64x128xbf16>, vector<8x128xf32> -> vector<8x128xf32>
    %1015 = vector.extract_strided_slice %1014 {offsets = [0, 0], sizes = [8, 32], strides = [1, 1]} : vector<8x128xf32> to vector<8x32xf32>
    %cst_227 = arith.constant dense<0.000000e+00> : vector<8xf32>
    %1016 = vector.multi_reduction <add>, %1015, %cst_227 [1] : vector<8x32xf32> to vector<8xf32>
    %1017 = vector.shape_cast %1016 : vector<8xf32> to vector<8x1xf32>
    %cst_228 = arith.constant 3.200000e+01 : f32
    %1018 = vector.broadcast %cst_228 : f32 to vector<8x1xf32>
    %1019 = arith.divf %1017, %1018 : vector<8x1xf32>
    %1020 = vector.broadcast %1019 : vector<8x1xf32> to vector<8x32xf32>
    %1021 = arith.subf %1015, %1020 : vector<8x32xf32>
    %1022 = arith.mulf %1021, %1021 : vector<8x32xf32>
    %cst_229 = arith.constant dense<0.000000e+00> : vector<8xf32>
    %1023 = vector.multi_reduction <add>, %1022, %cst_229 [1] : vector<8x32xf32> to vector<8xf32>
    %1024 = vector.shape_cast %1023 : vector<8xf32> to vector<8x1xf32>
    %cst_230 = arith.constant 3.200000e+01 : f32
    %1025 = vector.broadcast %cst_230 : f32 to vector<8x1xf32>
    %1026 = arith.divf %1024, %1025 : vector<8x1xf32>
    %1027 = vector.broadcast %1019 : vector<8x1xf32> to vector<8x32xf32>
    %1028 = arith.subf %1015, %1027 : vector<8x32xf32>
    %cst_231 = arith.constant 1.000000e-03 : f32
    %1029 = vector.broadcast %cst_231 : f32 to vector<8x1xf32>
    %1030 = arith.addf %1026, %1029 : vector<8x1xf32>
    %1031 = math.rsqrt %1030 : vector<8x1xf32>
    %1032 = vector.broadcast %1031 : vector<8x1xf32> to vector<8x32xf32>
    %1033 = arith.mulf %1028, %1032 : vector<8x32xf32>
    %1034 = arith.mulf %1033, %10 : vector<8x32xf32>
    %1035 = arith.addf %1034, %13 : vector<8x32xf32>
    %1036 = arith.negf %1035 : vector<8x32xf32>
    %1037 = math.exp %1036 : vector<8x32xf32>
    %cst_232 = arith.constant 1.000000e+00 : f32
    %1038 = vector.broadcast %cst_232 : f32 to vector<8x32xf32>
    %1039 = arith.addf %1038, %1037 : vector<8x32xf32>
    %1040 = arith.divf %1038, %1039 : vector<8x32xf32>
    %1041 = vector.extract_strided_slice %1014 {offsets = [0, 32], sizes = [8, 32], strides = [1, 1]} : vector<8x128xf32> to vector<8x32xf32>
    %cst_233 = arith.constant dense<0.000000e+00> : vector<8xf32>
    %1042 = vector.multi_reduction <add>, %1041, %cst_233 [1] : vector<8x32xf32> to vector<8xf32>
    %1043 = vector.shape_cast %1042 : vector<8xf32> to vector<8x1xf32>
    %cst_234 = arith.constant 3.200000e+01 : f32
    %1044 = vector.broadcast %cst_234 : f32 to vector<8x1xf32>
    %1045 = arith.divf %1043, %1044 : vector<8x1xf32>
    %1046 = vector.broadcast %1045 : vector<8x1xf32> to vector<8x32xf32>
    %1047 = arith.subf %1041, %1046 : vector<8x32xf32>
    %1048 = arith.mulf %1047, %1047 : vector<8x32xf32>
    %cst_235 = arith.constant dense<0.000000e+00> : vector<8xf32>
    %1049 = vector.multi_reduction <add>, %1048, %cst_235 [1] : vector<8x32xf32> to vector<8xf32>
    %1050 = vector.shape_cast %1049 : vector<8xf32> to vector<8x1xf32>
    %cst_236 = arith.constant 3.200000e+01 : f32
    %1051 = vector.broadcast %cst_236 : f32 to vector<8x1xf32>
    %1052 = arith.divf %1050, %1051 : vector<8x1xf32>
    %1053 = vector.broadcast %1045 : vector<8x1xf32> to vector<8x32xf32>
    %1054 = arith.subf %1041, %1053 : vector<8x32xf32>
    %cst_237 = arith.constant 1.000000e-03 : f32
    %1055 = vector.broadcast %cst_237 : f32 to vector<8x1xf32>
    %1056 = arith.addf %1052, %1055 : vector<8x1xf32>
    %1057 = math.rsqrt %1056 : vector<8x1xf32>
    %1058 = vector.broadcast %1057 : vector<8x1xf32> to vector<8x32xf32>
    %1059 = arith.mulf %1054, %1058 : vector<8x32xf32>
    %1060 = arith.mulf %1059, %16 : vector<8x32xf32>
    %1061 = arith.addf %1060, %19 : vector<8x32xf32>
    %1062 = arith.negf %1061 : vector<8x32xf32>
    %1063 = math.exp %1062 : vector<8x32xf32>
    %cst_238 = arith.constant 1.000000e+00 : f32
    %1064 = vector.broadcast %cst_238 : f32 to vector<8x32xf32>
    %1065 = arith.addf %1064, %1063 : vector<8x32xf32>
    %1066 = arith.divf %1064, %1065 : vector<8x32xf32>
    %1067 = vector.extract_strided_slice %1014 {offsets = [0, 64], sizes = [8, 32], strides = [1, 1]} : vector<8x128xf32> to vector<8x32xf32>
    %1068 = vector.extract_strided_slice %1014 {offsets = [0, 96], sizes = [8, 32], strides = [1, 1]} : vector<8x128xf32> to vector<8x32xf32>
    %1069 = arith.mulf %1040, %1068 : vector<8x32xf32>
    %1070 = arith.addf %1067, %1069 : vector<8x32xf32>
    %cst_239 = arith.constant dense<0.000000e+00> : vector<8xf32>
    %1071 = vector.multi_reduction <add>, %1070, %cst_239 [1] : vector<8x32xf32> to vector<8xf32>
    %1072 = vector.shape_cast %1071 : vector<8xf32> to vector<8x1xf32>
    %cst_240 = arith.constant 3.200000e+01 : f32
    %1073 = vector.broadcast %cst_240 : f32 to vector<8x1xf32>
    %1074 = arith.divf %1072, %1073 : vector<8x1xf32>
    %1075 = vector.broadcast %1074 : vector<8x1xf32> to vector<8x32xf32>
    %1076 = arith.subf %1070, %1075 : vector<8x32xf32>
    %1077 = arith.mulf %1076, %1076 : vector<8x32xf32>
    %cst_241 = arith.constant dense<0.000000e+00> : vector<8xf32>
    %1078 = vector.multi_reduction <add>, %1077, %cst_241 [1] : vector<8x32xf32> to vector<8xf32>
    %1079 = vector.shape_cast %1078 : vector<8xf32> to vector<8x1xf32>
    %cst_242 = arith.constant 3.200000e+01 : f32
    %1080 = vector.broadcast %cst_242 : f32 to vector<8x1xf32>
    %1081 = arith.divf %1079, %1080 : vector<8x1xf32>
    %1082 = vector.broadcast %1074 : vector<8x1xf32> to vector<8x32xf32>
    %1083 = arith.subf %1070, %1082 : vector<8x32xf32>
    %cst_243 = arith.constant 1.000000e-03 : f32
    %1084 = vector.broadcast %cst_243 : f32 to vector<8x1xf32>
    %1085 = arith.addf %1081, %1084 : vector<8x1xf32>
    %1086 = math.rsqrt %1085 : vector<8x1xf32>
    %1087 = vector.broadcast %1086 : vector<8x1xf32> to vector<8x32xf32>
    %1088 = arith.mulf %1083, %1087 : vector<8x32xf32>
    %1089 = arith.mulf %1088, %22 : vector<8x32xf32>
    %1090 = arith.addf %1089, %25 : vector<8x32xf32>
    %1091 = math.tanh %1090 : vector<8x32xf32>
    %1092 = arith.mulf %1066, %1091 : vector<8x32xf32>
    %cst_244 = arith.constant 1.000000e+00 : f32
    %1093 = vector.broadcast %cst_244 : f32 to vector<8x32xf32>
    %1094 = arith.subf %1093, %1066 : vector<8x32xf32>
    %1095 = arith.mulf %1094, %1003 : vector<8x32xf32>
    %1096 = arith.addf %1092, %1095 : vector<8x32xf32>
    %1097 = tpu.concatenate %1096, %994 in 1 : vector<8x32xf32>, vector<8x32xf32> -> vector<8x64xf32>
    %1098 = arith.truncf %1097 : vector<8x64xf32> to vector<8x64xbf16>
    %cst_245 = arith.constant dense<0.000000e+00> : vector<8x64xf32>
    %1099 = tpu.matmul %1098, %2, %cst_245 {dimension_numbers = #tpu.dot_dimension_numbers<[1], [0], [0], [1], [0, 0, 1, 1], [], []>} : vector<8x64xbf16>, vector<64x64xbf16>, vector<8x64xf32> -> vector<8x64xf32>
    %1100 = arith.addf %1099, %28 : vector<8x64xf32>
    %cst_246 = arith.constant 0.000000e+00 : f32
    %1101 = vector.broadcast %cst_246 : f32 to vector<8x64xf32>
    %1102 = arith.maximumf %1100, %1101 : vector<8x64xf32>
    %1103 = arith.truncf %1102 : vector<8x64xf32> to vector<8x64xbf16>
    %cst_247 = arith.constant dense<0.000000e+00> : vector<8x32xf32>
    %1104 = tpu.matmul %1103, %3, %cst_247 {dimension_numbers = #tpu.dot_dimension_numbers<[1], [0], [0], [1], [0, 0, 1, 1], [], []>} : vector<8x64xbf16>, vector<64x32xbf16>, vector<8x32xf32> -> vector<8x32xf32>
    %1105 = arith.addf %1104, %31 : vector<8x32xf32>
    %1106 = vector.extract_strided_slice %1105 {offsets = [0, 0], sizes = [8, 8], strides = [1, 1]} : vector<8x32xf32> to vector<8x8xf32>
    %1107 = vector.extract_strided_slice %1105 {offsets = [0, 8], sizes = [8, 8], strides = [1, 1]} : vector<8x32xf32> to vector<8x8xf32>
    %cst_248 = arith.constant 0.000000e+00 : f32
    %1108 = vector.broadcast %cst_248 : f32 to vector<8x8xf32>
    %1109 = arith.maximumf %1107, %1108 : vector<8x8xf32>
    %1110 = vector.broadcast %cst_248 : f32 to vector<8x8xf32>
    %1111 = arith.subf %1107, %1110 : vector<8x8xf32>
    %1112 = arith.cmpf one, %1111, %1111 : vector<8x8xf32>
    %1113 = vector.broadcast %cst_248 : f32 to vector<8x8xf32>
    %1114 = arith.addf %1107, %1113 : vector<8x8xf32>
    %1115 = math.absf %1111 : vector<8x8xf32>
    %cst_249 = arith.constant 0.000000e+00 : f32
    %1116 = vector.broadcast %cst_249 : f32 to vector<8x8xf32>
    %1117 = arith.subf %1116, %1115 : vector<8x8xf32>
    %1118 = math.exp %1117 : vector<8x8xf32>
    %1119 = math.log1p %1118 : vector<8x8xf32>
    %1120 = arith.addf %1109, %1119 : vector<8x8xf32>
    %1121 = arith.select %1112, %1114, %1120 : vector<8x8xi1>, vector<8x8xf32>
    %cst_250 = arith.constant 1.000000e-01 : f32
    %1122 = vector.broadcast %cst_250 : f32 to vector<8x8xf32>
    %1123 = arith.addf %1121, %1122 : vector<8x8xf32>
    %1124 = vector.extract_strided_slice %1105 {offsets = [0, 16], sizes = [8, 8], strides = [1, 1]} : vector<8x32xf32> to vector<8x8xf32>
    %1125 = vector.extract_strided_slice %1105 {offsets = [0, 24], sizes = [8, 8], strides = [1, 1]} : vector<8x32xf32> to vector<8x8xf32>
    %cst_251 = arith.constant 0.000000e+00 : f32
    %1126 = vector.broadcast %cst_251 : f32 to vector<8x8xf32>
    %1127 = arith.maximumf %1125, %1126 : vector<8x8xf32>
    %1128 = vector.broadcast %cst_251 : f32 to vector<8x8xf32>
    %1129 = arith.subf %1125, %1128 : vector<8x8xf32>
    %1130 = arith.cmpf one, %1129, %1129 : vector<8x8xf32>
    %1131 = vector.broadcast %cst_251 : f32 to vector<8x8xf32>
    %1132 = arith.addf %1125, %1131 : vector<8x8xf32>
    %1133 = math.absf %1129 : vector<8x8xf32>
    %cst_252 = arith.constant 0.000000e+00 : f32
    %1134 = vector.broadcast %cst_252 : f32 to vector<8x8xf32>
    %1135 = arith.subf %1134, %1133 : vector<8x8xf32>
    %1136 = math.exp %1135 : vector<8x8xf32>
    %1137 = math.log1p %1136 : vector<8x8xf32>
    %1138 = arith.addf %1127, %1137 : vector<8x8xf32>
    %1139 = arith.select %1130, %1132, %1138 : vector<8x8xi1>, vector<8x8xf32>
    %cst_253 = arith.constant 1.000000e-01 : f32
    %1140 = vector.broadcast %cst_253 : f32 to vector<8x8xf32>
    %1141 = arith.addf %1139, %1140 : vector<8x8xf32>
    %1142 = arith.mulf %1141, %1002 : vector<8x8xf32>
    %1143 = arith.addf %1124, %1142 : vector<8x8xf32>
    %1144 = tpu.concatenate %1096, %1106, %1123, %1124, %1141, %1143, %32 in 1 : vector<8x32xf32>, vector<8x8xf32>, vector<8x8xf32>, vector<8x8xf32>, vector<8x8xf32>, vector<8x8xf32>, vector<8x56xf32> -> vector<8x128xf32>
    %1145 = arith.index_cast %c6_i32 : i32 to index
    %c0_254 = arith.constant 0 : index
    %c0_255 = arith.constant 0 : index
    %1146 = vector.load %arg7[%1145, %c0_254, %c0_255] : memref<8x8x128xf32, #tpu.memory_space<vmem>>, vector<1x8x128xf32>
    %1147 = vector.shape_cast %1146 : vector<1x8x128xf32> to vector<8x128xf32>
    %1148 = vector.shape_cast %1144 : vector<8x128xf32> to vector<1x8x128xf32>
    tpu.vector_store %arg7[%1145, %c0_254, %c0_255], %1148 {strides = array<i32>} : memref<8x8x128xf32, #tpu.memory_space<vmem>>, vector<1x8x128xf32>,
    %c7_i32 = arith.constant 7 : i32
    %1149 = arith.index_cast %c7_i32 : i32 to index
    %c0_256 = arith.constant 0 : index
    %c0_257 = arith.constant 0 : index
    %c0_258 = arith.constant 0 : index
    %1150 = vector.load %arg0[%1149, %c0_256, %c0_257, %c0_258] : memref<8x4x8x32xf32, #tpu.memory_space<vmem>>, vector<1x4x8x32xf32>
    %1151 = vector.shape_cast %1150 : vector<1x4x8x32xf32> to vector<4x8x32xf32>
    %1152 = vector.extract_strided_slice %1151 {offsets = [0, 0, 0], sizes = [1, 8, 32], strides = [1, 1, 1]} : vector<4x8x32xf32> to vector<1x8x32xf32>
    %1153 = vector.shape_cast %1152 : vector<1x8x32xf32> to vector<8x32xf32>
    %1154 = vector.extract_strided_slice %1151 {offsets = [1, 0, 0], sizes = [1, 8, 32], strides = [1, 1, 1]} : vector<4x8x32xf32> to vector<1x8x32xf32>
    %1155 = vector.shape_cast %1154 : vector<1x8x32xf32> to vector<8x32xf32>
    %1156 = vector.extract_strided_slice %1155 {offsets = [0, 0], sizes = [8, 8], strides = [1, 1]} : vector<8x32xf32> to vector<8x8xf32>
    %1157 = vector.extract_strided_slice %1151 {offsets = [2, 0, 0], sizes = [1, 8, 32], strides = [1, 1, 1]} : vector<4x8x32xf32> to vector<1x8x32xf32>
    %1158 = vector.shape_cast %1157 : vector<1x8x32xf32> to vector<8x32xf32>
    %1159 = vector.extract_strided_slice %1151 {offsets = [3, 0, 0], sizes = [1, 8, 32], strides = [1, 1, 1]} : vector<4x8x32xf32> to vector<1x8x32xf32>
    %1160 = vector.shape_cast %1159 : vector<1x8x32xf32> to vector<8x32xf32>
    %1161 = vector.extract_strided_slice %1160 {offsets = [0, 0], sizes = [8, 8], strides = [1, 1]} : vector<8x32xf32> to vector<8x8xf32>
    %1162 = arith.mulf %1096, %1158 : vector<8x32xf32>
    %1163 = vector.extract_strided_slice %1158 {offsets = [0, 0], sizes = [8, 8], strides = [1, 1]} : vector<8x32xf32> to vector<8x8xf32>
    %1164 = arith.mulf %1143, %1163 : vector<8x8xf32>
    %1165 = tpu.concatenate %1164, %1156 in 1 : vector<8x8xf32>, vector<8x8xf32> -> vector<8x16xf32>
    %1166 = arith.truncf %1165 : vector<8x16xf32> to vector<8x16xbf16>
    %cst_259 = arith.constant dense<0.000000e+00> : vector<8x32xf32>
    %1167 = tpu.matmul %1166, %0, %cst_259 {dimension_numbers = #tpu.dot_dimension_numbers<[1], [0], [0], [1], [0, 0, 1, 1], [], []>} : vector<8x16xbf16>, vector<16x32xbf16>, vector<8x32xf32> -> vector<8x32xf32>
    %1168 = arith.addf %1167, %7 : vector<8x32xf32>
    %cst_260 = arith.constant 0.000000e+00 : f32
    %1169 = vector.broadcast %cst_260 : f32 to vector<8x32xf32>
    %1170 = arith.maximumf %1168, %1169 : vector<8x32xf32>
    %1171 = tpu.concatenate %1170, %1162 in 1 : vector<8x32xf32>, vector<8x32xf32> -> vector<8x64xf32>
    %1172 = arith.truncf %1171 : vector<8x64xf32> to vector<8x64xbf16>
    %cst_261 = arith.constant dense<0.000000e+00> : vector<8x128xf32>
    %1173 = tpu.matmul %1172, %1, %cst_261 {dimension_numbers = #tpu.dot_dimension_numbers<[1], [0], [0], [1], [0, 0, 1, 1], [], []>} : vector<8x64xbf16>, vector<64x128xbf16>, vector<8x128xf32> -> vector<8x128xf32>
    %1174 = vector.extract_strided_slice %1173 {offsets = [0, 0], sizes = [8, 32], strides = [1, 1]} : vector<8x128xf32> to vector<8x32xf32>
    %cst_262 = arith.constant dense<0.000000e+00> : vector<8xf32>
    %1175 = vector.multi_reduction <add>, %1174, %cst_262 [1] : vector<8x32xf32> to vector<8xf32>
    %1176 = vector.shape_cast %1175 : vector<8xf32> to vector<8x1xf32>
    %cst_263 = arith.constant 3.200000e+01 : f32
    %1177 = vector.broadcast %cst_263 : f32 to vector<8x1xf32>
    %1178 = arith.divf %1176, %1177 : vector<8x1xf32>
    %1179 = vector.broadcast %1178 : vector<8x1xf32> to vector<8x32xf32>
    %1180 = arith.subf %1174, %1179 : vector<8x32xf32>
    %1181 = arith.mulf %1180, %1180 : vector<8x32xf32>
    %cst_264 = arith.constant dense<0.000000e+00> : vector<8xf32>
    %1182 = vector.multi_reduction <add>, %1181, %cst_264 [1] : vector<8x32xf32> to vector<8xf32>
    %1183 = vector.shape_cast %1182 : vector<8xf32> to vector<8x1xf32>
    %cst_265 = arith.constant 3.200000e+01 : f32
    %1184 = vector.broadcast %cst_265 : f32 to vector<8x1xf32>
    %1185 = arith.divf %1183, %1184 : vector<8x1xf32>
    %1186 = vector.broadcast %1178 : vector<8x1xf32> to vector<8x32xf32>
    %1187 = arith.subf %1174, %1186 : vector<8x32xf32>
    %cst_266 = arith.constant 1.000000e-03 : f32
    %1188 = vector.broadcast %cst_266 : f32 to vector<8x1xf32>
    %1189 = arith.addf %1185, %1188 : vector<8x1xf32>
    %1190 = math.rsqrt %1189 : vector<8x1xf32>
    %1191 = vector.broadcast %1190 : vector<8x1xf32> to vector<8x32xf32>
    %1192 = arith.mulf %1187, %1191 : vector<8x32xf32>
    %1193 = arith.mulf %1192, %10 : vector<8x32xf32>
    %1194 = arith.addf %1193, %13 : vector<8x32xf32>
    %1195 = arith.negf %1194 : vector<8x32xf32>
    %1196 = math.exp %1195 : vector<8x32xf32>
    %cst_267 = arith.constant 1.000000e+00 : f32
    %1197 = vector.broadcast %cst_267 : f32 to vector<8x32xf32>
    %1198 = arith.addf %1197, %1196 : vector<8x32xf32>
    %1199 = arith.divf %1197, %1198 : vector<8x32xf32>
    %1200 = vector.extract_strided_slice %1173 {offsets = [0, 32], sizes = [8, 32], strides = [1, 1]} : vector<8x128xf32> to vector<8x32xf32>
    %cst_268 = arith.constant dense<0.000000e+00> : vector<8xf32>
    %1201 = vector.multi_reduction <add>, %1200, %cst_268 [1] : vector<8x32xf32> to vector<8xf32>
    %1202 = vector.shape_cast %1201 : vector<8xf32> to vector<8x1xf32>
    %cst_269 = arith.constant 3.200000e+01 : f32
    %1203 = vector.broadcast %cst_269 : f32 to vector<8x1xf32>
    %1204 = arith.divf %1202, %1203 : vector<8x1xf32>
    %1205 = vector.broadcast %1204 : vector<8x1xf32> to vector<8x32xf32>
    %1206 = arith.subf %1200, %1205 : vector<8x32xf32>
    %1207 = arith.mulf %1206, %1206 : vector<8x32xf32>
    %cst_270 = arith.constant dense<0.000000e+00> : vector<8xf32>
    %1208 = vector.multi_reduction <add>, %1207, %cst_270 [1] : vector<8x32xf32> to vector<8xf32>
    %1209 = vector.shape_cast %1208 : vector<8xf32> to vector<8x1xf32>
    %cst_271 = arith.constant 3.200000e+01 : f32
    %1210 = vector.broadcast %cst_271 : f32 to vector<8x1xf32>
    %1211 = arith.divf %1209, %1210 : vector<8x1xf32>
    %1212 = vector.broadcast %1204 : vector<8x1xf32> to vector<8x32xf32>
    %1213 = arith.subf %1200, %1212 : vector<8x32xf32>
    %cst_272 = arith.constant 1.000000e-03 : f32
    %1214 = vector.broadcast %cst_272 : f32 to vector<8x1xf32>
    %1215 = arith.addf %1211, %1214 : vector<8x1xf32>
    %1216 = math.rsqrt %1215 : vector<8x1xf32>
    %1217 = vector.broadcast %1216 : vector<8x1xf32> to vector<8x32xf32>
    %1218 = arith.mulf %1213, %1217 : vector<8x32xf32>
    %1219 = arith.mulf %1218, %16 : vector<8x32xf32>
    %1220 = arith.addf %1219, %19 : vector<8x32xf32>
    %1221 = arith.negf %1220 : vector<8x32xf32>
    %1222 = math.exp %1221 : vector<8x32xf32>
    %cst_273 = arith.constant 1.000000e+00 : f32
    %1223 = vector.broadcast %cst_273 : f32 to vector<8x32xf32>
    %1224 = arith.addf %1223, %1222 : vector<8x32xf32>
    %1225 = arith.divf %1223, %1224 : vector<8x32xf32>
    %1226 = vector.extract_strided_slice %1173 {offsets = [0, 64], sizes = [8, 32], strides = [1, 1]} : vector<8x128xf32> to vector<8x32xf32>
    %1227 = vector.extract_strided_slice %1173 {offsets = [0, 96], sizes = [8, 32], strides = [1, 1]} : vector<8x128xf32> to vector<8x32xf32>
    %1228 = arith.mulf %1199, %1227 : vector<8x32xf32>
    %1229 = arith.addf %1226, %1228 : vector<8x32xf32>
    %cst_274 = arith.constant dense<0.000000e+00> : vector<8xf32>
    %1230 = vector.multi_reduction <add>, %1229, %cst_274 [1] : vector<8x32xf32> to vector<8xf32>
    %1231 = vector.shape_cast %1230 : vector<8xf32> to vector<8x1xf32>
    %cst_275 = arith.constant 3.200000e+01 : f32
    %1232 = vector.broadcast %cst_275 : f32 to vector<8x1xf32>
    %1233 = arith.divf %1231, %1232 : vector<8x1xf32>
    %1234 = vector.broadcast %1233 : vector<8x1xf32> to vector<8x32xf32>
    %1235 = arith.subf %1229, %1234 : vector<8x32xf32>
    %1236 = arith.mulf %1235, %1235 : vector<8x32xf32>
    %cst_276 = arith.constant dense<0.000000e+00> : vector<8xf32>
    %1237 = vector.multi_reduction <add>, %1236, %cst_276 [1] : vector<8x32xf32> to vector<8xf32>
    %1238 = vector.shape_cast %1237 : vector<8xf32> to vector<8x1xf32>
    %cst_277 = arith.constant 3.200000e+01 : f32
    %1239 = vector.broadcast %cst_277 : f32 to vector<8x1xf32>
    %1240 = arith.divf %1238, %1239 : vector<8x1xf32>
    %1241 = vector.broadcast %1233 : vector<8x1xf32> to vector<8x32xf32>
    %1242 = arith.subf %1229, %1241 : vector<8x32xf32>
    %cst_278 = arith.constant 1.000000e-03 : f32
    %1243 = vector.broadcast %cst_278 : f32 to vector<8x1xf32>
    %1244 = arith.addf %1240, %1243 : vector<8x1xf32>
    %1245 = math.rsqrt %1244 : vector<8x1xf32>
    %1246 = vector.broadcast %1245 : vector<8x1xf32> to vector<8x32xf32>
    %1247 = arith.mulf %1242, %1246 : vector<8x32xf32>
    %1248 = arith.mulf %1247, %22 : vector<8x32xf32>
    %1249 = arith.addf %1248, %25 : vector<8x32xf32>
    %1250 = math.tanh %1249 : vector<8x32xf32>
    %1251 = arith.mulf %1225, %1250 : vector<8x32xf32>
    %cst_279 = arith.constant 1.000000e+00 : f32
    %1252 = vector.broadcast %cst_279 : f32 to vector<8x32xf32>
    %1253 = arith.subf %1252, %1225 : vector<8x32xf32>
    %1254 = arith.mulf %1253, %1162 : vector<8x32xf32>
    %1255 = arith.addf %1251, %1254 : vector<8x32xf32>
    %1256 = tpu.concatenate %1255, %1153 in 1 : vector<8x32xf32>, vector<8x32xf32> -> vector<8x64xf32>
    %1257 = arith.truncf %1256 : vector<8x64xf32> to vector<8x64xbf16>
    %cst_280 = arith.constant dense<0.000000e+00> : vector<8x64xf32>
    %1258 = tpu.matmul %1257, %2, %cst_280 {dimension_numbers = #tpu.dot_dimension_numbers<[1], [0], [0], [1], [0, 0, 1, 1], [], []>} : vector<8x64xbf16>, vector<64x64xbf16>, vector<8x64xf32> -> vector<8x64xf32>
    %1259 = arith.addf %1258, %28 : vector<8x64xf32>
    %cst_281 = arith.constant 0.000000e+00 : f32
    %1260 = vector.broadcast %cst_281 : f32 to vector<8x64xf32>
    %1261 = arith.maximumf %1259, %1260 : vector<8x64xf32>
    %1262 = arith.truncf %1261 : vector<8x64xf32> to vector<8x64xbf16>
    %cst_282 = arith.constant dense<0.000000e+00> : vector<8x32xf32>
    %1263 = tpu.matmul %1262, %3, %cst_282 {dimension_numbers = #tpu.dot_dimension_numbers<[1], [0], [0], [1], [0, 0, 1, 1], [], []>} : vector<8x64xbf16>, vector<64x32xbf16>, vector<8x32xf32> -> vector<8x32xf32>
    %1264 = arith.addf %1263, %31 : vector<8x32xf32>
    %1265 = vector.extract_strided_slice %1264 {offsets = [0, 0], sizes = [8, 8], strides = [1, 1]} : vector<8x32xf32> to vector<8x8xf32>
    %1266 = vector.extract_strided_slice %1264 {offsets = [0, 8], sizes = [8, 8], strides = [1, 1]} : vector<8x32xf32> to vector<8x8xf32>
    %cst_283 = arith.constant 0.000000e+00 : f32
    %1267 = vector.broadcast %cst_283 : f32 to vector<8x8xf32>
    %1268 = arith.maximumf %1266, %1267 : vector<8x8xf32>
    %1269 = vector.broadcast %cst_283 : f32 to vector<8x8xf32>
    %1270 = arith.subf %1266, %1269 : vector<8x8xf32>
    %1271 = arith.cmpf one, %1270, %1270 : vector<8x8xf32>
    %1272 = vector.broadcast %cst_283 : f32 to vector<8x8xf32>
    %1273 = arith.addf %1266, %1272 : vector<8x8xf32>
    %1274 = math.absf %1270 : vector<8x8xf32>
    %cst_284 = arith.constant 0.000000e+00 : f32
    %1275 = vector.broadcast %cst_284 : f32 to vector<8x8xf32>
    %1276 = arith.subf %1275, %1274 : vector<8x8xf32>
    %1277 = math.exp %1276 : vector<8x8xf32>
    %1278 = math.log1p %1277 : vector<8x8xf32>
    %1279 = arith.addf %1268, %1278 : vector<8x8xf32>
    %1280 = arith.select %1271, %1273, %1279 : vector<8x8xi1>, vector<8x8xf32>
    %cst_285 = arith.constant 1.000000e-01 : f32
    %1281 = vector.broadcast %cst_285 : f32 to vector<8x8xf32>
    %1282 = arith.addf %1280, %1281 : vector<8x8xf32>
    %1283 = vector.extract_strided_slice %1264 {offsets = [0, 16], sizes = [8, 8], strides = [1, 1]} : vector<8x32xf32> to vector<8x8xf32>
    %1284 = vector.extract_strided_slice %1264 {offsets = [0, 24], sizes = [8, 8], strides = [1, 1]} : vector<8x32xf32> to vector<8x8xf32>
    %cst_286 = arith.constant 0.000000e+00 : f32
    %1285 = vector.broadcast %cst_286 : f32 to vector<8x8xf32>
    %1286 = arith.maximumf %1284, %1285 : vector<8x8xf32>
    %1287 = vector.broadcast %cst_286 : f32 to vector<8x8xf32>
    %1288 = arith.subf %1284, %1287 : vector<8x8xf32>
    %1289 = arith.cmpf one, %1288, %1288 : vector<8x8xf32>
    %1290 = vector.broadcast %cst_286 : f32 to vector<8x8xf32>
    %1291 = arith.addf %1284, %1290 : vector<8x8xf32>
    %1292 = math.absf %1288 : vector<8x8xf32>
    %cst_287 = arith.constant 0.000000e+00 : f32
    %1293 = vector.broadcast %cst_287 : f32 to vector<8x8xf32>
    %1294 = arith.subf %1293, %1292 : vector<8x8xf32>
    %1295 = math.exp %1294 : vector<8x8xf32>
    %1296 = math.log1p %1295 : vector<8x8xf32>
    %1297 = arith.addf %1286, %1296 : vector<8x8xf32>
    %1298 = arith.select %1289, %1291, %1297 : vector<8x8xi1>, vector<8x8xf32>
    %cst_288 = arith.constant 1.000000e-01 : f32
    %1299 = vector.broadcast %cst_288 : f32 to vector<8x8xf32>
    %1300 = arith.addf %1298, %1299 : vector<8x8xf32>
    %1301 = arith.mulf %1300, %1161 : vector<8x8xf32>
    %1302 = arith.addf %1283, %1301 : vector<8x8xf32>
    %1303 = tpu.concatenate %1255, %1265, %1282, %1283, %1300, %1302, %32 in 1 : vector<8x32xf32>, vector<8x8xf32>, vector<8x8xf32>, vector<8x8xf32>, vector<8x8xf32>, vector<8x8xf32>, vector<8x56xf32> -> vector<8x128xf32>
    %1304 = arith.index_cast %c7_i32 : i32 to index
    %c0_289 = arith.constant 0 : index
    %c0_290 = arith.constant 0 : index
    %1305 = vector.load %arg7[%1304, %c0_289, %c0_290] : memref<8x8x128xf32, #tpu.memory_space<vmem>>, vector<1x8x128xf32>
    %1306 = vector.shape_cast %1305 : vector<1x8x128xf32> to vector<8x128xf32>
    %1307 = vector.shape_cast %1303 : vector<8x128xf32> to vector<1x8x128xf32>
    tpu.vector_store %arg7[%1304, %c0_289, %c0_290], %1307 {strides = array<i32>} : memref<8x8x128xf32, #tpu.memory_space<vmem>>, vector<1x8x128xf32>,
    %c8_i32 = arith.constant 8 : i32
    return
  }
}

</mosaic_0001>

<llo_original>
// kernel: rssm_sequence_forward.1
$region0: #{rssm_sequence_forward.1}
  #allocation0 [shape = 'u32[]', space=smem, size = 0x4, offset = 0x4, fixed_abs, tag = 'smem constant byte address 0x4 - core index']
  #allocation1 [shape = 'u32[144,128]{1,0:T(1,128)}', space=vmem, size = 0x12000, scoped, tag = 'internal scratch']
  %s0 = inlined_call_operand.hbm [shape: f32[8,4,8,32], index: 0, kind: input, shape index: {}]
  %s1 = inlined_call_operand.vmem [shape: f32[8,40], index: 1, kind: input, shape index: {}]
  %s2 = inlined_call_operand.hbm [shape: bf16[16,32], index: 2, kind: input, shape index: {}]
  %s3 = inlined_call_operand.vmem [shape: bf16[64,128], index: 3, kind: input, shape index: {}]
  %s4 = inlined_call_operand.hbm [shape: bf16[64,64], index: 4, kind: input, shape index: {}]
  %s5 = inlined_call_operand.vmem [shape: bf16[64,32], index: 5, kind: input, shape index: {}]
  %s6 = inlined_call_operand.vmem [shape: f32[16,128], index: 6, kind: input, shape index: {}]
  %s7 = inlined_call_operand.vmem [shape: f32[8,8,128], index: 7, kind: output, shape index: {}]
  %s8 = sld [smem:[#allocation0]]
  $region50: #{rssm_sequence_forward.1} parent=0
    _
  %s10 = ssub.s32 1, %s8
  %s11 = scalar_select 0, %s10, %s8
  $region1: #{rssm_sequence_forward.1} parent=0
    #allocation2 [shape = 'u8[131072]{0}', space=vmem, size = 0x20000, scoped, tag = 'input window, operand 0, single buffered']
    #allocation3 [shape = 's32[1]{0}', space=sflag, size = 0x4, scoped, tag = 'scoped memory for rssm_sequence_forward.1']
    #allocation4 [shape = 'u8[4096]{0}', space=vmem, size = 0x1000, scoped, tag = 'input window, operand 2, single buffered']
    #allocation5 [shape = 's32[1]{0}', space=sflag, size = 0x4, scoped, tag = 'scoped memory for rssm_sequence_forward.1']
    #allocation6 [shape = 'u8[16384]{0}', space=vmem, size = 0x4000, scoped, tag = 'input window, operand 4, single buffered']
    %12 = vsyncpa [#allocation3], 0
    %13 = vsyncpa [#allocation5], 0
    // Predicated region
    $region2: #{rssm_sequence_forward.1} parent=1 // pred_check
      _
    $region3: #{rssm_sequence_forward.1} parent=1 // pred_check_branch
      %15 = sbr.rel (0) target = $region5
    $region4: #{rssm_sequence_forward.1} parent=1 // pred_region
      %s17 = ssub.s32 4096, 4096
      %18 = vsyncadd [#allocation3], %s17
      %s19 = sshll.u32 [#allocation2], 4
      %s20 = int_to_ptr.vmem [resolvable:$true] %s19
      %25 = dma.hbm_to_vmem [thread:$0]  %s0, 4096, %s20, [#allocation3], 128, 128, 8
    $region5: #{rssm_sequence_forward.1} parent=1 // pred_fallthru
      _
    // Predicated region
    $region6: #{rssm_sequence_forward.1} parent=1 // pred_check
      _
    $region7: #{rssm_sequence_forward.1} parent=1 // pred_check_branch
      %27 = sbr.rel (0) target = $region9
    $region8: #{rssm_sequence_forward.1} parent=1 // pred_region
      _
    $region9: #{rssm_sequence_forward.1} parent=1 // pred_fallthru
      _
    // Predicated region
    $region10: #{rssm_sequence_forward.1} parent=1 // pred_check
      _
    $region11: #{rssm_sequence_forward.1} parent=1 // pred_check_branch
      %29 = sbr.rel (0) target = $region13
    $region12: #{rssm_sequence_forward.1} parent=1 // pred_region
      %s31 = ssub.s32 128, 128
      %32 = vsyncadd [#allocation5], %s31
      %s33 = sshll.u32 [#allocation4], 4
      %s34 = int_to_ptr.vmem [resolvable:$true] %s33
      %39 = dma.hbm_to_vmem [thread:$0]  %s2, 128, %s34, [#allocation5], 64, 64, 4
    $region13: #{rssm_sequence_forward.1} parent=1 // pred_fallthru
      _
    // Predicated region
    $region14: #{rssm_sequence_forward.1} parent=1 // pred_check
      _
    $region15: #{rssm_sequence_forward.1} parent=1 // pred_check_branch
      %41 = sbr.rel (0) target = $region17
    $region16: #{rssm_sequence_forward.1} parent=1 // pred_region
      _
    $region17: #{rssm_sequence_forward.1} parent=1 // pred_fallthru
      _
    // Predicated region
    $region18: #{rssm_sequence_forward.1} parent=1 // pred_check
      _
    $region19: #{rssm_sequence_forward.1} parent=1 // pred_check_branch
      %43 = sbr.rel (0) target = $region21
    $region20: #{rssm_sequence_forward.1} parent=1 // pred_region
      %s45 = ssub.s32 512, 512
      %46 = vsyncadd [#allocation5], %s45
      %s47 = sshll.u32 [#allocation6], 4
      %s48 = int_to_ptr.vmem [resolvable:$true] %s47
      %53 = dma.hbm_to_vmem [thread:$0]  %s4, 512, %s48, [#allocation5], 64, 64, 4
    $region21: #{rssm_sequence_forward.1} parent=1 // pred_fallthru
      _
    // Predicated region
    $region22: #{rssm_sequence_forward.1} parent=1 // pred_check
      _
    $region23: #{rssm_sequence_forward.1} parent=1 // pred_check_branch
      %55 = sbr.rel (0) target = $region25
    $region24: #{rssm_sequence_forward.1} parent=1 // pred_region
      _
    $region25: #{rssm_sequence_forward.1} parent=1 // pred_fallthru
      _
    // Predicated region
    $region26: #{rssm_sequence_forward.1} parent=1 // pred_check
      _
    $region27: #{rssm_sequence_forward.1} parent=1 // pred_check_branch
      %57 = sbr.rel (0) target = $region29
    $region28: #{rssm_sequence_forward.1} parent=1 // pred_region
      _
    $region29: #{rssm_sequence_forward.1} parent=1 // pred_fallthru
      _
    // Predicated region
    $region30: #{rssm_sequence_forward.1} parent=1 // pred_check
      _
    $region31: #{rssm_sequence_forward.1} parent=1 // pred_check_branch
      %59 = sbr.rel (0) target = $region33
    $region32: #{rssm_sequence_forward.1} parent=1 // pred_region
      %60 = dma.done [#allocation3], 4096
    $region33: #{rssm_sequence_forward.1} parent=1 // pred_fallthru
      _
    // Predicated region
    $region34: #{rssm_sequence_forward.1} parent=1 // pred_check
      _
    $region35: #{rssm_sequence_forward.1} parent=1 // pred_check_branch
      %62 = sbr.rel (0) target = $region37
    $region36: #{rssm_sequence_forward.1} parent=1 // pred_region
      %63 = dma.done [#allocation5], 128
    $region37: #{rssm_sequence_forward.1} parent=1 // pred_fallthru
      _
    // Predicated region
    $region38: #{rssm_sequence_forward.1} parent=1 // pred_check
      _
    $region39: #{rssm_sequence_forward.1} parent=1 // pred_check_branch
      %65 = sbr.rel (0) target = $region41
    $region40: #{rssm_sequence_forward.1} parent=1 // pred_region
      %66 = dma.done [#allocation5], 512
    $region41: #{rssm_sequence_forward.1} parent=1 // pred_fallthru
      _
    %v68 = vld [vmem:[#allocation4] sm:$0xf]
    %v69 = vld [vmem:[#allocation4 + $0x4] sm:$0xf]
    %v70 = vld [vmem:[%s3] sm:$0xf]
    %v71 = vld [vmem:[%s3 + $0x4] sm:$0xf]
    %v72 = vld [vmem:[%s3 + $0x8] sm:$0xf]
    %v73 = vld [vmem:[%s3 + $0xc] sm:$0xf]
    %v74 = vld [vmem:[%s3 + $0x10] sm:$0xf]
    %v75 = vld [vmem:[%s3 + $0x14] sm:$0xf]
    %v76 = vld [vmem:[%s3 + $0x18] sm:$0xf]
    %v77 = vld [vmem:[%s3 + $0x1c] sm:$0xf]
    %v78 = vld [vmem:[#allocation6] sm:$0xf]
    %v79 = vld [vmem:[#allocation6 + $0x4] sm:$0xf]
    %v80 = vld [vmem:[#allocation6 + $0x8] sm:$0xf]
    %v81 = vld [vmem:[#allocation6 + $0xc] sm:$0xf]
    %v82 = vld [vmem:[#allocation6 + $0x10] sm:$0xf]
    %v83 = vld [vmem:[#allocation6 + $0x14] sm:$0xf]
    %v84 = vld [vmem:[#allocation6 + $0x18] sm:$0xf]
    %v85 = vld [vmem:[#allocation6 + $0x1c] sm:$0xf]
    %v86 = vld [vmem:[%s5] sm:$0xf]
    %v87 = vld [vmem:[%s5 + $0x4] sm:$0xf]
    %v88 = vld [vmem:[%s5 + $0x8] sm:$0xf]
    %v89 = vld [vmem:[%s5 + $0xc] sm:$0xf]
    %v90 = vld [vmem:[%s5 + $0x10] sm:$0xf]
    %v91 = vld [vmem:[%s5 + $0x14] sm:$0xf]
    %v92 = vld [vmem:[%s5 + $0x18] sm:$0xf]
    %v93 = vld [vmem:[%s5 + $0x1c] sm:$0xf]
    %v94 = vld [vmem:[%s6] sm:$0xff]
    %v95 = vld [vmem:[%s6 + $0x8] sm:$0xff]
    %v96 = vlaneseq
    %v97 = vshrl.u32 %v96, 7
    %v98 = vsub.s32 0, %v97
    %v99 = vrot.slane %v94, %v98
    %v100 = vlaneseq
    %v101 = vshrl.u32 %v100, 7
    %v102 = vsub.s32 1, %v101
    %v103 = vrot.slane %v94, %v102
    %v104 = vlaneseq
    %v105 = vshrl.u32 %v104, 7
    %v106 = vsub.s32 2, %v105
    %v107 = vrot.slane %v94, %v106
    %v108 = vlaneseq
    %v109 = vshrl.u32 %v108, 7
    %v110 = vsub.s32 3, %v109
    %v111 = vrot.slane %v94, %v110
    %v112 = vlaneseq
    %v113 = vshrl.u32 %v112, 7
    %v114 = vsub.s32 4, %v113
    %v115 = vrot.slane %v94, %v114
    %v116 = vlaneseq
    %v117 = vshrl.u32 %v116, 7
    %v118 = vsub.s32 5, %v117
    %v119 = vrot.slane %v94, %v118
    %v120 = vlaneseq
    %v121 = vshrl.u32 %v120, 7
    %v122 = vsub.s32 6, %v121
    %v123 = vrot.slane %v94, %v122
    %v124 = vlaneseq
    %v125 = vshrl.u32 %v124, 7
    %v126 = vsub.s32 7, %v125
    %v127 = vrot.slane %v94, %v126
    %v128 = vlaneseq
    %v129 = vshrl.u32 %v128, 7
    %v130 = vsub.s32 0, %v129
    %v131 = vrot.slane %v95, %v130
    %v132 = vld [vmem:[%s1] sm:$0xff]
    %v133 = vld [vmem:[#allocation2] sm:$0xff]
    %v134 = vld [vmem:[#allocation2 + $0x8] sm:$0xff]
    %v135 = vld [vmem:[#allocation2 + $0x10] sm:$0xff]
    %v136 = vld [vmem:[#allocation2 + $0x18] sm:$0xff]
    %v137 = vmul.f32 %v132, %v135
    %139 = vrot.lane.b32.xlu0 %v135, 32
    %v140 = vpop.permute.xlu0 %139
    %v142 = vmul.f32 %v132, %v140
    %144 = vrot.lane.b32.xlu0 %v142, 96
    %v145 = vpop.permute.xlu0 %144
    %148 = vrot.lane.b32.xlu0 %v134, 8
    %v149 = vpop.permute.xlu0 %148
    %vm151 = vcmask 64512
    %v152 = vsel %vm151, %v145, %v149
    %v153 = vpack.c.bf16 %v152, %v152
    %v156 = vunpack.c.l.b16 %v68
    %v157 = vunpack.c.l.b16 %v69
    %v158 = vpack.c.b16 %v157, %v156
    %vm160 = vcmask 130048
    %v162 = vsel %vm160, %v153, 0
    %164 = vmatprep.subr.bf16.mxu0 0
    %165 = vmatpush1.bf16.msra.mxu0 %v158
    %166 = vmatprep.subr.bf16.mxu0 0
    %167 = vmatpush1.bf16.msra.mxu0 0
    %168 = vmatprep.subr.bf16.mxu0 0
    %169 = vmatpush1.bf16.msra.mxu0 0
    %170 = vmatprep.subr.bf16.mxu0 0
    %171 = vmatpush1.bf16.msra.mxu0 0
    %172 = vmatprep.subr.bf16.mxu0 0
    %173 = vmatpush1.bf16.msra.mxu0 0
    %174 = vmatprep.subr.bf16.mxu0 0
    %175 = vmatpush1.bf16.msra.mxu0 0
    %176 = vmatprep.subr.bf16.mxu0 0
    %177 = vmatpush1.bf16.msra.mxu0 0
    %178 = vmatprep.subr.bf16.mxu0 0
    %179 = vmatpush1.bf16.msra.mxu0 0
    %180 = vmatprep.subr.bf16.mxu0 0
    %181 = vmatpush1.bf16.msra.mxu0 0
    %182 = vmatprep.subr.bf16.mxu0 0
    %183 = vmatpush1.bf16.msra.mxu0 0
    %184 = vmatprep.subr.bf16.mxu0 0
    %185 = vmatpush1.bf16.msra.mxu0 0
    %186 = vmatprep.subr.bf16.mxu0 0
    %187 = vmatpush1.bf16.msra.mxu0 0
    %188 = vmatprep.subr.bf16.mxu0 0
    %189 = vmatpush1.bf16.msra.mxu0 0
    %190 = vmatprep.subr.bf16.mxu0 0
    %191 = vmatpush1.bf16.msra.mxu0 0
    %192 = vmatprep.subr.bf16.mxu0 0
    %193 = vmatpush1.bf16.msra.mxu0 0
    %194 = vmatprep.subr.bf16.mxu0 0
    %195 = vmatpush1.bf16.msra.mxu0 0
    %196 = vmatprep.mubr.bf16.mxu0 0
    %197 = vmatmul.mubr.bf16.gmra.mrb[0].mxu0 %v162
    %v198 = vpop.f32.mrb[0].mxu0
    %v199 = vadd.f32 %v99, %v198
    %v200 = vpop.f32.mrb[0].mxu0
    %v201 = vpop.f32.mrb[0].mxu0
    %v202 = vpop.f32.mrb[0].mxu0
    %203 = vdwg.mxu0
    %v204 = vmax.f32 %v199, 0.0
    %206 = vrot.lane.b32.xlu0 %v137, 32
    %v207 = vpop.permute.xlu0 %206
    %vm209 = vcmask 261120
    %v210 = vsel %vm209, %v204, %v207
    %v211 = vpack.c.bf16 %v210, %v210
    %v220 = vunpack.c.l.b16 %v70
    %v221 = vunpack.c.l.b16 %v71
    %v222 = vunpack.c.l.b16 %v72
    %v223 = vunpack.c.l.b16 %v73
    %v224 = vunpack.c.l.b16 %v74
    %v225 = vunpack.c.l.b16 %v75
    %v226 = vunpack.c.l.b16 %v76
    %v227 = vunpack.c.l.b16 %v77
    %v228 = vpack.c.b16 %v221, %v220
    %v229 = vpack.c.b16 %v223, %v222
    %v230 = vpack.c.b16 %v225, %v224
    %v231 = vpack.c.b16 %v227, %v226
    %vm236 = vcmask 523264
    %v238 = vsel %vm236, %v211, 0
    %240 = vmatprep.subr.bf16.mxu0 0
    %241 = vmatpush1.bf16.msra.mxu0 %v228
    %242 = vmatprep.subr.bf16.mxu0 0
    %243 = vmatpush1.bf16.msra.mxu0 %v229
    %244 = vmatprep.subr.bf16.mxu0 0
    %245 = vmatpush1.bf16.msra.mxu0 %v230
    %246 = vmatprep.subr.bf16.mxu0 0
    %247 = vmatpush1.bf16.msra.mxu0 %v231
    %248 = vmatprep.subr.bf16.mxu0 0
    %249 = vmatpush1.bf16.msra.mxu0 0
    %250 = vmatprep.subr.bf16.mxu0 0
    %251 = vmatpush1.bf16.msra.mxu0 0
    %252 = vmatprep.subr.bf16.mxu0 0
    %253 = vmatpush1.bf16.msra.mxu0 0
    %254 = vmatprep.subr.bf16.mxu0 0
    %255 = vmatpush1.bf16.msra.mxu0 0
    %256 = vmatprep.subr.bf16.mxu0 0
    %257 = vmatpush1.bf16.msra.mxu0 0
    %258 = vmatprep.subr.bf16.mxu0 0
    %259 = vmatpush1.bf16.msra.mxu0 0
    %260 = vmatprep.subr.bf16.mxu0 0
    %261 = vmatpush1.bf16.msra.mxu0 0
    %262 = vmatprep.subr.bf16.mxu0 0
    %263 = vmatpush1.bf16.msra.mxu0 0
    %264 = vmatprep.subr.bf16.mxu0 0
    %265 = vmatpush1.bf16.msra.mxu0 0
    %266 = vmatprep.subr.bf16.mxu0 0
    %267 = vmatpush1.bf16.msra.mxu0 0
    %268 = vmatprep.subr.bf16.mxu0 0
    %269 = vmatpush1.bf16.msra.mxu0 0
    %270 = vmatprep.subr.bf16.mxu0 0
    %271 = vmatpush1.bf16.msra.mxu0 0
    %272 = vmatprep.mubr.bf16.mxu0 0
    %273 = vmatmul.mubr.bf16.gmra.mrb[0].mxu0 %v238
    %v274 = vpop.f32.mrb[0].mxu0
    %v275 = vadd.f32 0.0, %v274
    %v276 = vpop.f32.mrb[0].mxu0
    %v277 = vpop.f32.mrb[0].mxu0
    %v278 = vpop.f32.mrb[0].mxu0
    %279 = vdwg.mxu0
    %v280 = vsel %vm209, %v275, 0.0
    %281 = vadd.xlane.f32.xlu0 %v280
    %v282 = vpop.xlane.xlu0 %281
    %v283 = vrcp.pop 32.0
    %v284 = vmul.f32 %v282, %v283
    %v285 = vsub.f32 %v275, %v284
    %v286 = vmul.f32 %v285, %v285
    %v287 = vsel %vm209, %v286, 0.0
    %288 = vadd.xlane.f32.xlu0 %v287
    %v289 = vpop.xlane.xlu0 %288
    %v290 = vmul.f32 %v289, %v283
    %v291 = vadd.f32 %v290, 0.001
    %v292 = vrsqrt.pop %v291
    %v293 = vmul.f32 %v285, %v292
    %v294 = vmul.f32 %v293, %v103
    %v295 = vadd.f32 %v294, %v107
    %v296 = vxor.u32 %v295, 2147483648
    %v297 = vmul.f32 %v296, 1.442695
    %v298 = vpow.pop %v297
    %v299 = vadd.f32 %v298, 1.0
    %v300 = vrcp.pop %v299
    %v301 = vmul.f32 1.0, %v300
    %303 = vrot.lane.b32.xlu0 %v275, 96
    %v304 = vpop.permute.xlu0 %303
    %v306 = vsel %vm209, %v304, 0.0
    %307 = vadd.xlane.f32.xlu0 %v306
    %v308 = vpop.xlane.xlu0 %307
    %v309 = vmul.f32 %v308, %v283
    %v310 = vsub.f32 %v275, %v309
    %v311 = vmul.f32 %v310, %v310
    %313 = vrot.lane.b32.xlu0 %v311, 96
    %v314 = vpop.permute.xlu0 %313
    %v316 = vsel %vm209, %v314, 0.0
    %317 = vadd.xlane.f32.xlu0 %v316
    %v318 = vpop.xlane.xlu0 %317
    %v319 = vmul.f32 %v318, %v283
    %v320 = vadd.f32 %v319, 0.001
    %v321 = vrsqrt.pop %v320
    %v322 = vmul.f32 %v310, %v321
    %324 = vrot.lane.b32.xlu0 %v111, 32
    %v325 = vpop.permute.xlu0 %324
    %v327 = vmul.f32 %v322, %v325
    %329 = vrot.lane.b32.xlu0 %v115, 32
    %v330 = vpop.permute.xlu0 %329
    %v332 = vadd.f32 %v327, %v330
    %v333 = vxor.u32 %v332, 2147483648
    %v334 = vmul.f32 %v333, 1.442695
    %v335 = vpow.pop %v334
    %v336 = vadd.f32 %v335, 1.0
    %v337 = vrcp.pop %v336
    %v338 = vmul.f32 1.0, %v337
    %339 = vrot.lane.b32.xlu0 %v275, 32
    %v340 = vpop.permute.xlu0 %339
    %v342 = vmul.f32 %v301, %v340
    %344 = vrot.lane.b32.xlu0 %v342, 64
    %v345 = vpop.permute.xlu0 %344
    %v347 = vadd.f32 %v275, %v345
    %349 = vrot.lane.b32.xlu0 %v347, 64
    %v350 = vpop.permute.xlu0 %349
    %v352 = vsel %vm209, %v350, 0.0
    %353 = vadd.xlane.f32.xlu0 %v352
    %v354 = vpop.xlane.xlu0 %353
    %v355 = vmul.f32 %v354, %v283
    %v356 = vsub.f32 %v347, %v355
    %v357 = vmul.f32 %v356, %v356
    %359 = vrot.lane.b32.xlu0 %v357, 64
    %v360 = vpop.permute.xlu0 %359
    %v362 = vsel %vm209, %v360, 0.0
    %363 = vadd.xlane.f32.xlu0 %v362
    %v364 = vpop.xlane.xlu0 %363
    %v365 = vmul.f32 %v364, %v283
    %v366 = vadd.f32 %v365, 0.001
    %v367 = vrsqrt.pop %v366
    %v368 = vmul.f32 %v356, %v367
    %370 = vrot.lane.b32.xlu0 %v119, 64
    %v371 = vpop.permute.xlu0 %370
    %v373 = vmul.f32 %v368, %v371
    %375 = vrot.lane.b32.xlu0 %v123, 64
    %v376 = vpop.permute.xlu0 %375
    %v378 = vadd.f32 %v373, %v376
    %v379 = vtanh.pop %v378
    %381 = vrot.lane.b32.xlu0 %v379, 96
    %v382 = vpop.permute.xlu0 %381
    %v384 = vmul.f32 %v338, %v382
    %v385 = vsub.f32 1.0, %v338
    %v386 = vmul.f32 %v385, %v207
    %v387 = vadd.f32 %v384, %v386
    %389 = vrot.lane.b32.xlu0 %v387, 96
    %v390 = vpop.permute.xlu0 %389
    %393 = vrot.lane.b32.xlu0 %v133, 32
    %v394 = vpop.permute.xlu0 %393
    %v396 = vsel %vm209, %v390, %v394
    %v397 = vpack.c.bf16 %v396, %v396
    %v406 = vunpack.c.l.b16 %v78
    %v407 = vunpack.c.l.b16 %v79
    %v408 = vunpack.c.l.b16 %v80
    %v409 = vunpack.c.l.b16 %v81
    %v410 = vunpack.c.l.b16 %v82
    %v411 = vunpack.c.l.b16 %v83
    %v412 = vunpack.c.l.b16 %v84
    %v413 = vunpack.c.l.b16 %v85
    %v414 = vpack.c.b16 %v407, %v406
    %v415 = vpack.c.b16 %v409, %v408
    %v416 = vpack.c.b16 %v411, %v410
    %v417 = vpack.c.b16 %v413, %v412
    %v423 = vsel %vm236, %v397, 0
    %425 = vmatprep.subr.bf16.mxu0 0
    %426 = vmatpush1.bf16.msra.mxu0 %v414
    %427 = vmatprep.subr.bf16.mxu0 0
    %428 = vmatpush1.bf16.msra.mxu0 %v415
    %429 = vmatprep.subr.bf16.mxu0 0
    %430 = vmatpush1.bf16.msra.mxu0 %v416
    %431 = vmatprep.subr.bf16.mxu0 0
    %432 = vmatpush1.bf16.msra.mxu0 %v417
    %433 = vmatprep.subr.bf16.mxu0 0
    %434 = vmatpush1.bf16.msra.mxu0 0
    %435 = vmatprep.subr.bf16.mxu0 0
    %436 = vmatpush1.bf16.msra.mxu0 0
    %437 = vmatprep.subr.bf16.mxu0 0
    %438 = vmatpush1.bf16.msra.mxu0 0
    %439 = vmatprep.subr.bf16.mxu0 0
    %440 = vmatpush1.bf16.msra.mxu0 0
    %441 = vmatprep.subr.bf16.mxu0 0
    %442 = vmatpush1.bf16.msra.mxu0 0
    %443 = vmatprep.subr.bf16.mxu0 0
    %444 = vmatpush1.bf16.msra.mxu0 0
    %445 = vmatprep.subr.bf16.mxu0 0
    %446 = vmatpush1.bf16.msra.mxu0 0
    %447 = vmatprep.subr.bf16.mxu0 0
    %448 = vmatpush1.bf16.msra.mxu0 0
    %449 = vmatprep.subr.bf16.mxu0 0
    %450 = vmatpush1.bf16.msra.mxu0 0
    %451 = vmatprep.subr.bf16.mxu0 0
    %452 = vmatpush1.bf16.msra.mxu0 0
    %453 = vmatprep.subr.bf16.mxu0 0
    %454 = vmatpush1.bf16.msra.mxu0 0
    %455 = vmatprep.subr.bf16.mxu0 0
    %456 = vmatpush1.bf16.msra.mxu0 0
    %457 = vmatprep.mubr.bf16.mxu0 0
    %458 = vmatmul.mubr.bf16.gmra.mrb[0].mxu0 %v423
    %v459 = vpop.f32.mrb[0].mxu0
    %v460 = vadd.f32 %v127, %v459
    %v461 = vpop.f32.mrb[0].mxu0
    %v462 = vpop.f32.mrb[0].mxu0
    %v463 = vpop.f32.mrb[0].mxu0
    %464 = vdwg.mxu0
    %v465 = vmax.f32 %v460, 0.0
    %v466 = vpack.c.bf16 %v465, %v465
    %v475 = vunpack.c.l.b16 %v86
    %v476 = vunpack.c.l.b16 %v87
    %v477 = vunpack.c.l.b16 %v88
    %v478 = vunpack.c.l.b16 %v89
    %v479 = vunpack.c.l.b16 %v90
    %v480 = vunpack.c.l.b16 %v91
    %v481 = vunpack.c.l.b16 %v92
    %v482 = vunpack.c.l.b16 %v93
    %v483 = vpack.c.b16 %v476, %v475
    %v484 = vpack.c.b16 %v478, %v477
    %v485 = vpack.c.b16 %v480, %v479
    %v486 = vpack.c.b16 %v482, %v481
    %v492 = vsel %vm236, %v466, 0
    %494 = vmatprep.subr.bf16.mxu0 0
    %495 = vmatpush1.bf16.msra.mxu0 %v483
    %496 = vmatprep.subr.bf16.mxu0 0
    %497 = vmatpush1.bf16.msra.mxu0 %v484
    %498 = vmatprep.subr.bf16.mxu0 0
    %499 = vmatpush1.bf16.msra.mxu0 %v485
    %500 = vmatprep.subr.bf16.mxu0 0
    %501 = vmatpush1.bf16.msra.mxu0 %v486
    %502 = vmatprep.subr.bf16.mxu0 0
    %503 = vmatpush1.bf16.msra.mxu0 0
    %504 = vmatprep.subr.bf16.mxu0 0
    %505 = vmatpush1.bf16.msra.mxu0 0
    %506 = vmatprep.subr.bf16.mxu0 0
    %507 = vmatpush1.bf16.msra.mxu0 0
    %508 = vmatprep.subr.bf16.mxu0 0
    %509 = vmatpush1.bf16.msra.mxu0 0
    %510 = vmatprep.subr.bf16.mxu0 0
    %511 = vmatpush1.bf16.msra.mxu0 0
    %512 = vmatprep.subr.bf16.mxu0 0
    %513 = vmatpush1.bf16.msra.mxu0 0
    %514 = vmatprep.subr.bf16.mxu0 0
    %515 = vmatpush1.bf16.msra.mxu0 0
    %516 = vmatprep.subr.bf16.mxu0 0
    %517 = vmatpush1.bf16.msra.mxu0 0
    %518 = vmatprep.subr.bf16.mxu0 0
    %519 = vmatpush1.bf16.msra.mxu0 0
    %520 = vmatprep.subr.bf16.mxu0 0
    %521 = vmatpush1.bf16.msra.mxu0 0
    %522 = vmatprep.subr.bf16.mxu0 0
    %523 = vmatpush1.bf16.msra.mxu0 0
    %524 = vmatprep.subr.bf16.mxu0 0
    %525 = vmatpush1.bf16.msra.mxu0 0
    %526 = vmatprep.mubr.bf16.mxu0 0
    %527 = vmatmul.mubr.bf16.gmra.mrb[0].mxu0 %v492
    %v528 = vpop.f32.mrb[0].mxu0
    %v529 = vadd.f32 %v131, %v528
    %v530 = vpop.f32.mrb[0].mxu0
    %v531 = vpop.f32.mrb[0].mxu0
    %v532 = vpop.f32.mrb[0].mxu0
    %533 = vdwg.mxu0
    %v534 = vmax.f32 %v529, 0.0
    %vm535 = vcmp.ne.f32.partialorder %v529, %v529
    %v536 = vadd.f32 %v529, 0.0
    %v537 = vand.u32 2147483647, %v529
    %v538 = vsub.f32 0.0, %v537
    %v539 = vmul.f32 %v538, 1.442695
    %v540 = vpow.pop %v539
    %v541 = vadd.f32 %v540, 1.0
    %v542 = vlog2.pop %v541
    %v543 = vmul.f32 %v542, 0.6931472
    %v544 = vmul.f32 -0.5, %v540
    %v545 = vadd.f32 %v544, 1.0
    %v546 = vmul.f32 %v545, %v540
    %v547 = vand.u32 2147483647, %v540
    %vm548 = vcmp.lt.f32.partialorder %v547, 0.0004427343
    %v549 = vsel %vm548, %v546, %v543
    %v550 = vadd.f32 %v534, %v549
    %v551 = vsel %vm535, %v536, %v550
    %v552 = vadd.f32 %v551, 0.1
    %554 = vrot.lane.b32.xlu0 %v136, 24
    %v555 = vpop.permute.xlu0 %554
    %v557 = vmul.f32 %v552, %v555
    %559 = vrot.lane.b32.xlu0 %v557, 120
    %v560 = vpop.permute.xlu0 %559
    %v562 = vadd.f32 %v529, %v560
    %564 = vrot.lane.b32.xlu0 %v529, 32
    %v565 = vpop.permute.xlu0 %564
    %568 = vrot.lane.b32.xlu0 %v552, 32
    %v569 = vpop.permute.xlu0 %568
    %572 = vrot.lane.b32.xlu0 %v562, 48
    %v573 = vpop.permute.xlu0 %572
    %v575 = vsel %vm209, %v390, %v565
    %vm576 = vcmask 326656
    %v577 = vsel %vm576, %v575, %v569
    %vm578 = vcmask 392192
    %v579 = vsel %vm578, %v577, %v565
    %vm580 = vcmask 457728
    %v581 = vsel %vm580, %v579, %v569
    %v582 = vsel %vm236, %v581, %v573
    %vm583 = vcmask 588800
    %v584 = vsel %vm583, %v582, 0.0
    %585 = vst [vmem:[%s7] sm:$0xff] %v584
    %s586 = scalar_lea.vmem [#allocation2], 32
    %v587 = vld [vmem:[%s586] sm:$0xff]
    %v588 = vld [vmem:[%s586 + $0x8] sm:$0xff]
    %v589 = vld [vmem:[%s586 + $0x10] sm:$0xff]
    %v590 = vld [vmem:[%s586 + $0x18] sm:$0xff]
    %592 = vrot.lane.b32.xlu0 %v589, 32
    %v593 = vpop.permute.xlu0 %592
    %v595 = vmul.f32 %v387, %v593
    %596 = vrot.lane.b32.xlu0 %v589, 16
    %v597 = vpop.permute.xlu0 %596
    %v599 = vmul.f32 %v562, %v597
    %601 = vrot.lane.b32.xlu0 %v599, 112
    %v602 = vpop.permute.xlu0 %601
    %605 = vrot.lane.b32.xlu0 %v588, 8
    %v606 = vpop.permute.xlu0 %605
    %v608 = vsel %vm151, %v602, %v606
    %v609 = vpack.c.bf16 %v608, %v608
    %v611 = vsel %vm160, %v609, 0
    %613 = vmatprep.subr.bf16.mxu0 0
    %614 = vmatpush1.bf16.msra.mxu0 %v158
    %615 = vmatprep.subr.bf16.mxu0 0
    %616 = vmatpush1.bf16.msra.mxu0 0
    %617 = vmatprep.subr.bf16.mxu0 0
    %618 = vmatpush1.bf16.msra.mxu0 0
    %619 = vmatprep.subr.bf16.mxu0 0
    %620 = vmatpush1.bf16.msra.mxu0 0
    %621 = vmatprep.subr.bf16.mxu0 0
    %622 = vmatpush1.bf16.msra.mxu0 0
    %623 = vmatprep.subr.bf16.mxu0 0
    %624 = vmatpush1.bf16.msra.mxu0 0
    %625 = vmatprep.subr.bf16.mxu0 0
    %626 = vmatpush1.bf16.msra.mxu0 0
    %627 = vmatprep.subr.bf16.mxu0 0
    %628 = vmatpush1.bf16.msra.mxu0 0
    %629 = vmatprep.subr.bf16.mxu0 0
    %630 = vmatpush1.bf16.msra.mxu0 0
    %631 = vmatprep.subr.bf16.mxu0 0
    %632 = vmatpush1.bf16.msra.mxu0 0
    %633 = vmatprep.subr.bf16.mxu0 0
    %634 = vmatpush1.bf16.msra.mxu0 0
    %635 = vmatprep.subr.bf16.mxu0 0
    %636 = vmatpush1.bf16.msra.mxu0 0
    %637 = vmatprep.subr.bf16.mxu0 0
    %638 = vmatpush1.bf16.msra.mxu0 0
    %639 = vmatprep.subr.bf16.mxu0 0
    %640 = vmatpush1.bf16.msra.mxu0 0
    %641 = vmatprep.subr.bf16.mxu0 0
    %642 = vmatpush1.bf16.msra.mxu0 0
    %643 = vmatprep.subr.bf16.mxu0 0
    %644 = vmatpush1.bf16.msra.mxu0 0
    %645 = vmatprep.mubr.bf16.mxu0 0
    %646 = vmatmul.mubr.bf16.gmra.mrb[0].mxu0 %v611
    %v647 = vpop.f32.mrb[0].mxu0
    %v648 = vadd.f32 %v99, %v647
    %v649 = vpop.f32.mrb[0].mxu0
    %v650 = vpop.f32.mrb[0].mxu0
    %v651 = vpop.f32.mrb[0].mxu0
    %652 = vdwg.mxu0
    %v653 = vmax.f32 %v648, 0.0
    %v654 = vsel %vm209, %v653, %v595
    %v655 = vpack.c.bf16 %v654, %v654
    %v657 = vsel %vm236, %v655, 0
    %659 = vmatprep.subr.bf16.mxu0 0
    %660 = vmatpush1.bf16.msra.mxu0 %v228
    %661 = vmatprep.subr.bf16.mxu0 0
    %662 = vmatpush1.bf16.msra.mxu0 %v229
    %663 = vmatprep.subr.bf16.mxu0 0
    %664 = vmatpush1.bf16.msra.mxu0 %v230
    %665 = vmatprep.subr.bf16.mxu0 0
    %666 = vmatpush1.bf16.msra.mxu0 %v231
    %667 = vmatprep.subr.bf16.mxu0 0
    %668 = vmatpush1.bf16.msra.mxu0 0
    %669 = vmatprep.subr.bf16.mxu0 0
    %670 = vmatpush1.bf16.msra.mxu0 0
    %671 = vmatprep.subr.bf16.mxu0 0
    %672 = vmatpush1.bf16.msra.mxu0 0
    %673 = vmatprep.subr.bf16.mxu0 0
    %674 = vmatpush1.bf16.msra.mxu0 0
    %675 = vmatprep.subr.bf16.mxu0 0
    %676 = vmatpush1.bf16.msra.mxu0 0
    %677 = vmatprep.subr.bf16.mxu0 0
    %678 = vmatpush1.bf16.msra.mxu0 0
    %679 = vmatprep.subr.bf16.mxu0 0
    %680 = vmatpush1.bf16.msra.mxu0 0
    %681 = vmatprep.subr.bf16.mxu0 0
    %682 = vmatpush1.bf16.msra.mxu0 0
    %683 = vmatprep.subr.bf16.mxu0 0
    %684 = vmatpush1.bf16.msra.mxu0 0
    %685 = vmatprep.subr.bf16.mxu0 0
    %686 = vmatpush1.bf16.msra.mxu0 0
    %687 = vmatprep.subr.bf16.mxu0 0
    %688 = vmatpush1.bf16.msra.mxu0 0
    %689 = vmatprep.subr.bf16.mxu0 0
    %690 = vmatpush1.bf16.msra.mxu0 0
    %691 = vmatprep.mubr.bf16.mxu0 0
    %692 = vmatmul.mubr.bf16.gmra.mrb[0].mxu0 %v657
    %v693 = vpop.f32.mrb[0].mxu0
    %v694 = vadd.f32 0.0, %v693
    %v695 = vpop.f32.mrb[0].mxu0
    %v696 = vpop.f32.mrb[0].mxu0
    %v697 = vpop.f32.mrb[0].mxu0
    %698 = vdwg.mxu0
    %v699 = vsel %vm209, %v694, 0.0
    %700 = vadd.xlane.f32.xlu0 %v699
    %v701 = vpop.xlane.xlu0 %700
    %v702 = vmul.f32 %v701, %v283
    %v703 = vsub.f32 %v694, %v702
    %v704 = vmul.f32 %v703, %v703
    %v705 = vsel %vm209, %v704, 0.0
    %706 = vadd.xlane.f32.xlu0 %v705
    %v707 = vpop.xlane.xlu0 %706
    %v708 = vmul.f32 %v707, %v283
    %v709 = vadd.f32 %v708, 0.001
    %v710 = vrsqrt.pop %v709
    %v711 = vmul.f32 %v703, %v710
    %v712 = vmul.f32 %v711, %v103
    %v713 = vadd.f32 %v712, %v107
    %v714 = vxor.u32 %v713, 2147483648
    %v715 = vmul.f32 %v714, 1.442695
    %v716 = vpow.pop %v715
    %v717 = vadd.f32 %v716, 1.0
    %v718 = vrcp.pop %v717
    %v719 = vmul.f32 1.0, %v718
    %721 = vrot.lane.b32.xlu0 %v694, 96
    %v722 = vpop.permute.xlu0 %721
    %v724 = vsel %vm209, %v722, 0.0
    %725 = vadd.xlane.f32.xlu0 %v724
    %v726 = vpop.xlane.xlu0 %725
    %v727 = vmul.f32 %v726, %v283
    %v728 = vsub.f32 %v694, %v727
    %v729 = vmul.f32 %v728, %v728
    %731 = vrot.lane.b32.xlu0 %v729, 96
    %v732 = vpop.permute.xlu0 %731
    %v734 = vsel %vm209, %v732, 0.0
    %735 = vadd.xlane.f32.xlu0 %v734
    %v736 = vpop.xlane.xlu0 %735
    %v737 = vmul.f32 %v736, %v283
    %v738 = vadd.f32 %v737, 0.001
    %v739 = vrsqrt.pop %v738
    %v740 = vmul.f32 %v728, %v739
    %v741 = vmul.f32 %v740, %v325
    %v742 = vadd.f32 %v741, %v330
    %v743 = vxor.u32 %v742, 2147483648
    %v744 = vmul.f32 %v743, 1.442695
    %v745 = vpow.pop %v744
    %v746 = vadd.f32 %v745, 1.0
    %v747 = vrcp.pop %v746
    %v748 = vmul.f32 1.0, %v747
    %749 = vrot.lane.b32.xlu0 %v694, 32
    %v750 = vpop.permute.xlu0 %749
    %v752 = vmul.f32 %v719, %v750
    %754 = vrot.lane.b32.xlu0 %v752, 64
    %v755 = vpop.permute.xlu0 %754
    %v757 = vadd.f32 %v694, %v755
    %759 = vrot.lane.b32.xlu0 %v757, 64
    %v760 = vpop.permute.xlu0 %759
    %v762 = vsel %vm209, %v760, 0.0
    %763 = vadd.xlane.f32.xlu0 %v762
    %v764 = vpop.xlane.xlu0 %763
    %v765 = vmul.f32 %v764, %v283
    %v766 = vsub.f32 %v757, %v765
    %v767 = vmul.f32 %v766, %v766
    %769 = vrot.lane.b32.xlu0 %v767, 64
    %v770 = vpop.permute.xlu0 %769
    %v772 = vsel %vm209, %v770, 0.0
    %773 = vadd.xlane.f32.xlu0 %v772
    %v774 = vpop.xlane.xlu0 %773
    %v775 = vmul.f32 %v774, %v283
    %v776 = vadd.f32 %v775, 0.001
    %v777 = vrsqrt.pop %v776
    %v778 = vmul.f32 %v766, %v777
    %v779 = vmul.f32 %v778, %v371
    %v780 = vadd.f32 %v779, %v376
    %v781 = vtanh.pop %v780
    %783 = vrot.lane.b32.xlu0 %v781, 96
    %v784 = vpop.permute.xlu0 %783
    %v786 = vmul.f32 %v748, %v784
    %v787 = vsub.f32 1.0, %v748
    %v788 = vmul.f32 %v787, %v595
    %v789 = vadd.f32 %v786, %v788
    %791 = vrot.lane.b32.xlu0 %v789, 96
    %v792 = vpop.permute.xlu0 %791
    %795 = vrot.lane.b32.xlu0 %v587, 32
    %v796 = vpop.permute.xlu0 %795
    %v798 = vsel %vm209, %v792, %v796
    %v799 = vpack.c.bf16 %v798, %v798
    %v801 = vsel %vm236, %v799, 0
    %803 = vmatprep.subr.bf16.mxu0 0
    %804 = vmatpush1.bf16.msra.mxu0 %v414
    %805 = vmatprep.subr.bf16.mxu0 0
    %806 = vmatpush1.bf16.msra.mxu0 %v415
    %807 = vmatprep.subr.bf16.mxu0 0
    %808 = vmatpush1.bf16.msra.mxu0 %v416
    %809 = vmatprep.subr.bf16.mxu0 0
    %810 = vmatpush1.bf16.msra.mxu0 %v417
    %811 = vmatprep.subr.bf16.mxu0 0
    %812 = vmatpush1.bf16.msra.mxu0 0
    %813 = vmatprep.subr.bf16.mxu0 0
    %814 = vmatpush1.bf16.msra.mxu0 0
    %815 = vmatprep.subr.bf16.mxu0 0
    %816 = vmatpush1.bf16.msra.mxu0 0
    %817 = vmatprep.subr.bf16.mxu0 0
    %818 = vmatpush1.bf16.msra.mxu0 0
    %819 = vmatprep.subr.bf16.mxu0 0
    %820 = vmatpush1.bf16.msra.mxu0 0
    %821 = vmatprep.subr.bf16.mxu0 0
    %822 = vmatpush1.bf16.msra.mxu0 0
    %823 = vmatprep.subr.bf16.mxu0 0
    %824 = vmatpush1.bf16.msra.mxu0 0
    %825 = vmatprep.subr.bf16.mxu0 0
    %826 = vmatpush1.bf16.msra.mxu0 0
    %827 = vmatprep.subr.bf16.mxu0 0
    %828 = vmatpush1.bf16.msra.mxu0 0
    %829 = vmatprep.subr.bf16.mxu0 0
    %830 = vmatpush1.bf16.msra.mxu0 0
    %831 = vmatprep.subr.bf16.mxu0 0
    %832 = vmatpush1.bf16.msra.mxu0 0
    %833 = vmatprep.subr.bf16.mxu0 0
    %834 = vmatpush1.bf16.msra.mxu0 0
    %835 = vmatprep.mubr.bf16.mxu0 0
    %836 = vmatmul.mubr.bf16.gmra.mrb[0].mxu0 %v801
    %v837 = vpop.f32.mrb[0].mxu0
    %v838 = vadd.f32 %v127, %v837
    %v839 = vpop.f32.mrb[0].mxu0
    %v840 = vpop.f32.mrb[0].mxu0
    %v841 = vpop.f32.mrb[0].mxu0
    %842 = vdwg.mxu0
    %v843 = vmax.f32 %v838, 0.0
    %v844 = vpack.c.bf16 %v843, %v843
    %v846 = vsel %vm236, %v844, 0
    %848 = vmatprep.subr.bf16.mxu0 0
    %849 = vmatpush1.bf16.msra.mxu0 %v483
    %850 = vmatprep.subr.bf16.mxu0 0
    %851 = vmatpush1.bf16.msra.mxu0 %v484
    %852 = vmatprep.subr.bf16.mxu0 0
    %853 = vmatpush1.bf16.msra.mxu0 %v485
    %854 = vmatprep.subr.bf16.mxu0 0
    %855 = vmatpush1.bf16.msra.mxu0 %v486
    %856 = vmatprep.subr.bf16.mxu0 0
    %857 = vmatpush1.bf16.msra.mxu0 0
    %858 = vmatprep.subr.bf16.mxu0 0
    %859 = vmatpush1.bf16.msra.mxu0 0
    %860 = vmatprep.subr.bf16.mxu0 0
    %861 = vmatpush1.bf16.msra.mxu0 0
    %862 = vmatprep.subr.bf16.mxu0 0
    %863 = vmatpush1.bf16.msra.mxu0 0
    %864 = vmatprep.subr.bf16.mxu0 0
    %865 = vmatpush1.bf16.msra.mxu0 0
    %866 = vmatprep.subr.bf16.mxu0 0
    %867 = vmatpush1.bf16.msra.mxu0 0
    %868 = vmatprep.subr.bf16.mxu0 0
    %869 = vmatpush1.bf16.msra.mxu0 0
    %870 = vmatprep.subr.bf16.mxu0 0
    %871 = vmatpush1.bf16.msra.mxu0 0
    %872 = vmatprep.subr.bf16.mxu0 0
    %873 = vmatpush1.bf16.msra.mxu0 0
    %874 = vmatprep.subr.bf16.mxu0 0
    %875 = vmatpush1.bf16.msra.mxu0 0
    %876 = vmatprep.subr.bf16.mxu0 0
    %877 = vmatpush1.bf16.msra.mxu0 0
    %878 = vmatprep.subr.bf16.mxu0 0
    %879 = vmatpush1.bf16.msra.mxu0 0
    %880 = vmatprep.mubr.bf16.mxu0 0
    %881 = vmatmul.mubr.bf16.gmra.mrb[0].mxu0 %v846
    %v882 = vpop.f32.mrb[0].mxu0
    %v883 = vadd.f32 %v131, %v882
    %v884 = vpop.f32.mrb[0].mxu0
    %v885 = vpop.f32.mrb[0].mxu0
    %v886 = vpop.f32.mrb[0].mxu0
    %887 = vdwg.mxu0
    %v888 = vmax.f32 %v883, 0.0
    %vm889 = vcmp.ne.f32.partialorder %v883, %v883
    %v890 = vadd.f32 %v883, 0.0
    %v891 = vand.u32 2147483647, %v883
    %v892 = vsub.f32 0.0, %v891
    %v893 = vmul.f32 %v892, 1.442695
    %v894 = vpow.pop %v893
    %v895 = vadd.f32 %v894, 1.0
    %v896 = vlog2.pop %v895
    %v897 = vmul.f32 %v896, 0.6931472
    %v898 = vmul.f32 -0.5, %v894
    %v899 = vadd.f32 %v898, 1.0
    %v900 = vmul.f32 %v899, %v894
    %v901 = vand.u32 2147483647, %v894
    %vm902 = vcmp.lt.f32.partialorder %v901, 0.0004427343
    %v903 = vsel %vm902, %v900, %v897
    %v904 = vadd.f32 %v888, %v903
    %v905 = vsel %vm889, %v890, %v904
    %v906 = vadd.f32 %v905, 0.1
    %908 = vrot.lane.b32.xlu0 %v590, 24
    %v909 = vpop.permute.xlu0 %908
    %v911 = vmul.f32 %v906, %v909
    %913 = vrot.lane.b32.xlu0 %v911, 120
    %v914 = vpop.permute.xlu0 %913
    %v916 = vadd.f32 %v883, %v914
    %918 = vrot.lane.b32.xlu0 %v883, 32
    %v919 = vpop.permute.xlu0 %918
    %922 = vrot.lane.b32.xlu0 %v906, 32
    %v923 = vpop.permute.xlu0 %922
    %926 = vrot.lane.b32.xlu0 %v916, 48
    %v927 = vpop.permute.xlu0 %926
    %v929 = vsel %vm209, %v792, %v919
    %v930 = vsel %vm576, %v929, %v923
    %v931 = vsel %vm578, %v930, %v919
    %v932 = vsel %vm580, %v931, %v923
    %v933 = vsel %vm236, %v932, %v927
    %v934 = vsel %vm583, %v933, 0.0
    %s935 = scalar_lea.vmem %s7, 8
    %936 = vst [vmem:[%s935] sm:$0xff] %v934
    %s937 = scalar_lea.vmem [#allocation2], 64
    %v938 = vld [vmem:[%s937] sm:$0xff]
    %v939 = vld [vmem:[%s937 + $0x8] sm:$0xff]
    %v940 = vld [vmem:[%s937 + $0x10] sm:$0xff]
    %v941 = vld [vmem:[%s937 + $0x18] sm:$0xff]
    %943 = vrot.lane.b32.xlu0 %v940, 32
    %v944 = vpop.permute.xlu0 %943
    %v946 = vmul.f32 %v789, %v944
    %947 = vrot.lane.b32.xlu0 %v940, 16
    %v948 = vpop.permute.xlu0 %947
    %v950 = vmul.f32 %v916, %v948
    %952 = vrot.lane.b32.xlu0 %v950, 112
    %v953 = vpop.permute.xlu0 %952
    %956 = vrot.lane.b32.xlu0 %v939, 8
    %v957 = vpop.permute.xlu0 %956
    %v959 = vsel %vm151, %v953, %v957
    %v960 = vpack.c.bf16 %v959, %v959
    %v962 = vsel %vm160, %v960, 0
    %964 = vmatprep.subr.bf16.mxu0 0
    %965 = vmatpush1.bf16.msra.mxu0 %v158
    %966 = vmatprep.subr.bf16.mxu0 0
    %967 = vmatpush1.bf16.msra.mxu0 0
    %968 = vmatprep.subr.bf16.mxu0 0
    %969 = vmatpush1.bf16.msra.mxu0 0
    %970 = vmatprep.subr.bf16.mxu0 0
    %971 = vmatpush1.bf16.msra.mxu0 0
    %972 = vmatprep.subr.bf16.mxu0 0
    %973 = vmatpush1.bf16.msra.mxu0 0
    %974 = vmatprep.subr.bf16.mxu0 0
    %975 = vmatpush1.bf16.msra.mxu0 0
    %976 = vmatprep.subr.bf16.mxu0 0
    %977 = vmatpush1.bf16.msra.mxu0 0
    %978 = vmatprep.subr.bf16.mxu0 0
    %979 = vmatpush1.bf16.msra.mxu0 0
    %980 = vmatprep.subr.bf16.mxu0 0
    %981 = vmatpush1.bf16.msra.mxu0 0
    %982 = vmatprep.subr.bf16.mxu0 0
    %983 = vmatpush1.bf16.msra.mxu0 0
    %984 = vmatprep.subr.bf16.mxu0 0
    %985 = vmatpush1.bf16.msra.mxu0 0
    %986 = vmatprep.subr.bf16.mxu0 0
    %987 = vmatpush1.bf16.msra.mxu0 0
    %988 = vmatprep.subr.bf16.mxu0 0
    %989 = vmatpush1.bf16.msra.mxu0 0
    %990 = vmatprep.subr.bf16.mxu0 0
    %991 = vmatpush1.bf16.msra.mxu0 0
    %992 = vmatprep.subr.bf16.mxu0 0
    %993 = vmatpush1.bf16.msra.mxu0 0
    %994 = vmatprep.subr.bf16.mxu0 0
    %995 = vmatpush1.bf16.msra.mxu0 0
    %996 = vmatprep.mubr.bf16.mxu0 0
    %997 = vmatmul.mubr.bf16.gmra.mrb[0].mxu0 %v962
    %v998 = vpop.f32.mrb[0].mxu0
    %v999 = vadd.f32 %v99, %v998
    %v1000 = vpop.f32.mrb[0].mxu0
    %v1001 = vpop.f32.mrb[0].mxu0
    %v1002 = vpop.f32.mrb[0].mxu0
    %1003 = vdwg.mxu0
    %v1004 = vmax.f32 %v999, 0.0
    %v1005 = vsel %vm209, %v1004, %v946
    %v1006 = vpack.c.bf16 %v1005, %v1005
    %v1008 = vsel %vm236, %v1006, 0
    %1010 = vmatprep.subr.bf16.mxu0 0
    %1011 = vmatpush1.bf16.msra.mxu0 %v228
    %1012 = vmatprep.subr.bf16.mxu0 0
    %1013 = vmatpush1.bf16.msra.mxu0 %v229
    %1014 = vmatprep.subr.bf16.mxu0 0
    %1015 = vmatpush1.bf16.msra.mxu0 %v230
    %1016 = vmatprep.subr.bf16.mxu0 0
    %1017 = vmatpush1.bf16.msra.mxu0 %v231
    %1018 = vmatprep.subr.bf16.mxu0 0
    %1019 = vmatpush1.bf16.msra.mxu0 0
    %1020 = vmatprep.subr.bf16.mxu0 0
    %1021 = vmatpush1.bf16.msra.mxu0 0
    %1022 = vmatprep.subr.bf16.mxu0 0
    %1023 = vmatpush1.bf16.msra.mxu0 0
    %1024 = vmatprep.subr.bf16.mxu0 0
    %1025 = vmatpush1.bf16.msra.mxu0 0
    %1026 = vmatprep.subr.bf16.mxu0 0
    %1027 = vmatpush1.bf16.msra.mxu0 0
    %1028 = vmatprep.subr.bf16.mxu0 0
    %1029 = vmatpush1.bf16.msra.mxu0 0
    %1030 = vmatprep.subr.bf16.mxu0 0
    %1031 = vmatpush1.bf16.msra.mxu0 0
    %1032 = vmatprep.subr.bf16.mxu0 0
    %1033 = vmatpush1.bf16.msra.mxu0 0
    %1034 = vmatprep.subr.bf16.mxu0 0
    %1035 = vmatpush1.bf16.msra.mxu0 0
    %1036 = vmatprep.subr.bf16.mxu0 0
    %1037 = vmatpush1.bf16.msra.mxu0 0
    %1038 = vmatprep.subr.bf16.mxu0 0
    %1039 = vmatpush1.bf16.msra.mxu0 0
    %1040 = vmatprep.subr.bf16.mxu0 0
    %1041 = vmatpush1.bf16.msra.mxu0 0
    %1042 = vmatprep.mubr.bf16.mxu0 0
    %1043 = vmatmul.mubr.bf16.gmra.mrb[0].mxu0 %v1008
    %v1044 = vpop.f32.mrb[0].mxu0
    %v1045 = vadd.f32 0.0, %v1044
    %v1046 = vpop.f32.mrb[0].mxu0
    %v1047 = vpop.f32.mrb[0].mxu0
    %v1048 = vpop.f32.mrb[0].mxu0
    %1049 = vdwg.mxu0
    %v1050 = vsel %vm209, %v1045, 0.0
    %1051 = vadd.xlane.f32.xlu0 %v1050
    %v1052 = vpop.xlane.xlu0 %1051
    %v1053 = vmul.f32 %v1052, %v283
    %v1054 = vsub.f32 %v1045, %v1053
    %v1055 = vmul.f32 %v1054, %v1054
    %v1056 = vsel %vm209, %v1055, 0.0
    %1057 = vadd.xlane.f32.xlu0 %v1056
    %v1058 = vpop.xlane.xlu0 %1057
    %v1059 = vmul.f32 %v1058, %v283
    %v1060 = vadd.f32 %v1059, 0.001
    %v1061 = vrsqrt.pop %v1060
    %v1062 = vmul.f32 %v1054, %v1061
    %v1063 = vmul.f32 %v1062, %v103
    %v1064 = vadd.f32 %v1063, %v107
    %v1065 = vxor.u32 %v1064, 2147483648
    %v1066 = vmul.f32 %v1065, 1.442695
    %v1067 = vpow.pop %v1066
    %v1068 = vadd.f32 %v1067, 1.0
    %v1069 = vrcp.pop %v1068
    %v1070 = vmul.f32 1.0, %v1069
    %1072 = vrot.lane.b32.xlu0 %v1045, 96
    %v1073 = vpop.permute.xlu0 %1072
    %v1075 = vsel %vm209, %v1073, 0.0
    %1076 = vadd.xlane.f32.xlu0 %v1075
    %v1077 = vpop.xlane.xlu0 %1076
    %v1078 = vmul.f32 %v1077, %v283
    %v1079 = vsub.f32 %v1045, %v1078
    %v1080 = vmul.f32 %v1079, %v1079
    %1082 = vrot.lane.b32.xlu0 %v1080, 96
    %v1083 = vpop.permute.xlu0 %1082
    %v1085 = vsel %vm209, %v1083, 0.0
    %1086 = vadd.xlane.f32.xlu0 %v1085
    %v1087 = vpop.xlane.xlu0 %1086
    %v1088 = vmul.f32 %v1087, %v283
    %v1089 = vadd.f32 %v1088, 0.001
    %v1090 = vrsqrt.pop %v1089
    %v1091 = vmul.f32 %v1079, %v1090
    %v1092 = vmul.f32 %v1091, %v325
    %v1093 = vadd.f32 %v1092, %v330
    %v1094 = vxor.u32 %v1093, 2147483648
    %v1095 = vmul.f32 %v1094, 1.442695
    %v1096 = vpow.pop %v1095
    %v1097 = vadd.f32 %v1096, 1.0
    %v1098 = vrcp.pop %v1097
    %v1099 = vmul.f32 1.0, %v1098
    %1100 = vrot.lane.b32.xlu0 %v1045, 32
    %v1101 = vpop.permute.xlu0 %1100
    %v1103 = vmul.f32 %v1070, %v1101
    %1105 = vrot.lane.b32.xlu0 %v1103, 64
    %v1106 = vpop.permute.xlu0 %1105
    %v1108 = vadd.f32 %v1045, %v1106
    %1110 = vrot.lane.b32.xlu0 %v1108, 64
    %v1111 = vpop.permute.xlu0 %1110
    %v1113 = vsel %vm209, %v1111, 0.0
    %1114 = vadd.xlane.f32.xlu0 %v1113
    %v1115 = vpop.xlane.xlu0 %1114
    %v1116 = vmul.f32 %v1115, %v283
    %v1117 = vsub.f32 %v1108, %v1116
    %v1118 = vmul.f32 %v1117, %v1117
    %1120 = vrot.lane.b32.xlu0 %v1118, 64
    %v1121 = vpop.permute.xlu0 %1120
    %v1123 = vsel %vm209, %v1121, 0.0
    %1124 = vadd.xlane.f32.xlu0 %v1123
    %v1125 = vpop.xlane.xlu0 %1124
    %v1126 = vmul.f32 %v1125, %v283
    %v1127 = vadd.f32 %v1126, 0.001
    %v1128 = vrsqrt.pop %v1127
    %v1129 = vmul.f32 %v1117, %v1128
    %v1130 = vmul.f32 %v1129, %v371
    %v1131 = vadd.f32 %v1130, %v376
    %v1132 = vtanh.pop %v1131
    %1134 = vrot.lane.b32.xlu0 %v1132, 96
    %v1135 = vpop.permute.xlu0 %1134
    %v1137 = vmul.f32 %v1099, %v1135
    %v1138 = vsub.f32 1.0, %v1099
    %v1139 = vmul.f32 %v1138, %v946
    %v1140 = vadd.f32 %v1137, %v1139
    %1142 = vrot.lane.b32.xlu0 %v1140, 96
    %v1143 = vpop.permute.xlu0 %1142
    %1146 = vrot.lane.b32.xlu0 %v938, 32
    %v1147 = vpop.permute.xlu0 %1146
    %v1149 = vsel %vm209, %v1143, %v1147
    %v1150 = vpack.c.bf16 %v1149, %v1149
    %v1152 = vsel %vm236, %v1150, 0
    %1154 = vmatprep.subr.bf16.mxu0 0
    %1155 = vmatpush1.bf16.msra.mxu0 %v414
    %1156 = vmatprep.subr.bf16.mxu0 0
    %1157 = vmatpush1.bf16.msra.mxu0 %v415
    %1158 = vmatprep.subr.bf16.mxu0 0
    %1159 = vmatpush1.bf16.msra.mxu0 %v416
    %1160 = vmatprep.subr.bf16.mxu0 0
    %1161 = vmatpush1.bf16.msra.mxu0 %v417
    %1162 = vmatprep.subr.bf16.mxu0 0
    %1163 = vmatpush1.bf16.msra.mxu0 0
    %1164 = vmatprep.subr.bf16.mxu0 0
    %1165 = vmatpush1.bf16.msra.mxu0 0
    %1166 = vmatprep.subr.bf16.mxu0 0
    %1167 = vmatpush1.bf16.msra.mxu0 0
    %1168 = vmatprep.subr.bf16.mxu0 0
    %1169 = vmatpush1.bf16.msra.mxu0 0
    %1170 = vmatprep.subr.bf16.mxu0 0
    %1171 = vmatpush1.bf16.msra.mxu0 0
    %1172 = vmatprep.subr.bf16.mxu0 0
    %1173 = vmatpush1.bf16.msra.mxu0 0
    %1174 = vmatprep.subr.bf16.mxu0 0
    %1175 = vmatpush1.bf16.msra.mxu0 0
    %1176 = vmatprep.subr.bf16.mxu0 0
    %1177 = vmatpush1.bf16.msra.mxu0 0
    %1178 = vmatprep.subr.bf16.mxu0 0
    %1179 = vmatpush1.bf16.msra.mxu0 0
    %1180 = vmatprep.subr.bf16.mxu0 0
    %1181 = vmatpush1.bf16.msra.mxu0 0
    %1182 = vmatprep.subr.bf16.mxu0 0
    %1183 = vmatpush1.bf16.msra.mxu0 0
    %1184 = vmatprep.subr.bf16.mxu0 0
    %1185 = vmatpush1.bf16.msra.mxu0 0
    %1186 = vmatprep.mubr.bf16.mxu0 0
    %1187 = vmatmul.mubr.bf16.gmra.mrb[0].mxu0 %v1152
    %v1188 = vpop.f32.mrb[0].mxu0
    %v1189 = vadd.f32 %v127, %v1188
    %v1190 = vpop.f32.mrb[0].mxu0
    %v1191 = vpop.f32.mrb[0].mxu0
    %v1192 = vpop.f32.mrb[0].mxu0
    %1193 = vdwg.mxu0
    %v1194 = vmax.f32 %v1189, 0.0
    %v1195 = vpack.c.bf16 %v1194, %v1194
    %v1197 = vsel %vm236, %v1195, 0
    %1199 = vmatprep.subr.bf16.mxu0 0
    %1200 = vmatpush1.bf16.msra.mxu0 %v483
    %1201 = vmatprep.subr.bf16.mxu0 0
    %1202 = vmatpush1.bf16.msra.mxu0 %v484
    %1203 = vmatprep.subr.bf16.mxu0 0
    %1204 = vmatpush1.bf16.msra.mxu0 %v485
    %1205 = vmatprep.subr.bf16.mxu0 0
    %1206 = vmatpush1.bf16.msra.mxu0 %v486
    %1207 = vmatprep.subr.bf16.mxu0 0
    %1208 = vmatpush1.bf16.msra.mxu0 0
    %1209 = vmatprep.subr.bf16.mxu0 0
    %1210 = vmatpush1.bf16.msra.mxu0 0
    %1211 = vmatprep.subr.bf16.mxu0 0
    %1212 = vmatpush1.bf16.msra.mxu0 0
    %1213 = vmatprep.subr.bf16.mxu0 0
    %1214 = vmatpush1.bf16.msra.mxu0 0
    %1215 = vmatprep.subr.bf16.mxu0 0
    %1216 = vmatpush1.bf16.msra.mxu0 0
    %1217 = vmatprep.subr.bf16.mxu0 0
    %1218 = vmatpush1.bf16.msra.mxu0 0
    %1219 = vmatprep.subr.bf16.mxu0 0
    %1220 = vmatpush1.bf16.msra.mxu0 0
    %1221 = vmatprep.subr.bf16.mxu0 0
    %1222 = vmatpush1.bf16.msra.mxu0 0
    %1223 = vmatprep.subr.bf16.mxu0 0
    %1224 = vmatpush1.bf16.msra.mxu0 0
    %1225 = vmatprep.subr.bf16.mxu0 0
    %1226 = vmatpush1.bf16.msra.mxu0 0
    %1227 = vmatprep.subr.bf16.mxu0 0
    %1228 = vmatpush1.bf16.msra.mxu0 0
    %1229 = vmatprep.subr.bf16.mxu0 0
    %1230 = vmatpush1.bf16.msra.mxu0 0
    %1231 = vmatprep.mubr.bf16.mxu0 0
    %1232 = vmatmul.mubr.bf16.gmra.mrb[0].mxu0 %v1197
    %v1233 = vpop.f32.mrb[0].mxu0
    %v1234 = vadd.f32 %v131, %v1233
    %v1235 = vpop.f32.mrb[0].mxu0
    %v1236 = vpop.f32.mrb[0].mxu0
    %v1237 = vpop.f32.mrb[0].mxu0
    %1238 = vdwg.mxu0
    %v1239 = vmax.f32 %v1234, 0.0
    %vm1240 = vcmp.ne.f32.partialorder %v1234, %v1234
    %v1241 = vadd.f32 %v1234, 0.0
    %v1242 = vand.u32 2147483647, %v1234
    %v1243 = vsub.f32 0.0, %v1242
    %v1244 = vmul.f32 %v1243, 1.442695
    %v1245 = vpow.pop %v1244
    %v1246 = vadd.f32 %v1245, 1.0
    %v1247 = vlog2.pop %v1246
    %v1248 = vmul.f32 %v1247, 0.6931472
    %v1249 = vmul.f32 -0.5, %v1245
    %v1250 = vadd.f32 %v1249, 1.0
    %v1251 = vmul.f32 %v1250, %v1245
    %v1252 = vand.u32 2147483647, %v1245
    %vm1253 = vcmp.lt.f32.partialorder %v1252, 0.0004427343
    %v1254 = vsel %vm1253, %v1251, %v1248
    %v1255 = vadd.f32 %v1239, %v1254
    %v1256 = vsel %vm1240, %v1241, %v1255
    %v1257 = vadd.f32 %v1256, 0.1
    %1259 = vrot.lane.b32.xlu0 %v941, 24
    %v1260 = vpop.permute.xlu0 %1259
    %v1262 = vmul.f32 %v1257, %v1260
    %1264 = vrot.lane.b32.xlu0 %v1262, 120
    %v1265 = vpop.permute.xlu0 %1264
    %v1267 = vadd.f32 %v1234, %v1265
    %1269 = vrot.lane.b32.xlu0 %v1234, 32
    %v1270 = vpop.permute.xlu0 %1269
    %1273 = vrot.lane.b32.xlu0 %v1257, 32
    %v1274 = vpop.permute.xlu0 %1273
    %1277 = vrot.lane.b32.xlu0 %v1267, 48
    %v1278 = vpop.permute.xlu0 %1277
    %v1280 = vsel %vm209, %v1143, %v1270
    %v1281 = vsel %vm576, %v1280, %v1274
    %v1282 = vsel %vm578, %v1281, %v1270
    %v1283 = vsel %vm580, %v1282, %v1274
    %v1284 = vsel %vm236, %v1283, %v1278
    %v1285 = vsel %vm583, %v1284, 0.0
    %s1286 = scalar_lea.vmem %s7, 16
    %1287 = vst [vmem:[%s1286] sm:$0xff] %v1285
    %s1288 = scalar_lea.vmem [#allocation2], 96
    %v1289 = vld [vmem:[%s1288] sm:$0xff]
    %v1290 = vld [vmem:[%s1288 + $0x8] sm:$0xff]
    %v1291 = vld [vmem:[%s1288 + $0x10] sm:$0xff]
    %v1292 = vld [vmem:[%s1288 + $0x18] sm:$0xff]
    %1294 = vrot.lane.b32.xlu0 %v1291, 32
    %v1295 = vpop.permute.xlu0 %1294
    %v1297 = vmul.f32 %v1140, %v1295
    %1298 = vrot.lane.b32.xlu0 %v1291, 16
    %v1299 = vpop.permute.xlu0 %1298
    %v1301 = vmul.f32 %v1267, %v1299
    %1303 = vrot.lane.b32.xlu0 %v1301, 112
    %v1304 = vpop.permute.xlu0 %1303
    %1307 = vrot.lane.b32.xlu0 %v1290, 8
    %v1308 = vpop.permute.xlu0 %1307
    %v1310 = vsel %vm151, %v1304, %v1308
    %v1311 = vpack.c.bf16 %v1310, %v1310
    %v1313 = vsel %vm160, %v1311, 0
    %1315 = vmatprep.subr.bf16.mxu0 0
    %1316 = vmatpush1.bf16.msra.mxu0 %v158
    %1317 = vmatprep.subr.bf16.mxu0 0
    %1318 = vmatpush1.bf16.msra.mxu0 0
    %1319 = vmatprep.subr.bf16.mxu0 0
    %1320 = vmatpush1.bf16.msra.mxu0 0
    %1321 = vmatprep.subr.bf16.mxu0 0
    %1322 = vmatpush1.bf16.msra.mxu0 0
    %1323 = vmatprep.subr.bf16.mxu0 0
    %1324 = vmatpush1.bf16.msra.mxu0 0
    %1325 = vmatprep.subr.bf16.mxu0 0
    %1326 = vmatpush1.bf16.msra.mxu0 0
    %1327 = vmatprep.subr.bf16.mxu0 0
    %1328 = vmatpush1.bf16.msra.mxu0 0
    %1329 = vmatprep.subr.bf16.mxu0 0
    %1330 = vmatpush1.bf16.msra.mxu0 0
    %1331 = vmatprep.subr.bf16.mxu0 0
    %1332 = vmatpush1.bf16.msra.mxu0 0
    %1333 = vmatprep.subr.bf16.mxu0 0
    %1334 = vmatpush1.bf16.msra.mxu0 0
    %1335 = vmatprep.subr.bf16.mxu0 0
    %1336 = vmatpush1.bf16.msra.mxu0 0
    %1337 = vmatprep.subr.bf16.mxu0 0
    %1338 = vmatpush1.bf16.msra.mxu0 0
    %1339 = vmatprep.subr.bf16.mxu0 0
    %1340 = vmatpush1.bf16.msra.mxu0 0
    %1341 = vmatprep.subr.bf16.mxu0 0
    %1342 = vmatpush1.bf16.msra.mxu0 0
    %1343 = vmatprep.subr.bf16.mxu0 0
    %1344 = vmatpush1.bf16.msra.mxu0 0
    %1345 = vmatprep.subr.bf16.mxu0 0
    %1346 = vmatpush1.bf16.msra.mxu0 0
    %1347 = vmatprep.mubr.bf16.mxu0 0
    %1348 = vmatmul.mubr.bf16.gmra.mrb[0].mxu0 %v1313
    %v1349 = vpop.f32.mrb[0].mxu0
    %v1350 = vadd.f32 %v99, %v1349
    %v1351 = vpop.f32.mrb[0].mxu0
    %v1352 = vpop.f32.mrb[0].mxu0
    %v1353 = vpop.f32.mrb[0].mxu0
    %1354 = vdwg.mxu0
    %v1355 = vmax.f32 %v1350, 0.0
    %v1356 = vsel %vm209, %v1355, %v1297
    %v1357 = vpack.c.bf16 %v1356, %v1356
    %v1359 = vsel %vm236, %v1357, 0
    %1361 = vmatprep.subr.bf16.mxu0 0
    %1362 = vmatpush1.bf16.msra.mxu0 %v228
    %1363 = vmatprep.subr.bf16.mxu0 0
    %1364 = vmatpush1.bf16.msra.mxu0 %v229
    %1365 = vmatprep.subr.bf16.mxu0 0
    %1366 = vmatpush1.bf16.msra.mxu0 %v230
    %1367 = vmatprep.subr.bf16.mxu0 0
    %1368 = vmatpush1.bf16.msra.mxu0 %v231
    %1369 = vmatprep.subr.bf16.mxu0 0
    %1370 = vmatpush1.bf16.msra.mxu0 0
    %1371 = vmatprep.subr.bf16.mxu0 0
    %1372 = vmatpush1.bf16.msra.mxu0 0
    %1373 = vmatprep.subr.bf16.mxu0 0
    %1374 = vmatpush1.bf16.msra.mxu0 0
    %1375 = vmatprep.subr.bf16.mxu0 0
    %1376 = vmatpush1.bf16.msra.mxu0 0
    %1377 = vmatprep.subr.bf16.mxu0 0
    %1378 = vmatpush1.bf16.msra.mxu0 0
    %1379 = vmatprep.subr.bf16.mxu0 0
    %1380 = vmatpush1.bf16.msra.mxu0 0
    %1381 = vmatprep.subr.bf16.mxu0 0
    %1382 = vmatpush1.bf16.msra.mxu0 0
    %1383 = vmatprep.subr.bf16.mxu0 0
    %1384 = vmatpush1.bf16.msra.mxu0 0
    %1385 = vmatprep.subr.bf16.mxu0 0
    %1386 = vmatpush1.bf16.msra.mxu0 0
    %1387 = vmatprep.subr.bf16.mxu0 0
    %1388 = vmatpush1.bf16.msra.mxu0 0
    %1389 = vmatprep.subr.bf16.mxu0 0
    %1390 = vmatpush1.bf16.msra.mxu0 0
    %1391 = vmatprep.subr.bf16.mxu0 0
    %1392 = vmatpush1.bf16.msra.mxu0 0
    %1393 = vmatprep.mubr.bf16.mxu0 0
    %1394 = vmatmul.mubr.bf16.gmra.mrb[0].mxu0 %v1359
    %v1395 = vpop.f32.mrb[0].mxu0
    %v1396 = vadd.f32 0.0, %v1395
    %v1397 = vpop.f32.mrb[0].mxu0
    %v1398 = vpop.f32.mrb[0].mxu0
    %v1399 = vpop.f32.mrb[0].mxu0
    %1400 = vdwg.mxu0
    %v1401 = vsel %vm209, %v1396, 0.0
    %1402 = vadd.xlane.f32.xlu0 %v1401
    %v1403 = vpop.xlane.xlu0 %1402
    %v1404 = vmul.f32 %v1403, %v283
    %v1405 = vsub.f32 %v1396, %v1404
    %v1406 = vmul.f32 %v1405, %v1405
    %v1407 = vsel %vm209, %v1406, 0.0
    %1408 = vadd.xlane.f32.xlu0 %v1407
    %v1409 = vpop.xlane.xlu0 %1408
    %v1410 = vmul.f32 %v1409, %v283
    %v1411 = vadd.f32 %v1410, 0.001
    %v1412 = vrsqrt.pop %v1411
    %v1413 = vmul.f32 %v1405, %v1412
    %v1414 = vmul.f32 %v1413, %v103
    %v1415 = vadd.f32 %v1414, %v107
    %v1416 = vxor.u32 %v1415, 2147483648
    %v1417 = vmul.f32 %v1416, 1.442695
    %v1418 = vpow.pop %v1417
    %v1419 = vadd.f32 %v1418, 1.0
    %v1420 = vrcp.pop %v1419
    %v1421 = vmul.f32 1.0, %v1420
    %1423 = vrot.lane.b32.xlu0 %v1396, 96
    %v1424 = vpop.permute.xlu0 %1423
    %v1426 = vsel %vm209, %v1424, 0.0
    %1427 = vadd.xlane.f32.xlu0 %v1426
    %v1428 = vpop.xlane.xlu0 %1427
    %v1429 = vmul.f32 %v1428, %v283
    %v1430 = vsub.f32 %v1396, %v1429
    %v1431 = vmul.f32 %v1430, %v1430
    %1433 = vrot.lane.b32.xlu0 %v1431, 96
    %v1434 = vpop.permute.xlu0 %1433
    %v1436 = vsel %vm209, %v1434, 0.0
    %1437 = vadd.xlane.f32.xlu0 %v1436
    %v1438 = vpop.xlane.xlu0 %1437
    %v1439 = vmul.f32 %v1438, %v283
    %v1440 = vadd.f32 %v1439, 0.001
    %v1441 = vrsqrt.pop %v1440
    %v1442 = vmul.f32 %v1430, %v1441
    %v1443 = vmul.f32 %v1442, %v325
    %v1444 = vadd.f32 %v1443, %v330
    %v1445 = vxor.u32 %v1444, 2147483648
    %v1446 = vmul.f32 %v1445, 1.442695
    %v1447 = vpow.pop %v1446
    %v1448 = vadd.f32 %v1447, 1.0
    %v1449 = vrcp.pop %v1448
    %v1450 = vmul.f32 1.0, %v1449
    %1451 = vrot.lane.b32.xlu0 %v1396, 32
    %v1452 = vpop.permute.xlu0 %1451
    %v1454 = vmul.f32 %v1421, %v1452
    %1456 = vrot.lane.b32.xlu0 %v1454, 64
    %v1457 = vpop.permute.xlu0 %1456
    %v1459 = vadd.f32 %v1396, %v1457
    %1461 = vrot.lane.b32.xlu0 %v1459, 64
    %v1462 = vpop.permute.xlu0 %1461
    %v1464 = vsel %vm209, %v1462, 0.0
    %1465 = vadd.xlane.f32.xlu0 %v1464
    %v1466 = vpop.xlane.xlu0 %1465
    %v1467 = vmul.f32 %v1466, %v283
    %v1468 = vsub.f32 %v1459, %v1467
    %v1469 = vmul.f32 %v1468, %v1468
    %1471 = vrot.lane.b32.xlu0 %v1469, 64
    %v1472 = vpop.permute.xlu0 %1471
    %v1474 = vsel %vm209, %v1472, 0.0
    %1475 = vadd.xlane.f32.xlu0 %v1474
    %v1476 = vpop.xlane.xlu0 %1475
    %v1477 = vmul.f32 %v1476, %v283
    %v1478 = vadd.f32 %v1477, 0.001
    %v1479 = vrsqrt.pop %v1478
    %v1480 = vmul.f32 %v1468, %v1479
    %v1481 = vmul.f32 %v1480, %v371
    %v1482 = vadd.f32 %v1481, %v376
    %v1483 = vtanh.pop %v1482
    %1485 = vrot.lane.b32.xlu0 %v1483, 96
    %v1486 = vpop.permute.xlu0 %1485
    %v1488 = vmul.f32 %v1450, %v1486
    %v1489 = vsub.f32 1.0, %v1450
    %v1490 = vmul.f32 %v1489, %v1297
    %v1491 = vadd.f32 %v1488, %v1490
    %1493 = vrot.lane.b32.xlu0 %v1491, 96
    %v1494 = vpop.permute.xlu0 %1493
    %1497 = vrot.lane.b32.xlu0 %v1289, 32
    %v1498 = vpop.permute.xlu0 %1497
    %v1500 = vsel %vm209, %v1494, %v1498
    %v1501 = vpack.c.bf16 %v1500, %v1500
    %v1503 = vsel %vm236, %v1501, 0
    %1505 = vmatprep.subr.bf16.mxu0 0
    %1506 = vmatpush1.bf16.msra.mxu0 %v414
    %1507 = vmatprep.subr.bf16.mxu0 0
    %1508 = vmatpush1.bf16.msra.mxu0 %v415
    %1509 = vmatprep.subr.bf16.mxu0 0
    %1510 = vmatpush1.bf16.msra.mxu0 %v416
    %1511 = vmatprep.subr.bf16.mxu0 0
    %1512 = vmatpush1.bf16.msra.mxu0 %v417
    %1513 = vmatprep.subr.bf16.mxu0 0
    %1514 = vmatpush1.bf16.msra.mxu0 0
    %1515 = vmatprep.subr.bf16.mxu0 0
    %1516 = vmatpush1.bf16.msra.mxu0 0
    %1517 = vmatprep.subr.bf16.mxu0 0
    %1518 = vmatpush1.bf16.msra.mxu0 0
    %1519 = vmatprep.subr.bf16.mxu0 0
    %1520 = vmatpush1.bf16.msra.mxu0 0
    %1521 = vmatprep.subr.bf16.mxu0 0
    %1522 = vmatpush1.bf16.msra.mxu0 0
    %1523 = vmatprep.subr.bf16.mxu0 0
    %1524 = vmatpush1.bf16.msra.mxu0 0
    %1525 = vmatprep.subr.bf16.mxu0 0
    %1526 = vmatpush1.bf16.msra.mxu0 0
    %1527 = vmatprep.subr.bf16.mxu0 0
    %1528 = vmatpush1.bf16.msra.mxu0 0
    %1529 = vmatprep.subr.bf16.mxu0 0
    %1530 = vmatpush1.bf16.msra.mxu0 0
    %1531 = vmatprep.subr.bf16.mxu0 0
    %1532 = vmatpush1.bf16.msra.mxu0 0
    %1533 = vmatprep.subr.bf16.mxu0 0
    %1534 = vmatpush1.bf16.msra.mxu0 0
    %1535 = vmatprep.subr.bf16.mxu0 0
    %1536 = vmatpush1.bf16.msra.mxu0 0
    %1537 = vmatprep.mubr.bf16.mxu0 0
    %1538 = vmatmul.mubr.bf16.gmra.mrb[0].mxu0 %v1503
    %v1539 = vpop.f32.mrb[0].mxu0
    %v1540 = vadd.f32 %v127, %v1539
    %v1541 = vpop.f32.mrb[0].mxu0
    %v1542 = vpop.f32.mrb[0].mxu0
    %v1543 = vpop.f32.mrb[0].mxu0
    %1544 = vdwg.mxu0
    %v1545 = vmax.f32 %v1540, 0.0
    %v1546 = vpack.c.bf16 %v1545, %v1545
    %v1548 = vsel %vm236, %v1546, 0
    %1550 = vmatprep.subr.bf16.mxu0 0
    %1551 = vmatpush1.bf16.msra.mxu0 %v483
    %1552 = vmatprep.subr.bf16.mxu0 0
    %1553 = vmatpush1.bf16.msra.mxu0 %v484
    %1554 = vmatprep.subr.bf16.mxu0 0
    %1555 = vmatpush1.bf16.msra.mxu0 %v485
    %1556 = vmatprep.subr.bf16.mxu0 0
    %1557 = vmatpush1.bf16.msra.mxu0 %v486
    %1558 = vmatprep.subr.bf16.mxu0 0
    %1559 = vmatpush1.bf16.msra.mxu0 0
    %1560 = vmatprep.subr.bf16.mxu0 0
    %1561 = vmatpush1.bf16.msra.mxu0 0
    %1562 = vmatprep.subr.bf16.mxu0 0
    %1563 = vmatpush1.bf16.msra.mxu0 0
    %1564 = vmatprep.subr.bf16.mxu0 0
    %1565 = vmatpush1.bf16.msra.mxu0 0
    %1566 = vmatprep.subr.bf16.mxu0 0
    %1567 = vmatpush1.bf16.msra.mxu0 0
    %1568 = vmatprep.subr.bf16.mxu0 0
    %1569 = vmatpush1.bf16.msra.mxu0 0
    %1570 = vmatprep.subr.bf16.mxu0 0
    %1571 = vmatpush1.bf16.msra.mxu0 0
    %1572 = vmatprep.subr.bf16.mxu0 0
    %1573 = vmatpush1.bf16.msra.mxu0 0
    %1574 = vmatprep.subr.bf16.mxu0 0
    %1575 = vmatpush1.bf16.msra.mxu0 0
    %1576 = vmatprep.subr.bf16.mxu0 0
    %1577 = vmatpush1.bf16.msra.mxu0 0
    %1578 = vmatprep.subr.bf16.mxu0 0
    %1579 = vmatpush1.bf16.msra.mxu0 0
    %1580 = vmatprep.subr.bf16.mxu0 0
    %1581 = vmatpush1.bf16.msra.mxu0 0
    %1582 = vmatprep.mubr.bf16.mxu0 0
    %1583 = vmatmul.mubr.bf16.gmra.mrb[0].mxu0 %v1548
    %v1584 = vpop.f32.mrb[0].mxu0
    %v1585 = vadd.f32 %v131, %v1584
    %v1586 = vpop.f32.mrb[0].mxu0
    %v1587 = vpop.f32.mrb[0].mxu0
    %v1588 = vpop.f32.mrb[0].mxu0
    %1589 = vdwg.mxu0
    %v1590 = vmax.f32 %v1585, 0.0
    %vm1591 = vcmp.ne.f32.partialorder %v1585, %v1585
    %v1592 = vadd.f32 %v1585, 0.0
    %v1593 = vand.u32 2147483647, %v1585
    %v1594 = vsub.f32 0.0, %v1593
    %v1595 = vmul.f32 %v1594, 1.442695
    %v1596 = vpow.pop %v1595
    %v1597 = vadd.f32 %v1596, 1.0
    %v1598 = vlog2.pop %v1597
    %v1599 = vmul.f32 %v1598, 0.6931472
    %v1600 = vmul.f32 -0.5, %v1596
    %v1601 = vadd.f32 %v1600, 1.0
    %v1602 = vmul.f32 %v1601, %v1596
    %v1603 = vand.u32 2147483647, %v1596
    %vm1604 = vcmp.lt.f32.partialorder %v1603, 0.0004427343
    %v1605 = vsel %vm1604, %v1602, %v1599
    %v1606 = vadd.f32 %v1590, %v1605
    %v1607 = vsel %vm1591, %v1592, %v1606
    %v1608 = vadd.f32 %v1607, 0.1
    %1610 = vrot.lane.b32.xlu0 %v1292, 24
    %v1611 = vpop.permute.xlu0 %1610
    %v1613 = vmul.f32 %v1608, %v1611
    %1615 = vrot.lane.b32.xlu0 %v1613, 120
    %v1616 = vpop.permute.xlu0 %1615
    %v1618 = vadd.f32 %v1585, %v1616
    %1620 = vrot.lane.b32.xlu0 %v1585, 32
    %v1621 = vpop.permute.xlu0 %1620
    %1624 = vrot.lane.b32.xlu0 %v1608, 32
    %v1625 = vpop.permute.xlu0 %1624
    %1628 = vrot.lane.b32.xlu0 %v1618, 48
    %v1629 = vpop.permute.xlu0 %1628
    %v1631 = vsel %vm209, %v1494, %v1621
    %v1632 = vsel %vm576, %v1631, %v1625
    %v1633 = vsel %vm578, %v1632, %v1621
    %v1634 = vsel %vm580, %v1633, %v1625
    %v1635 = vsel %vm236, %v1634, %v1629
    %v1636 = vsel %vm583, %v1635, 0.0
    %s1637 = scalar_lea.vmem %s7, 24
    %1638 = vst [vmem:[%s1637] sm:$0xff] %v1636
    %s1639 = scalar_lea.vmem [#allocation2], 128
    %v1640 = vld [vmem:[%s1639] sm:$0xff]
    %v1641 = vld [vmem:[%s1639 + $0x8] sm:$0xff]
    %v1642 = vld [vmem:[%s1639 + $0x10] sm:$0xff]
    %v1643 = vld [vmem:[%s1639 + $0x18] sm:$0xff]
    %1645 = vrot.lane.b32.xlu0 %v1642, 32
    %v1646 = vpop.permute.xlu0 %1645
    %v1648 = vmul.f32 %v1491, %v1646
    %1649 = vrot.lane.b32.xlu0 %v1642, 16
    %v1650 = vpop.permute.xlu0 %1649
    %v1652 = vmul.f32 %v1618, %v1650
    %1654 = vrot.lane.b32.xlu0 %v1652, 112
    %v1655 = vpop.permute.xlu0 %1654
    %1658 = vrot.lane.b32.xlu0 %v1641, 8
    %v1659 = vpop.permute.xlu0 %1658
    %v1661 = vsel %vm151, %v1655, %v1659
    %v1662 = vpack.c.bf16 %v1661, %v1661
    %v1664 = vsel %vm160, %v1662, 0
    %1666 = vmatprep.subr.bf16.mxu0 0
    %1667 = vmatpush1.bf16.msra.mxu0 %v158
    %1668 = vmatprep.subr.bf16.mxu0 0
    %1669 = vmatpush1.bf16.msra.mxu0 0
    %1670 = vmatprep.subr.bf16.mxu0 0
    %1671 = vmatpush1.bf16.msra.mxu0 0
    %1672 = vmatprep.subr.bf16.mxu0 0
    %1673 = vmatpush1.bf16.msra.mxu0 0
    %1674 = vmatprep.subr.bf16.mxu0 0
    %1675 = vmatpush1.bf16.msra.mxu0 0
    %1676 = vmatprep.subr.bf16.mxu0 0
    %1677 = vmatpush1.bf16.msra.mxu0 0
    %1678 = vmatprep.subr.bf16.mxu0 0
    %1679 = vmatpush1.bf16.msra.mxu0 0
    %1680 = vmatprep.subr.bf16.mxu0 0
    %1681 = vmatpush1.bf16.msra.mxu0 0
    %1682 = vmatprep.subr.bf16.mxu0 0
    %1683 = vmatpush1.bf16.msra.mxu0 0
    %1684 = vmatprep.subr.bf16.mxu0 0
    %1685 = vmatpush1.bf16.msra.mxu0 0
    %1686 = vmatprep.subr.bf16.mxu0 0
    %1687 = vmatpush1.bf16.msra.mxu0 0
    %1688 = vmatprep.subr.bf16.mxu0 0
    %1689 = vmatpush1.bf16.msra.mxu0 0
    %1690 = vmatprep.subr.bf16.mxu0 0
    %1691 = vmatpush1.bf16.msra.mxu0 0
    %1692 = vmatprep.subr.bf16.mxu0 0
    %1693 = vmatpush1.bf16.msra.mxu0 0
    %1694 = vmatprep.subr.bf16.mxu0 0
    %1695 = vmatpush1.bf16.msra.mxu0 0
    %1696 = vmatprep.subr.bf16.mxu0 0
    %1697 = vmatpush1.bf16.msra.mxu0 0
    %1698 = vmatprep.mubr.bf16.mxu0 0
    %1699 = vmatmul.mubr.bf16.gmra.mrb[0].mxu0 %v1664
    %v1700 = vpop.f32.mrb[0].mxu0
    %v1701 = vadd.f32 %v99, %v1700
    %v1702 = vpop.f32.mrb[0].mxu0
    %v1703 = vpop.f32.mrb[0].mxu0
    %v1704 = vpop.f32.mrb[0].mxu0
    %1705 = vdwg.mxu0
    %v1706 = vmax.f32 %v1701, 0.0
    %v1707 = vsel %vm209, %v1706, %v1648
    %v1708 = vpack.c.bf16 %v1707, %v1707
    %v1710 = vsel %vm236, %v1708, 0
    %1712 = vmatprep.subr.bf16.mxu0 0
    %1713 = vmatpush1.bf16.msra.mxu0 %v228
    %1714 = vmatprep.subr.bf16.mxu0 0
    %1715 = vmatpush1.bf16.msra.mxu0 %v229
    %1716 = vmatprep.subr.bf16.mxu0 0
    %1717 = vmatpush1.bf16.msra.mxu0 %v230
    %1718 = vmatprep.subr.bf16.mxu0 0
    %1719 = vmatpush1.bf16.msra.mxu0 %v231
    %1720 = vmatprep.subr.bf16.mxu0 0
    %1721 = vmatpush1.bf16.msra.mxu0 0
    %1722 = vmatprep.subr.bf16.mxu0 0
    %1723 = vmatpush1.bf16.msra.mxu0 0
    %1724 = vmatprep.subr.bf16.mxu0 0
    %1725 = vmatpush1.bf16.msra.mxu0 0
    %1726 = vmatprep.subr.bf16.mxu0 0
    %1727 = vmatpush1.bf16.msra.mxu0 0
    %1728 = vmatprep.subr.bf16.mxu0 0
    %1729 = vmatpush1.bf16.msra.mxu0 0
    %1730 = vmatprep.subr.bf16.mxu0 0
    %1731 = vmatpush1.bf16.msra.mxu0 0
    %1732 = vmatprep.subr.bf16.mxu0 0
    %1733 = vmatpush1.bf16.msra.mxu0 0
    %1734 = vmatprep.subr.bf16.mxu0 0
    %1735 = vmatpush1.bf16.msra.mxu0 0
    %1736 = vmatprep.subr.bf16.mxu0 0
    %1737 = vmatpush1.bf16.msra.mxu0 0
    %1738 = vmatprep.subr.bf16.mxu0 0
    %1739 = vmatpush1.bf16.msra.mxu0 0
    %1740 = vmatprep.subr.bf16.mxu0 0
    %1741 = vmatpush1.bf16.msra.mxu0 0
    %1742 = vmatprep.subr.bf16.mxu0 0
    %1743 = vmatpush1.bf16.msra.mxu0 0
    %1744 = vmatprep.mubr.bf16.mxu0 0
    %1745 = vmatmul.mubr.bf16.gmra.mrb[0].mxu0 %v1710
    %v1746 = vpop.f32.mrb[0].mxu0
    %v1747 = vadd.f32 0.0, %v1746
    %v1748 = vpop.f32.mrb[0].mxu0
    %v1749 = vpop.f32.mrb[0].mxu0
    %v1750 = vpop.f32.mrb[0].mxu0
    %1751 = vdwg.mxu0
    %v1752 = vsel %vm209, %v1747, 0.0
    %1753 = vadd.xlane.f32.xlu0 %v1752
    %v1754 = vpop.xlane.xlu0 %1753
    %v1755 = vmul.f32 %v1754, %v283
    %v1756 = vsub.f32 %v1747, %v1755
    %v1757 = vmul.f32 %v1756, %v1756
    %v1758 = vsel %vm209, %v1757, 0.0
    %1759 = vadd.xlane.f32.xlu0 %v1758
    %v1760 = vpop.xlane.xlu0 %1759
    %v1761 = vmul.f32 %v1760, %v283
    %v1762 = vadd.f32 %v1761, 0.001
    %v1763 = vrsqrt.pop %v1762
    %v1764 = vmul.f32 %v1756, %v1763
    %v1765 = vmul.f32 %v1764, %v103
    %v1766 = vadd.f32 %v1765, %v107
    %v1767 = vxor.u32 %v1766, 2147483648
    %v1768 = vmul.f32 %v1767, 1.442695
    %v1769 = vpow.pop %v1768
    %v1770 = vadd.f32 %v1769, 1.0
    %v1771 = vrcp.pop %v1770
    %v1772 = vmul.f32 1.0, %v1771
    %1774 = vrot.lane.b32.xlu0 %v1747, 96
    %v1775 = vpop.permute.xlu0 %1774
    %v1777 = vsel %vm209, %v1775, 0.0
    %1778 = vadd.xlane.f32.xlu0 %v1777
    %v1779 = vpop.xlane.xlu0 %1778
    %v1780 = vmul.f32 %v1779, %v283
    %v1781 = vsub.f32 %v1747, %v1780
    %v1782 = vmul.f32 %v1781, %v1781
    %1784 = vrot.lane.b32.xlu0 %v1782, 96
    %v1785 = vpop.permute.xlu0 %1784
    %v1787 = vsel %vm209, %v1785, 0.0
    %1788 = vadd.xlane.f32.xlu0 %v1787
    %v1789 = vpop.xlane.xlu0 %1788
    %v1790 = vmul.f32 %v1789, %v283
    %v1791 = vadd.f32 %v1790, 0.001
    %v1792 = vrsqrt.pop %v1791
    %v1793 = vmul.f32 %v1781, %v1792
    %v1794 = vmul.f32 %v1793, %v325
    %v1795 = vadd.f32 %v1794, %v330
    %v1796 = vxor.u32 %v1795, 2147483648
    %v1797 = vmul.f32 %v1796, 1.442695
    %v1798 = vpow.pop %v1797
    %v1799 = vadd.f32 %v1798, 1.0
    %v1800 = vrcp.pop %v1799
    %v1801 = vmul.f32 1.0, %v1800
    %1802 = vrot.lane.b32.xlu0 %v1747, 32
    %v1803 = vpop.permute.xlu0 %1802
    %v1805 = vmul.f32 %v1772, %v1803
    %1807 = vrot.lane.b32.xlu0 %v1805, 64
    %v1808 = vpop.permute.xlu0 %1807
    %v1810 = vadd.f32 %v1747, %v1808
    %1812 = vrot.lane.b32.xlu0 %v1810, 64
    %v1813 = vpop.permute.xlu0 %1812
    %v1815 = vsel %vm209, %v1813, 0.0
    %1816 = vadd.xlane.f32.xlu0 %v1815
    %v1817 = vpop.xlane.xlu0 %1816
    %v1818 = vmul.f32 %v1817, %v283
    %v1819 = vsub.f32 %v1810, %v1818
    %v1820 = vmul.f32 %v1819, %v1819
    %1822 = vrot.lane.b32.xlu0 %v1820, 64
    %v1823 = vpop.permute.xlu0 %1822
    %v1825 = vsel %vm209, %v1823, 0.0
    %1826 = vadd.xlane.f32.xlu0 %v1825
    %v1827 = vpop.xlane.xlu0 %1826
    %v1828 = vmul.f32 %v1827, %v283
    %v1829 = vadd.f32 %v1828, 0.001
    %v1830 = vrsqrt.pop %v1829
    %v1831 = vmul.f32 %v1819, %v1830
    %v1832 = vmul.f32 %v1831, %v371
    %v1833 = vadd.f32 %v1832, %v376
    %v1834 = vtanh.pop %v1833
    %1836 = vrot.lane.b32.xlu0 %v1834, 96
    %v1837 = vpop.permute.xlu0 %1836
    %v1839 = vmul.f32 %v1801, %v1837
    %v1840 = vsub.f32 1.0, %v1801
    %v1841 = vmul.f32 %v1840, %v1648
    %v1842 = vadd.f32 %v1839, %v1841
    %1844 = vrot.lane.b32.xlu0 %v1842, 96
    %v1845 = vpop.permute.xlu0 %1844
    %1848 = vrot.lane.b32.xlu0 %v1640, 32
    %v1849 = vpop.permute.xlu0 %1848
    %v1851 = vsel %vm209, %v1845, %v1849
    %v1852 = vpack.c.bf16 %v1851, %v1851
    %v1854 = vsel %vm236, %v1852, 0
    %1856 = vmatprep.subr.bf16.mxu0 0
    %1857 = vmatpush1.bf16.msra.mxu0 %v414
    %1858 = vmatprep.subr.bf16.mxu0 0
    %1859 = vmatpush1.bf16.msra.mxu0 %v415
    %1860 = vmatprep.subr.bf16.mxu0 0
    %1861 = vmatpush1.bf16.msra.mxu0 %v416
    %1862 = vmatprep.subr.bf16.mxu0 0
    %1863 = vmatpush1.bf16.msra.mxu0 %v417
    %1864 = vmatprep.subr.bf16.mxu0 0
    %1865 = vmatpush1.bf16.msra.mxu0 0
    %1866 = vmatprep.subr.bf16.mxu0 0
    %1867 = vmatpush1.bf16.msra.mxu0 0
    %1868 = vmatprep.subr.bf16.mxu0 0
    %1869 = vmatpush1.bf16.msra.mxu0 0
    %1870 = vmatprep.subr.bf16.mxu0 0
    %1871 = vmatpush1.bf16.msra.mxu0 0
    %1872 = vmatprep.subr.bf16.mxu0 0
    %1873 = vmatpush1.bf16.msra.mxu0 0
    %1874 = vmatprep.subr.bf16.mxu0 0
    %1875 = vmatpush1.bf16.msra.mxu0 0
    %1876 = vmatprep.subr.bf16.mxu0 0
    %1877 = vmatpush1.bf16.msra.mxu0 0
    %1878 = vmatprep.subr.bf16.mxu0 0
    %1879 = vmatpush1.bf16.msra.mxu0 0
    %1880 = vmatprep.subr.bf16.mxu0 0
    %1881 = vmatpush1.bf16.msra.mxu0 0
    %1882 = vmatprep.subr.bf16.mxu0 0
    %1883 = vmatpush1.bf16.msra.mxu0 0
    %1884 = vmatprep.subr.bf16.mxu0 0
    %1885 = vmatpush1.bf16.msra.mxu0 0
    %1886 = vmatprep.subr.bf16.mxu0 0
    %1887 = vmatpush1.bf16.msra.mxu0 0
    %1888 = vmatprep.mubr.bf16.mxu0 0
    %1889 = vmatmul.mubr.bf16.gmra.mrb[0].mxu0 %v1854
    %v1890 = vpop.f32.mrb[0].mxu0
    %v1891 = vadd.f32 %v127, %v1890
    %v1892 = vpop.f32.mrb[0].mxu0
    %v1893 = vpop.f32.mrb[0].mxu0
    %v1894 = vpop.f32.mrb[0].mxu0
    %1895 = vdwg.mxu0
    %v1896 = vmax.f32 %v1891, 0.0
    %v1897 = vpack.c.bf16 %v1896, %v1896
    %v1899 = vsel %vm236, %v1897, 0
    %1901 = vmatprep.subr.bf16.mxu0 0
    %1902 = vmatpush1.bf16.msra.mxu0 %v483
    %1903 = vmatprep.subr.bf16.mxu0 0
    %1904 = vmatpush1.bf16.msra.mxu0 %v484
    %1905 = vmatprep.subr.bf16.mxu0 0
    %1906 = vmatpush1.bf16.msra.mxu0 %v485
    %1907 = vmatprep.subr.bf16.mxu0 0
    %1908 = vmatpush1.bf16.msra.mxu0 %v486
    %1909 = vmatprep.subr.bf16.mxu0 0
    %1910 = vmatpush1.bf16.msra.mxu0 0
    %1911 = vmatprep.subr.bf16.mxu0 0
    %1912 = vmatpush1.bf16.msra.mxu0 0
    %1913 = vmatprep.subr.bf16.mxu0 0
    %1914 = vmatpush1.bf16.msra.mxu0 0
    %1915 = vmatprep.subr.bf16.mxu0 0
    %1916 = vmatpush1.bf16.msra.mxu0 0
    %1917 = vmatprep.subr.bf16.mxu0 0
    %1918 = vmatpush1.bf16.msra.mxu0 0
    %1919 = vmatprep.subr.bf16.mxu0 0
    %1920 = vmatpush1.bf16.msra.mxu0 0
    %1921 = vmatprep.subr.bf16.mxu0 0
    %1922 = vmatpush1.bf16.msra.mxu0 0
    %1923 = vmatprep.subr.bf16.mxu0 0
    %1924 = vmatpush1.bf16.msra.mxu0 0
    %1925 = vmatprep.subr.bf16.mxu0 0
    %1926 = vmatpush1.bf16.msra.mxu0 0
    %1927 = vmatprep.subr.bf16.mxu0 0
    %1928 = vmatpush1.bf16.msra.mxu0 0
    %1929 = vmatprep.subr.bf16.mxu0 0
    %1930 = vmatpush1.bf16.msra.mxu0 0
    %1931 = vmatprep.subr.bf16.mxu0 0
    %1932 = vmatpush1.bf16.msra.mxu0 0
    %1933 = vmatprep.mubr.bf16.mxu0 0
    %1934 = vmatmul.mubr.bf16.gmra.mrb[0].mxu0 %v1899
    %v1935 = vpop.f32.mrb[0].mxu0
    %v1936 = vadd.f32 %v131, %v1935
    %v1937 = vpop.f32.mrb[0].mxu0
    %v1938 = vpop.f32.mrb[0].mxu0
    %v1939 = vpop.f32.mrb[0].mxu0
    %1940 = vdwg.mxu0
    %v1941 = vmax.f32 %v1936, 0.0
    %vm1942 = vcmp.ne.f32.partialorder %v1936, %v1936
    %v1943 = vadd.f32 %v1936, 0.0
    %v1944 = vand.u32 2147483647, %v1936
    %v1945 = vsub.f32 0.0, %v1944
    %v1946 = vmul.f32 %v1945, 1.442695
    %v1947 = vpow.pop %v1946
    %v1948 = vadd.f32 %v1947, 1.0
    %v1949 = vlog2.pop %v1948
    %v1950 = vmul.f32 %v1949, 0.6931472
    %v1951 = vmul.f32 -0.5, %v1947
    %v1952 = vadd.f32 %v1951, 1.0
    %v1953 = vmul.f32 %v1952, %v1947
    %v1954 = vand.u32 2147483647, %v1947
    %vm1955 = vcmp.lt.f32.partialorder %v1954, 0.0004427343
    %v1956 = vsel %vm1955, %v1953, %v1950
    %v1957 = vadd.f32 %v1941, %v1956
    %v1958 = vsel %vm1942, %v1943, %v1957
    %v1959 = vadd.f32 %v1958, 0.1
    %1961 = vrot.lane.b32.xlu0 %v1643, 24
    %v1962 = vpop.permute.xlu0 %1961
    %v1964 = vmul.f32 %v1959, %v1962
    %1966 = vrot.lane.b32.xlu0 %v1964, 120
    %v1967 = vpop.permute.xlu0 %1966
    %v1969 = vadd.f32 %v1936, %v1967
    %1971 = vrot.lane.b32.xlu0 %v1936, 32
    %v1972 = vpop.permute.xlu0 %1971
    %1975 = vrot.lane.b32.xlu0 %v1959, 32
    %v1976 = vpop.permute.xlu0 %1975
    %1979 = vrot.lane.b32.xlu0 %v1969, 48
    %v1980 = vpop.permute.xlu0 %1979
    %v1982 = vsel %vm209, %v1845, %v1972
    %v1983 = vsel %vm576, %v1982, %v1976
    %v1984 = vsel %vm578, %v1983, %v1972
    %v1985 = vsel %vm580, %v1984, %v1976
    %v1986 = vsel %vm236, %v1985, %v1980
    %v1987 = vsel %vm583, %v1986, 0.0
    %s1988 = scalar_lea.vmem %s7, 32
    %1989 = vst [vmem:[%s1988] sm:$0xff] %v1987
    %s1990 = scalar_lea.vmem [#allocation2], 160
    %v1991 = vld [vmem:[%s1990] sm:$0xff]
    %v1992 = vld [vmem:[%s1990 + $0x8] sm:$0xff]
    %v1993 = vld [vmem:[%s1990 + $0x10] sm:$0xff]
    %v1994 = vld [vmem:[%s1990 + $0x18] sm:$0xff]
    %1996 = vrot.lane.b32.xlu0 %v1993, 32
    %v1997 = vpop.permute.xlu0 %1996
    %v1999 = vmul.f32 %v1842, %v1997
    %2000 = vrot.lane.b32.xlu0 %v1993, 16
    %v2001 = vpop.permute.xlu0 %2000
    %v2003 = vmul.f32 %v1969, %v2001
    %2005 = vrot.lane.b32.xlu0 %v2003, 112
    %v2006 = vpop.permute.xlu0 %2005
    %2009 = vrot.lane.b32.xlu0 %v1992, 8
    %v2010 = vpop.permute.xlu0 %2009
    %v2012 = vsel %vm151, %v2006, %v2010
    %v2013 = vpack.c.bf16 %v2012, %v2012
    %v2015 = vsel %vm160, %v2013, 0
    %2017 = vmatprep.subr.bf16.mxu0 0
    %2018 = vmatpush1.bf16.msra.mxu0 %v158
    %2019 = vmatprep.subr.bf16.mxu0 0
    %2020 = vmatpush1.bf16.msra.mxu0 0
    %2021 = vmatprep.subr.bf16.mxu0 0
    %2022 = vmatpush1.bf16.msra.mxu0 0
    %2023 = vmatprep.subr.bf16.mxu0 0
    %2024 = vmatpush1.bf16.msra.mxu0 0
    %2025 = vmatprep.subr.bf16.mxu0 0
    %2026 = vmatpush1.bf16.msra.mxu0 0
    %2027 = vmatprep.subr.bf16.mxu0 0
    %2028 = vmatpush1.bf16.msra.mxu0 0
    %2029 = vmatprep.subr.bf16.mxu0 0
    %2030 = vmatpush1.bf16.msra.mxu0 0
    %2031 = vmatprep.subr.bf16.mxu0 0
    %2032 = vmatpush1.bf16.msra.mxu0 0
    %2033 = vmatprep.subr.bf16.mxu0 0
    %2034 = vmatpush1.bf16.msra.mxu0 0
    %2035 = vmatprep.subr.bf16.mxu0 0
    %2036 = vmatpush1.bf16.msra.mxu0 0
    %2037 = vmatprep.subr.bf16.mxu0 0
    %2038 = vmatpush1.bf16.msra.mxu0 0
    %2039 = vmatprep.subr.bf16.mxu0 0
    %2040 = vmatpush1.bf16.msra.mxu0 0
    %2041 = vmatprep.subr.bf16.mxu0 0
    %2042 = vmatpush1.bf16.msra.mxu0 0
    %2043 = vmatprep.subr.bf16.mxu0 0
    %2044 = vmatpush1.bf16.msra.mxu0 0
    %2045 = vmatprep.subr.bf16.mxu0 0
    %2046 = vmatpush1.bf16.msra.mxu0 0
    %2047 = vmatprep.subr.bf16.mxu0 0
    %2048 = vmatpush1.bf16.msra.mxu0 0
    %2049 = vmatprep.mubr.bf16.mxu0 0
    %2050 = vmatmul.mubr.bf16.gmra.mrb[0].mxu0 %v2015
    %v2051 = vpop.f32.mrb[0].mxu0
    %v2052 = vadd.f32 %v99, %v2051
    %v2053 = vpop.f32.mrb[0].mxu0
    %v2054 = vpop.f32.mrb[0].mxu0
    %v2055 = vpop.f32.mrb[0].mxu0
    %2056 = vdwg.mxu0
    %v2057 = vmax.f32 %v2052, 0.0
    %v2058 = vsel %vm209, %v2057, %v1999
    %v2059 = vpack.c.bf16 %v2058, %v2058
    %v2061 = vsel %vm236, %v2059, 0
    %2063 = vmatprep.subr.bf16.mxu0 0
    %2064 = vmatpush1.bf16.msra.mxu0 %v228
    %2065 = vmatprep.subr.bf16.mxu0 0
    %2066 = vmatpush1.bf16.msra.mxu0 %v229
    %2067 = vmatprep.subr.bf16.mxu0 0
    %2068 = vmatpush1.bf16.msra.mxu0 %v230
    %2069 = vmatprep.subr.bf16.mxu0 0
    %2070 = vmatpush1.bf16.msra.mxu0 %v231
    %2071 = vmatprep.subr.bf16.mxu0 0
    %2072 = vmatpush1.bf16.msra.mxu0 0
    %2073 = vmatprep.subr.bf16.mxu0 0
    %2074 = vmatpush1.bf16.msra.mxu0 0
    %2075 = vmatprep.subr.bf16.mxu0 0
    %2076 = vmatpush1.bf16.msra.mxu0 0
    %2077 = vmatprep.subr.bf16.mxu0 0
    %2078 = vmatpush1.bf16.msra.mxu0 0
    %2079 = vmatprep.subr.bf16.mxu0 0
    %2080 = vmatpush1.bf16.msra.mxu0 0
    %2081 = vmatprep.subr.bf16.mxu0 0
    %2082 = vmatpush1.bf16.msra.mxu0 0
    %2083 = vmatprep.subr.bf16.mxu0 0
    %2084 = vmatpush1.bf16.msra.mxu0 0
    %2085 = vmatprep.subr.bf16.mxu0 0
    %2086 = vmatpush1.bf16.msra.mxu0 0
    %2087 = vmatprep.subr.bf16.mxu0 0
    %2088 = vmatpush1.bf16.msra.mxu0 0
    %2089 = vmatprep.subr.bf16.mxu0 0
    %2090 = vmatpush1.bf16.msra.mxu0 0
    %2091 = vmatprep.subr.bf16.mxu0 0
    %2092 = vmatpush1.bf16.msra.mxu0 0
    %2093 = vmatprep.subr.bf16.mxu0 0
    %2094 = vmatpush1.bf16.msra.mxu0 0
    %2095 = vmatprep.mubr.bf16.mxu0 0
    %2096 = vmatmul.mubr.bf16.gmra.mrb[0].mxu0 %v2061
    %v2097 = vpop.f32.mrb[0].mxu0
    %v2098 = vadd.f32 0.0, %v2097
    %v2099 = vpop.f32.mrb[0].mxu0
    %v2100 = vpop.f32.mrb[0].mxu0
    %v2101 = vpop.f32.mrb[0].mxu0
    %2102 = vdwg.mxu0
    %v2103 = vsel %vm209, %v2098, 0.0
    %2104 = vadd.xlane.f32.xlu0 %v2103
    %v2105 = vpop.xlane.xlu0 %2104
    %v2106 = vmul.f32 %v2105, %v283
    %v2107 = vsub.f32 %v2098, %v2106
    %v2108 = vmul.f32 %v2107, %v2107
    %v2109 = vsel %vm209, %v2108, 0.0
    %2110 = vadd.xlane.f32.xlu0 %v2109
    %v2111 = vpop.xlane.xlu0 %2110
    %v2112 = vmul.f32 %v2111, %v283
    %v2113 = vadd.f32 %v2112, 0.001
    %v2114 = vrsqrt.pop %v2113
    %v2115 = vmul.f32 %v2107, %v2114
    %v2116 = vmul.f32 %v2115, %v103
    %v2117 = vadd.f32 %v2116, %v107
    %v2118 = vxor.u32 %v2117, 2147483648
    %v2119 = vmul.f32 %v2118, 1.442695
    %v2120 = vpow.pop %v2119
    %v2121 = vadd.f32 %v2120, 1.0
    %v2122 = vrcp.pop %v2121
    %v2123 = vmul.f32 1.0, %v2122
    %2125 = vrot.lane.b32.xlu0 %v2098, 96
    %v2126 = vpop.permute.xlu0 %2125
    %v2128 = vsel %vm209, %v2126, 0.0
    %2129 = vadd.xlane.f32.xlu0 %v2128
    %v2130 = vpop.xlane.xlu0 %2129
    %v2131 = vmul.f32 %v2130, %v283
    %v2132 = vsub.f32 %v2098, %v2131
    %v2133 = vmul.f32 %v2132, %v2132
    %2135 = vrot.lane.b32.xlu0 %v2133, 96
    %v2136 = vpop.permute.xlu0 %2135
    %v2138 = vsel %vm209, %v2136, 0.0
    %2139 = vadd.xlane.f32.xlu0 %v2138
    %v2140 = vpop.xlane.xlu0 %2139
    %v2141 = vmul.f32 %v2140, %v283
    %v2142 = vadd.f32 %v2141, 0.001
    %v2143 = vrsqrt.pop %v2142
    %v2144 = vmul.f32 %v2132, %v2143
    %v2145 = vmul.f32 %v2144, %v325
    %v2146 = vadd.f32 %v2145, %v330
    %v2147 = vxor.u32 %v2146, 2147483648
    %v2148 = vmul.f32 %v2147, 1.442695
    %v2149 = vpow.pop %v2148
    %v2150 = vadd.f32 %v2149, 1.0
    %v2151 = vrcp.pop %v2150
    %v2152 = vmul.f32 1.0, %v2151
    %2153 = vrot.lane.b32.xlu0 %v2098, 32
    %v2154 = vpop.permute.xlu0 %2153
    %v2156 = vmul.f32 %v2123, %v2154
    %2158 = vrot.lane.b32.xlu0 %v2156, 64
    %v2159 = vpop.permute.xlu0 %2158
    %v2161 = vadd.f32 %v2098, %v2159
    %2163 = vrot.lane.b32.xlu0 %v2161, 64
    %v2164 = vpop.permute.xlu0 %2163
    %v2166 = vsel %vm209, %v2164, 0.0
    %2167 = vadd.xlane.f32.xlu0 %v2166
    %v2168 = vpop.xlane.xlu0 %2167
    %v2169 = vmul.f32 %v2168, %v283
    %v2170 = vsub.f32 %v2161, %v2169
    %v2171 = vmul.f32 %v2170, %v2170
    %2173 = vrot.lane.b32.xlu0 %v2171, 64
    %v2174 = vpop.permute.xlu0 %2173
    %v2176 = vsel %vm209, %v2174, 0.0
    %2177 = vadd.xlane.f32.xlu0 %v2176
    %v2178 = vpop.xlane.xlu0 %2177
    %v2179 = vmul.f32 %v2178, %v283
    %v2180 = vadd.f32 %v2179, 0.001
    %v2181 = vrsqrt.pop %v2180
    %v2182 = vmul.f32 %v2170, %v2181
    %v2183 = vmul.f32 %v2182, %v371
    %v2184 = vadd.f32 %v2183, %v376
    %v2185 = vtanh.pop %v2184
    %2187 = vrot.lane.b32.xlu0 %v2185, 96
    %v2188 = vpop.permute.xlu0 %2187
    %v2190 = vmul.f32 %v2152, %v2188
    %v2191 = vsub.f32 1.0, %v2152
    %v2192 = vmul.f32 %v2191, %v1999
    %v2193 = vadd.f32 %v2190, %v2192
    %2195 = vrot.lane.b32.xlu0 %v2193, 96
    %v2196 = vpop.permute.xlu0 %2195
    %2199 = vrot.lane.b32.xlu0 %v1991, 32
    %v2200 = vpop.permute.xlu0 %2199
    %v2202 = vsel %vm209, %v2196, %v2200
    %v2203 = vpack.c.bf16 %v2202, %v2202
    %v2205 = vsel %vm236, %v2203, 0
    %2207 = vmatprep.subr.bf16.mxu0 0
    %2208 = vmatpush1.bf16.msra.mxu0 %v414
    %2209 = vmatprep.subr.bf16.mxu0 0
    %2210 = vmatpush1.bf16.msra.mxu0 %v415
    %2211 = vmatprep.subr.bf16.mxu0 0
    %2212 = vmatpush1.bf16.msra.mxu0 %v416
    %2213 = vmatprep.subr.bf16.mxu0 0
    %2214 = vmatpush1.bf16.msra.mxu0 %v417
    %2215 = vmatprep.subr.bf16.mxu0 0
    %2216 = vmatpush1.bf16.msra.mxu0 0
    %2217 = vmatprep.subr.bf16.mxu0 0
    %2218 = vmatpush1.bf16.msra.mxu0 0
    %2219 = vmatprep.subr.bf16.mxu0 0
    %2220 = vmatpush1.bf16.msra.mxu0 0
    %2221 = vmatprep.subr.bf16.mxu0 0
    %2222 = vmatpush1.bf16.msra.mxu0 0
    %2223 = vmatprep.subr.bf16.mxu0 0
    %2224 = vmatpush1.bf16.msra.mxu0 0
    %2225 = vmatprep.subr.bf16.mxu0 0
    %2226 = vmatpush1.bf16.msra.mxu0 0
    %2227 = vmatprep.subr.bf16.mxu0 0
    %2228 = vmatpush1.bf16.msra.mxu0 0
    %2229 = vmatprep.subr.bf16.mxu0 0
    %2230 = vmatpush1.bf16.msra.mxu0 0
    %2231 = vmatprep.subr.bf16.mxu0 0
    %2232 = vmatpush1.bf16.msra.mxu0 0
    %2233 = vmatprep.subr.bf16.mxu0 0
    %2234 = vmatpush1.bf16.msra.mxu0 0
    %2235 = vmatprep.subr.bf16.mxu0 0
    %2236 = vmatpush1.bf16.msra.mxu0 0
    %2237 = vmatprep.subr.bf16.mxu0 0
    %2238 = vmatpush1.bf16.msra.mxu0 0
    %2239 = vmatprep.mubr.bf16.mxu0 0
    %2240 = vmatmul.mubr.bf16.gmra.mrb[0].mxu0 %v2205
    %v2241 = vpop.f32.mrb[0].mxu0
    %v2242 = vadd.f32 %v127, %v2241
    %v2243 = vpop.f32.mrb[0].mxu0
    %v2244 = vpop.f32.mrb[0].mxu0
    %v2245 = vpop.f32.mrb[0].mxu0
    %2246 = vdwg.mxu0
    %v2247 = vmax.f32 %v2242, 0.0
    %v2248 = vpack.c.bf16 %v2247, %v2247
    %v2250 = vsel %vm236, %v2248, 0
    %2252 = vmatprep.subr.bf16.mxu0 0
    %2253 = vmatpush1.bf16.msra.mxu0 %v483
    %2254 = vmatprep.subr.bf16.mxu0 0
    %2255 = vmatpush1.bf16.msra.mxu0 %v484
    %2256 = vmatprep.subr.bf16.mxu0 0
    %2257 = vmatpush1.bf16.msra.mxu0 %v485
    %2258 = vmatprep.subr.bf16.mxu0 0
    %2259 = vmatpush1.bf16.msra.mxu0 %v486
    %2260 = vmatprep.subr.bf16.mxu0 0
    %2261 = vmatpush1.bf16.msra.mxu0 0
    %2262 = vmatprep.subr.bf16.mxu0 0
    %2263 = vmatpush1.bf16.msra.mxu0 0
    %2264 = vmatprep.subr.bf16.mxu0 0
    %2265 = vmatpush1.bf16.msra.mxu0 0
    %2266 = vmatprep.subr.bf16.mxu0 0
    %2267 = vmatpush1.bf16.msra.mxu0 0
    %2268 = vmatprep.subr.bf16.mxu0 0
    %2269 = vmatpush1.bf16.msra.mxu0 0
    %2270 = vmatprep.subr.bf16.mxu0 0
    %2271 = vmatpush1.bf16.msra.mxu0 0
    %2272 = vmatprep.subr.bf16.mxu0 0
    %2273 = vmatpush1.bf16.msra.mxu0 0
    %2274 = vmatprep.subr.bf16.mxu0 0
    %2275 = vmatpush1.bf16.msra.mxu0 0
    %2276 = vmatprep.subr.bf16.mxu0 0
    %2277 = vmatpush1.bf16.msra.mxu0 0
    %2278 = vmatprep.subr.bf16.mxu0 0
    %2279 = vmatpush1.bf16.msra.mxu0 0
    %2280 = vmatprep.subr.bf16.mxu0 0
    %2281 = vmatpush1.bf16.msra.mxu0 0
    %2282 = vmatprep.subr.bf16.mxu0 0
    %2283 = vmatpush1.bf16.msra.mxu0 0
    %2284 = vmatprep.mubr.bf16.mxu0 0
    %2285 = vmatmul.mubr.bf16.gmra.mrb[0].mxu0 %v2250
    %v2286 = vpop.f32.mrb[0].mxu0
    %v2287 = vadd.f32 %v131, %v2286
    %v2288 = vpop.f32.mrb[0].mxu0
    %v2289 = vpop.f32.mrb[0].mxu0
    %v2290 = vpop.f32.mrb[0].mxu0
    %2291 = vdwg.mxu0
    %v2292 = vmax.f32 %v2287, 0.0
    %vm2293 = vcmp.ne.f32.partialorder %v2287, %v2287
    %v2294 = vadd.f32 %v2287, 0.0
    %v2295 = vand.u32 2147483647, %v2287
    %v2296 = vsub.f32 0.0, %v2295
    %v2297 = vmul.f32 %v2296, 1.442695
    %v2298 = vpow.pop %v2297
    %v2299 = vadd.f32 %v2298, 1.0
    %v2300 = vlog2.pop %v2299
    %v2301 = vmul.f32 %v2300, 0.6931472
    %v2302 = vmul.f32 -0.5, %v2298
    %v2303 = vadd.f32 %v2302, 1.0
    %v2304 = vmul.f32 %v2303, %v2298
    %v2305 = vand.u32 2147483647, %v2298
    %vm2306 = vcmp.lt.f32.partialorder %v2305, 0.0004427343
    %v2307 = vsel %vm2306, %v2304, %v2301
    %v2308 = vadd.f32 %v2292, %v2307
    %v2309 = vsel %vm2293, %v2294, %v2308
    %v2310 = vadd.f32 %v2309, 0.1
    %2312 = vrot.lane.b32.xlu0 %v1994, 24
    %v2313 = vpop.permute.xlu0 %2312
    %v2315 = vmul.f32 %v2310, %v2313
    %2317 = vrot.lane.b32.xlu0 %v2315, 120
    %v2318 = vpop.permute.xlu0 %2317
    %v2320 = vadd.f32 %v2287, %v2318
    %2322 = vrot.lane.b32.xlu0 %v2287, 32
    %v2323 = vpop.permute.xlu0 %2322
    %2326 = vrot.lane.b32.xlu0 %v2310, 32
    %v2327 = vpop.permute.xlu0 %2326
    %2330 = vrot.lane.b32.xlu0 %v2320, 48
    %v2331 = vpop.permute.xlu0 %2330
    %v2333 = vsel %vm209, %v2196, %v2323
    %v2334 = vsel %vm576, %v2333, %v2327
    %v2335 = vsel %vm578, %v2334, %v2323
    %v2336 = vsel %vm580, %v2335, %v2327
    %v2337 = vsel %vm236, %v2336, %v2331
    %v2338 = vsel %vm583, %v2337, 0.0
    %s2339 = scalar_lea.vmem %s7, 40
    %2340 = vst [vmem:[%s2339] sm:$0xff] %v2338
    %s2341 = scalar_lea.vmem [#allocation2], 192
    %v2342 = vld [vmem:[%s2341] sm:$0xff]
    %v2343 = vld [vmem:[%s2341 + $0x8] sm:$0xff]
    %v2344 = vld [vmem:[%s2341 + $0x10] sm:$0xff]
    %v2345 = vld [vmem:[%s2341 + $0x18] sm:$0xff]
    %2347 = vrot.lane.b32.xlu0 %v2344, 32
    %v2348 = vpop.permute.xlu0 %2347
    %v2350 = vmul.f32 %v2193, %v2348
    %2351 = vrot.lane.b32.xlu0 %v2344, 16
    %v2352 = vpop.permute.xlu0 %2351
    %v2354 = vmul.f32 %v2320, %v2352
    %2356 = vrot.lane.b32.xlu0 %v2354, 112
    %v2357 = vpop.permute.xlu0 %2356
    %2360 = vrot.lane.b32.xlu0 %v2343, 8
    %v2361 = vpop.permute.xlu0 %2360
    %v2363 = vsel %vm151, %v2357, %v2361
    %v2364 = vpack.c.bf16 %v2363, %v2363
    %v2366 = vsel %vm160, %v2364, 0
    %2368 = vmatprep.subr.bf16.mxu0 0
    %2369 = vmatpush1.bf16.msra.mxu0 %v158
    %2370 = vmatprep.subr.bf16.mxu0 0
    %2371 = vmatpush1.bf16.msra.mxu0 0
    %2372 = vmatprep.subr.bf16.mxu0 0
    %2373 = vmatpush1.bf16.msra.mxu0 0
    %2374 = vmatprep.subr.bf16.mxu0 0
    %2375 = vmatpush1.bf16.msra.mxu0 0
    %2376 = vmatprep.subr.bf16.mxu0 0
    %2377 = vmatpush1.bf16.msra.mxu0 0
    %2378 = vmatprep.subr.bf16.mxu0 0
    %2379 = vmatpush1.bf16.msra.mxu0 0
    %2380 = vmatprep.subr.bf16.mxu0 0
    %2381 = vmatpush1.bf16.msra.mxu0 0
    %2382 = vmatprep.subr.bf16.mxu0 0
    %2383 = vmatpush1.bf16.msra.mxu0 0
    %2384 = vmatprep.subr.bf16.mxu0 0
    %2385 = vmatpush1.bf16.msra.mxu0 0
    %2386 = vmatprep.subr.bf16.mxu0 0
    %2387 = vmatpush1.bf16.msra.mxu0 0
    %2388 = vmatprep.subr.bf16.mxu0 0
    %2389 = vmatpush1.bf16.msra.mxu0 0
    %2390 = vmatprep.subr.bf16.mxu0 0
    %2391 = vmatpush1.bf16.msra.mxu0 0
    %2392 = vmatprep.subr.bf16.mxu0 0
    %2393 = vmatpush1.bf16.msra.mxu0 0
    %2394 = vmatprep.subr.bf16.mxu0 0
    %2395 = vmatpush1.bf16.msra.mxu0 0
    %2396 = vmatprep.subr.bf16.mxu0 0
    %2397 = vmatpush1.bf16.msra.mxu0 0
    %2398 = vmatprep.subr.bf16.mxu0 0
    %2399 = vmatpush1.bf16.msra.mxu0 0
    %2400 = vmatprep.mubr.bf16.mxu0 0
    %2401 = vmatmul.mubr.bf16.gmra.mrb[0].mxu0 %v2366
    %v2402 = vpop.f32.mrb[0].mxu0
    %v2403 = vadd.f32 %v99, %v2402
    %v2404 = vpop.f32.mrb[0].mxu0
    %v2405 = vpop.f32.mrb[0].mxu0
    %v2406 = vpop.f32.mrb[0].mxu0
    %2407 = vdwg.mxu0
    %v2408 = vmax.f32 %v2403, 0.0
    %v2409 = vsel %vm209, %v2408, %v2350
    %v2410 = vpack.c.bf16 %v2409, %v2409
    %v2412 = vsel %vm236, %v2410, 0
    %2414 = vmatprep.subr.bf16.mxu0 0
    %2415 = vmatpush1.bf16.msra.mxu0 %v228
    %2416 = vmatprep.subr.bf16.mxu0 0
    %2417 = vmatpush1.bf16.msra.mxu0 %v229
    %2418 = vmatprep.subr.bf16.mxu0 0
    %2419 = vmatpush1.bf16.msra.mxu0 %v230
    %2420 = vmatprep.subr.bf16.mxu0 0
    %2421 = vmatpush1.bf16.msra.mxu0 %v231
    %2422 = vmatprep.subr.bf16.mxu0 0
    %2423 = vmatpush1.bf16.msra.mxu0 0
    %2424 = vmatprep.subr.bf16.mxu0 0
    %2425 = vmatpush1.bf16.msra.mxu0 0
    %2426 = vmatprep.subr.bf16.mxu0 0
    %2427 = vmatpush1.bf16.msra.mxu0 0
    %2428 = vmatprep.subr.bf16.mxu0 0
    %2429 = vmatpush1.bf16.msra.mxu0 0
    %2430 = vmatprep.subr.bf16.mxu0 0
    %2431 = vmatpush1.bf16.msra.mxu0 0
    %2432 = vmatprep.subr.bf16.mxu0 0
    %2433 = vmatpush1.bf16.msra.mxu0 0
    %2434 = vmatprep.subr.bf16.mxu0 0
    %2435 = vmatpush1.bf16.msra.mxu0 0
    %2436 = vmatprep.subr.bf16.mxu0 0
    %2437 = vmatpush1.bf16.msra.mxu0 0
    %2438 = vmatprep.subr.bf16.mxu0 0
    %2439 = vmatpush1.bf16.msra.mxu0 0
    %2440 = vmatprep.subr.bf16.mxu0 0
    %2441 = vmatpush1.bf16.msra.mxu0 0
    %2442 = vmatprep.subr.bf16.mxu0 0
    %2443 = vmatpush1.bf16.msra.mxu0 0
    %2444 = vmatprep.subr.bf16.mxu0 0
    %2445 = vmatpush1.bf16.msra.mxu0 0
    %2446 = vmatprep.mubr.bf16.mxu0 0
    %2447 = vmatmul.mubr.bf16.gmra.mrb[0].mxu0 %v2412
    %v2448 = vpop.f32.mrb[0].mxu0
    %v2449 = vadd.f32 0.0, %v2448
    %v2450 = vpop.f32.mrb[0].mxu0
    %v2451 = vpop.f32.mrb[0].mxu0
    %v2452 = vpop.f32.mrb[0].mxu0
    %2453 = vdwg.mxu0
    %v2454 = vsel %vm209, %v2449, 0.0
    %2455 = vadd.xlane.f32.xlu0 %v2454
    %v2456 = vpop.xlane.xlu0 %2455
    %v2457 = vmul.f32 %v2456, %v283
    %v2458 = vsub.f32 %v2449, %v2457
    %v2459 = vmul.f32 %v2458, %v2458
    %v2460 = vsel %vm209, %v2459, 0.0
    %2461 = vadd.xlane.f32.xlu0 %v2460
    %v2462 = vpop.xlane.xlu0 %2461
    %v2463 = vmul.f32 %v2462, %v283
    %v2464 = vadd.f32 %v2463, 0.001
    %v2465 = vrsqrt.pop %v2464
    %v2466 = vmul.f32 %v2458, %v2465
    %v2467 = vmul.f32 %v2466, %v103
    %v2468 = vadd.f32 %v2467, %v107
    %v2469 = vxor.u32 %v2468, 2147483648
    %v2470 = vmul.f32 %v2469, 1.442695
    %v2471 = vpow.pop %v2470
    %v2472 = vadd.f32 %v2471, 1.0
    %v2473 = vrcp.pop %v2472
    %v2474 = vmul.f32 1.0, %v2473
    %2476 = vrot.lane.b32.xlu0 %v2449, 96
    %v2477 = vpop.permute.xlu0 %2476
    %v2479 = vsel %vm209, %v2477, 0.0
    %2480 = vadd.xlane.f32.xlu0 %v2479
    %v2481 = vpop.xlane.xlu0 %2480
    %v2482 = vmul.f32 %v2481, %v283
    %v2483 = vsub.f32 %v2449, %v2482
    %v2484 = vmul.f32 %v2483, %v2483
    %2486 = vrot.lane.b32.xlu0 %v2484, 96
    %v2487 = vpop.permute.xlu0 %2486
    %v2489 = vsel %vm209, %v2487, 0.0
    %2490 = vadd.xlane.f32.xlu0 %v2489
    %v2491 = vpop.xlane.xlu0 %2490
    %v2492 = vmul.f32 %v2491, %v283
    %v2493 = vadd.f32 %v2492, 0.001
    %v2494 = vrsqrt.pop %v2493
    %v2495 = vmul.f32 %v2483, %v2494
    %v2496 = vmul.f32 %v2495, %v325
    %v2497 = vadd.f32 %v2496, %v330
    %v2498 = vxor.u32 %v2497, 2147483648
    %v2499 = vmul.f32 %v2498, 1.442695
    %v2500 = vpow.pop %v2499
    %v2501 = vadd.f32 %v2500, 1.0
    %v2502 = vrcp.pop %v2501
    %v2503 = vmul.f32 1.0, %v2502
    %2504 = vrot.lane.b32.xlu0 %v2449, 32
    %v2505 = vpop.permute.xlu0 %2504
    %v2507 = vmul.f32 %v2474, %v2505
    %2509 = vrot.lane.b32.xlu0 %v2507, 64
    %v2510 = vpop.permute.xlu0 %2509
    %v2512 = vadd.f32 %v2449, %v2510
    %2514 = vrot.lane.b32.xlu0 %v2512, 64
    %v2515 = vpop.permute.xlu0 %2514
    %v2517 = vsel %vm209, %v2515, 0.0
    %2518 = vadd.xlane.f32.xlu0 %v2517
    %v2519 = vpop.xlane.xlu0 %2518
    %v2520 = vmul.f32 %v2519, %v283
    %v2521 = vsub.f32 %v2512, %v2520
    %v2522 = vmul.f32 %v2521, %v2521
    %2524 = vrot.lane.b32.xlu0 %v2522, 64
    %v2525 = vpop.permute.xlu0 %2524
    %v2527 = vsel %vm209, %v2525, 0.0
    %2528 = vadd.xlane.f32.xlu0 %v2527
    %v2529 = vpop.xlane.xlu0 %2528
    %v2530 = vmul.f32 %v2529, %v283
    %v2531 = vadd.f32 %v2530, 0.001
    %v2532 = vrsqrt.pop %v2531
    %v2533 = vmul.f32 %v2521, %v2532
    %v2534 = vmul.f32 %v2533, %v371
    %v2535 = vadd.f32 %v2534, %v376
    %v2536 = vtanh.pop %v2535
    %2538 = vrot.lane.b32.xlu0 %v2536, 96
    %v2539 = vpop.permute.xlu0 %2538
    %v2541 = vmul.f32 %v2503, %v2539
    %v2542 = vsub.f32 1.0, %v2503
    %v2543 = vmul.f32 %v2542, %v2350
    %v2544 = vadd.f32 %v2541, %v2543
    %2546 = vrot.lane.b32.xlu0 %v2544, 96
    %v2547 = vpop.permute.xlu0 %2546
    %2550 = vrot.lane.b32.xlu0 %v2342, 32
    %v2551 = vpop.permute.xlu0 %2550
    %v2553 = vsel %vm209, %v2547, %v2551
    %v2554 = vpack.c.bf16 %v2553, %v2553
    %v2556 = vsel %vm236, %v2554, 0
    %2558 = vmatprep.subr.bf16.mxu0 0
    %2559 = vmatpush1.bf16.msra.mxu0 %v414
    %2560 = vmatprep.subr.bf16.mxu0 0
    %2561 = vmatpush1.bf16.msra.mxu0 %v415
    %2562 = vmatprep.subr.bf16.mxu0 0
    %2563 = vmatpush1.bf16.msra.mxu0 %v416
    %2564 = vmatprep.subr.bf16.mxu0 0
    %2565 = vmatpush1.bf16.msra.mxu0 %v417
    %2566 = vmatprep.subr.bf16.mxu0 0
    %2567 = vmatpush1.bf16.msra.mxu0 0
    %2568 = vmatprep.subr.bf16.mxu0 0
    %2569 = vmatpush1.bf16.msra.mxu0 0
    %2570 = vmatprep.subr.bf16.mxu0 0
    %2571 = vmatpush1.bf16.msra.mxu0 0
    %2572 = vmatprep.subr.bf16.mxu0 0
    %2573 = vmatpush1.bf16.msra.mxu0 0
    %2574 = vmatprep.subr.bf16.mxu0 0
    %2575 = vmatpush1.bf16.msra.mxu0 0
    %2576 = vmatprep.subr.bf16.mxu0 0
    %2577 = vmatpush1.bf16.msra.mxu0 0
    %2578 = vmatprep.subr.bf16.mxu0 0
    %2579 = vmatpush1.bf16.msra.mxu0 0
    %2580 = vmatprep.subr.bf16.mxu0 0
    %2581 = vmatpush1.bf16.msra.mxu0 0
    %2582 = vmatprep.subr.bf16.mxu0 0
    %2583 = vmatpush1.bf16.msra.mxu0 0
    %2584 = vmatprep.subr.bf16.mxu0 0
    %2585 = vmatpush1.bf16.msra.mxu0 0
    %2586 = vmatprep.subr.bf16.mxu0 0
    %2587 = vmatpush1.bf16.msra.mxu0 0
    %2588 = vmatprep.subr.bf16.mxu0 0
    %2589 = vmatpush1.bf16.msra.mxu0 0
    %2590 = vmatprep.mubr.bf16.mxu0 0
    %2591 = vmatmul.mubr.bf16.gmra.mrb[0].mxu0 %v2556
    %v2592 = vpop.f32.mrb[0].mxu0
    %v2593 = vadd.f32 %v127, %v2592
    %v2594 = vpop.f32.mrb[0].mxu0
    %v2595 = vpop.f32.mrb[0].mxu0
    %v2596 = vpop.f32.mrb[0].mxu0
    %2597 = vdwg.mxu0
    %v2598 = vmax.f32 %v2593, 0.0
    %v2599 = vpack.c.bf16 %v2598, %v2598
    %v2601 = vsel %vm236, %v2599, 0
    %2603 = vmatprep.subr.bf16.mxu0 0
    %2604 = vmatpush1.bf16.msra.mxu0 %v483
    %2605 = vmatprep.subr.bf16.mxu0 0
    %2606 = vmatpush1.bf16.msra.mxu0 %v484
    %2607 = vmatprep.subr.bf16.mxu0 0
    %2608 = vmatpush1.bf16.msra.mxu0 %v485
    %2609 = vmatprep.subr.bf16.mxu0 0
    %2610 = vmatpush1.bf16.msra.mxu0 %v486
    %2611 = vmatprep.subr.bf16.mxu0 0
    %2612 = vmatpush1.bf16.msra.mxu0 0
    %2613 = vmatprep.subr.bf16.mxu0 0
    %2614 = vmatpush1.bf16.msra.mxu0 0
    %2615 = vmatprep.subr.bf16.mxu0 0
    %2616 = vmatpush1.bf16.msra.mxu0 0
    %2617 = vmatprep.subr.bf16.mxu0 0
    %2618 = vmatpush1.bf16.msra.mxu0 0
    %2619 = vmatprep.subr.bf16.mxu0 0
    %2620 = vmatpush1.bf16.msra.mxu0 0
    %2621 = vmatprep.subr.bf16.mxu0 0
    %2622 = vmatpush1.bf16.msra.mxu0 0
    %2623 = vmatprep.subr.bf16.mxu0 0
    %2624 = vmatpush1.bf16.msra.mxu0 0
    %2625 = vmatprep.subr.bf16.mxu0 0
    %2626 = vmatpush1.bf16.msra.mxu0 0
    %2627 = vmatprep.subr.bf16.mxu0 0
    %2628 = vmatpush1.bf16.msra.mxu0 0
    %2629 = vmatprep.subr.bf16.mxu0 0
    %2630 = vmatpush1.bf16.msra.mxu0 0
    %2631 = vmatprep.subr.bf16.mxu0 0
    %2632 = vmatpush1.bf16.msra.mxu0 0
    %2633 = vmatprep.subr.bf16.mxu0 0
    %2634 = vmatpush1.bf16.msra.mxu0 0
    %2635 = vmatprep.mubr.bf16.mxu0 0
    %2636 = vmatmul.mubr.bf16.gmra.mrb[0].mxu0 %v2601
    %v2637 = vpop.f32.mrb[0].mxu0
    %v2638 = vadd.f32 %v131, %v2637
    %v2639 = vpop.f32.mrb[0].mxu0
    %v2640 = vpop.f32.mrb[0].mxu0
    %v2641 = vpop.f32.mrb[0].mxu0
    %2642 = vdwg.mxu0
    %v2643 = vmax.f32 %v2638, 0.0
    %vm2644 = vcmp.ne.f32.partialorder %v2638, %v2638
    %v2645 = vadd.f32 %v2638, 0.0
    %v2646 = vand.u32 2147483647, %v2638
    %v2647 = vsub.f32 0.0, %v2646
    %v2648 = vmul.f32 %v2647, 1.442695
    %v2649 = vpow.pop %v2648
    %v2650 = vadd.f32 %v2649, 1.0
    %v2651 = vlog2.pop %v2650
    %v2652 = vmul.f32 %v2651, 0.6931472
    %v2653 = vmul.f32 -0.5, %v2649
    %v2654 = vadd.f32 %v2653, 1.0
    %v2655 = vmul.f32 %v2654, %v2649
    %v2656 = vand.u32 2147483647, %v2649
    %vm2657 = vcmp.lt.f32.partialorder %v2656, 0.0004427343
    %v2658 = vsel %vm2657, %v2655, %v2652
    %v2659 = vadd.f32 %v2643, %v2658
    %v2660 = vsel %vm2644, %v2645, %v2659
    %v2661 = vadd.f32 %v2660, 0.1
    %2663 = vrot.lane.b32.xlu0 %v2345, 24
    %v2664 = vpop.permute.xlu0 %2663
    %v2666 = vmul.f32 %v2661, %v2664
    %2668 = vrot.lane.b32.xlu0 %v2666, 120
    %v2669 = vpop.permute.xlu0 %2668
    %v2671 = vadd.f32 %v2638, %v2669
    %2673 = vrot.lane.b32.xlu0 %v2638, 32
    %v2674 = vpop.permute.xlu0 %2673
    %2677 = vrot.lane.b32.xlu0 %v2661, 32
    %v2678 = vpop.permute.xlu0 %2677
    %2681 = vrot.lane.b32.xlu0 %v2671, 48
    %v2682 = vpop.permute.xlu0 %2681
    %v2684 = vsel %vm209, %v2547, %v2674
    %v2685 = vsel %vm576, %v2684, %v2678
    %v2686 = vsel %vm578, %v2685, %v2674
    %v2687 = vsel %vm580, %v2686, %v2678
    %v2688 = vsel %vm236, %v2687, %v2682
    %v2689 = vsel %vm583, %v2688, 0.0
    %s2690 = scalar_lea.vmem %s7, 48
    %2691 = vst [vmem:[%s2690] sm:$0xff] %v2689
    %s2692 = scalar_lea.vmem [#allocation2], 224
    %v2693 = vld [vmem:[%s2692] sm:$0xff]
    %v2694 = vld [vmem:[%s2692 + $0x8] sm:$0xff]
    %v2695 = vld [vmem:[%s2692 + $0x10] sm:$0xff]
    %v2696 = vld [vmem:[%s2692 + $0x18] sm:$0xff]
    %2698 = vrot.lane.b32.xlu0 %v2695, 32
    %v2699 = vpop.permute.xlu0 %2698
    %v2701 = vmul.f32 %v2544, %v2699
    %2702 = vrot.lane.b32.xlu0 %v2695, 16
    %v2703 = vpop.permute.xlu0 %2702
    %v2705 = vmul.f32 %v2671, %v2703
    %2707 = vrot.lane.b32.xlu0 %v2705, 112
    %v2708 = vpop.permute.xlu0 %2707
    %2711 = vrot.lane.b32.xlu0 %v2694, 8
    %v2712 = vpop.permute.xlu0 %2711
    %v2714 = vsel %vm151, %v2708, %v2712
    %v2715 = vpack.c.bf16 %v2714, %v2714
    %v2717 = vsel %vm160, %v2715, 0
    %2719 = vmatprep.subr.bf16.mxu0 0
    %2720 = vmatpush1.bf16.msra.mxu0 %v158
    %2721 = vmatprep.subr.bf16.mxu0 0
    %2722 = vmatpush1.bf16.msra.mxu0 0
    %2723 = vmatprep.subr.bf16.mxu0 0
    %2724 = vmatpush1.bf16.msra.mxu0 0
    %2725 = vmatprep.subr.bf16.mxu0 0
    %2726 = vmatpush1.bf16.msra.mxu0 0
    %2727 = vmatprep.subr.bf16.mxu0 0
    %2728 = vmatpush1.bf16.msra.mxu0 0
    %2729 = vmatprep.subr.bf16.mxu0 0
    %2730 = vmatpush1.bf16.msra.mxu0 0
    %2731 = vmatprep.subr.bf16.mxu0 0
    %2732 = vmatpush1.bf16.msra.mxu0 0
    %2733 = vmatprep.subr.bf16.mxu0 0
    %2734 = vmatpush1.bf16.msra.mxu0 0
    %2735 = vmatprep.subr.bf16.mxu0 0
    %2736 = vmatpush1.bf16.msra.mxu0 0
    %2737 = vmatprep.subr.bf16.mxu0 0
    %2738 = vmatpush1.bf16.msra.mxu0 0
    %2739 = vmatprep.subr.bf16.mxu0 0
    %2740 = vmatpush1.bf16.msra.mxu0 0
    %2741 = vmatprep.subr.bf16.mxu0 0
    %2742 = vmatpush1.bf16.msra.mxu0 0
    %2743 = vmatprep.subr.bf16.mxu0 0
    %2744 = vmatpush1.bf16.msra.mxu0 0
    %2745 = vmatprep.subr.bf16.mxu0 0
    %2746 = vmatpush1.bf16.msra.mxu0 0
    %2747 = vmatprep.subr.bf16.mxu0 0
    %2748 = vmatpush1.bf16.msra.mxu0 0
    %2749 = vmatprep.subr.bf16.mxu0 0
    %2750 = vmatpush1.bf16.msra.mxu0 0
    %2751 = vmatprep.mubr.bf16.mxu0 0
    %2752 = vmatmul.mubr.bf16.gmra.mrb[0].mxu0 %v2717
    %v2753 = vpop.f32.mrb[0].mxu0
    %v2754 = vadd.f32 %v99, %v2753
    %v2755 = vpop.f32.mrb[0].mxu0
    %v2756 = vpop.f32.mrb[0].mxu0
    %v2757 = vpop.f32.mrb[0].mxu0
    %2758 = vdwg.mxu0
    %v2759 = vmax.f32 %v2754, 0.0
    %v2760 = vsel %vm209, %v2759, %v2701
    %v2761 = vpack.c.bf16 %v2760, %v2760
    %v2763 = vsel %vm236, %v2761, 0
    %2765 = vmatprep.subr.bf16.mxu0 0
    %2766 = vmatpush1.bf16.msra.mxu0 %v228
    %2767 = vmatprep.subr.bf16.mxu0 0
    %2768 = vmatpush1.bf16.msra.mxu0 %v229
    %2769 = vmatprep.subr.bf16.mxu0 0
    %2770 = vmatpush1.bf16.msra.mxu0 %v230
    %2771 = vmatprep.subr.bf16.mxu0 0
    %2772 = vmatpush1.bf16.msra.mxu0 %v231
    %2773 = vmatprep.subr.bf16.mxu0 0
    %2774 = vmatpush1.bf16.msra.mxu0 0
    %2775 = vmatprep.subr.bf16.mxu0 0
    %2776 = vmatpush1.bf16.msra.mxu0 0
    %2777 = vmatprep.subr.bf16.mxu0 0
    %2778 = vmatpush1.bf16.msra.mxu0 0
    %2779 = vmatprep.subr.bf16.mxu0 0
    %2780 = vmatpush1.bf16.msra.mxu0 0
    %2781 = vmatprep.subr.bf16.mxu0 0
    %2782 = vmatpush1.bf16.msra.mxu0 0
    %2783 = vmatprep.subr.bf16.mxu0 0
    %2784 = vmatpush1.bf16.msra.mxu0 0
    %2785 = vmatprep.subr.bf16.mxu0 0
    %2786 = vmatpush1.bf16.msra.mxu0 0
    %2787 = vmatprep.subr.bf16.mxu0 0
    %2788 = vmatpush1.bf16.msra.mxu0 0
    %2789 = vmatprep.subr.bf16.mxu0 0
    %2790 = vmatpush1.bf16.msra.mxu0 0
    %2791 = vmatprep.subr.bf16.mxu0 0
    %2792 = vmatpush1.bf16.msra.mxu0 0
    %2793 = vmatprep.subr.bf16.mxu0 0
    %2794 = vmatpush1.bf16.msra.mxu0 0
    %2795 = vmatprep.subr.bf16.mxu0 0
    %2796 = vmatpush1.bf16.msra.mxu0 0
    %2797 = vmatprep.mubr.bf16.mxu0 0
    %2798 = vmatmul.mubr.bf16.gmra.mrb[0].mxu0 %v2763
    %v2799 = vpop.f32.mrb[0].mxu0
    %v2800 = vadd.f32 0.0, %v2799
    %v2801 = vpop.f32.mrb[0].mxu0
    %v2802 = vpop.f32.mrb[0].mxu0
    %v2803 = vpop.f32.mrb[0].mxu0
    %2804 = vdwg.mxu0
    %v2805 = vsel %vm209, %v2800, 0.0
    %2806 = vadd.xlane.f32.xlu0 %v2805
    %v2807 = vpop.xlane.xlu0 %2806
    %v2808 = vmul.f32 %v2807, %v283
    %v2809 = vsub.f32 %v2800, %v2808
    %v2810 = vmul.f32 %v2809, %v2809
    %v2811 = vsel %vm209, %v2810, 0.0
    %2812 = vadd.xlane.f32.xlu0 %v2811
    %v2813 = vpop.xlane.xlu0 %2812
    %v2814 = vmul.f32 %v2813, %v283
    %v2815 = vadd.f32 %v2814, 0.001
    %v2816 = vrsqrt.pop %v2815
    %v2817 = vmul.f32 %v2809, %v2816
    %v2818 = vmul.f32 %v2817, %v103
    %v2819 = vadd.f32 %v2818, %v107
    %v2820 = vxor.u32 %v2819, 2147483648
    %v2821 = vmul.f32 %v2820, 1.442695
    %v2822 = vpow.pop %v2821
    %v2823 = vadd.f32 %v2822, 1.0
    %v2824 = vrcp.pop %v2823
    %v2825 = vmul.f32 1.0, %v2824
    %2827 = vrot.lane.b32.xlu0 %v2800, 96
    %v2828 = vpop.permute.xlu0 %2827
    %v2830 = vsel %vm209, %v2828, 0.0
    %2831 = vadd.xlane.f32.xlu0 %v2830
    %v2832 = vpop.xlane.xlu0 %2831
    %v2833 = vmul.f32 %v2832, %v283
    %v2834 = vsub.f32 %v2800, %v2833
    %v2835 = vmul.f32 %v2834, %v2834
    %2837 = vrot.lane.b32.xlu0 %v2835, 96
    %v2838 = vpop.permute.xlu0 %2837
    %v2840 = vsel %vm209, %v2838, 0.0
    %2841 = vadd.xlane.f32.xlu0 %v2840
    %v2842 = vpop.xlane.xlu0 %2841
    %v2843 = vmul.f32 %v2842, %v283
    %v2844 = vadd.f32 %v2843, 0.001
    %v2845 = vrsqrt.pop %v2844
    %v2846 = vmul.f32 %v2834, %v2845
    %v2847 = vmul.f32 %v2846, %v325
    %v2848 = vadd.f32 %v2847, %v330
    %v2849 = vxor.u32 %v2848, 2147483648
    %v2850 = vmul.f32 %v2849, 1.442695
    %v2851 = vpow.pop %v2850
    %v2852 = vadd.f32 %v2851, 1.0
    %v2853 = vrcp.pop %v2852
    %v2854 = vmul.f32 1.0, %v2853
    %2855 = vrot.lane.b32.xlu0 %v2800, 32
    %v2856 = vpop.permute.xlu0 %2855
    %v2858 = vmul.f32 %v2825, %v2856
    %2860 = vrot.lane.b32.xlu0 %v2858, 64
    %v2861 = vpop.permute.xlu0 %2860
    %v2863 = vadd.f32 %v2800, %v2861
    %2865 = vrot.lane.b32.xlu0 %v2863, 64
    %v2866 = vpop.permute.xlu0 %2865
    %v2868 = vsel %vm209, %v2866, 0.0
    %2869 = vadd.xlane.f32.xlu0 %v2868
    %v2870 = vpop.xlane.xlu0 %2869
    %v2871 = vmul.f32 %v2870, %v283
    %v2872 = vsub.f32 %v2863, %v2871
    %v2873 = vmul.f32 %v2872, %v2872
    %2875 = vrot.lane.b32.xlu0 %v2873, 64
    %v2876 = vpop.permute.xlu0 %2875
    %v2878 = vsel %vm209, %v2876, 0.0
    %2879 = vadd.xlane.f32.xlu0 %v2878
    %v2880 = vpop.xlane.xlu0 %2879
    %v2881 = vmul.f32 %v2880, %v283
    %v2882 = vadd.f32 %v2881, 0.001
    %v2883 = vrsqrt.pop %v2882
    %v2884 = vmul.f32 %v2872, %v2883
    %v2885 = vmul.f32 %v2884, %v371
    %v2886 = vadd.f32 %v2885, %v376
    %v2887 = vtanh.pop %v2886
    %2889 = vrot.lane.b32.xlu0 %v2887, 96
    %v2890 = vpop.permute.xlu0 %2889
    %v2892 = vmul.f32 %v2854, %v2890
    %v2893 = vsub.f32 1.0, %v2854
    %v2894 = vmul.f32 %v2893, %v2701
    %v2895 = vadd.f32 %v2892, %v2894
    %2897 = vrot.lane.b32.xlu0 %v2895, 96
    %v2898 = vpop.permute.xlu0 %2897
    %2901 = vrot.lane.b32.xlu0 %v2693, 32
    %v2902 = vpop.permute.xlu0 %2901
    %v2904 = vsel %vm209, %v2898, %v2902
    %v2905 = vpack.c.bf16 %v2904, %v2904
    %v2907 = vsel %vm236, %v2905, 0
    %2909 = vmatprep.subr.bf16.mxu0 0
    %2910 = vmatpush1.bf16.msra.mxu0 %v414
    %2911 = vmatprep.subr.bf16.mxu0 0
    %2912 = vmatpush1.bf16.msra.mxu0 %v415
    %2913 = vmatprep.subr.bf16.mxu0 0
    %2914 = vmatpush1.bf16.msra.mxu0 %v416
    %2915 = vmatprep.subr.bf16.mxu0 0
    %2916 = vmatpush1.bf16.msra.mxu0 %v417
    %2917 = vmatprep.subr.bf16.mxu0 0
    %2918 = vmatpush1.bf16.msra.mxu0 0
    %2919 = vmatprep.subr.bf16.mxu0 0
    %2920 = vmatpush1.bf16.msra.mxu0 0
    %2921 = vmatprep.subr.bf16.mxu0 0
    %2922 = vmatpush1.bf16.msra.mxu0 0
    %2923 = vmatprep.subr.bf16.mxu0 0
    %2924 = vmatpush1.bf16.msra.mxu0 0
    %2925 = vmatprep.subr.bf16.mxu0 0
    %2926 = vmatpush1.bf16.msra.mxu0 0
    %2927 = vmatprep.subr.bf16.mxu0 0
    %2928 = vmatpush1.bf16.msra.mxu0 0
    %2929 = vmatprep.subr.bf16.mxu0 0
    %2930 = vmatpush1.bf16.msra.mxu0 0
    %2931 = vmatprep.subr.bf16.mxu0 0
    %2932 = vmatpush1.bf16.msra.mxu0 0
    %2933 = vmatprep.subr.bf16.mxu0 0
    %2934 = vmatpush1.bf16.msra.mxu0 0
    %2935 = vmatprep.subr.bf16.mxu0 0
    %2936 = vmatpush1.bf16.msra.mxu0 0
    %2937 = vmatprep.subr.bf16.mxu0 0
    %2938 = vmatpush1.bf16.msra.mxu0 0
    %2939 = vmatprep.subr.bf16.mxu0 0
    %2940 = vmatpush1.bf16.msra.mxu0 0
    %2941 = vmatprep.mubr.bf16.mxu0 0
    %2942 = vmatmul.mubr.bf16.gmra.mrb[0].mxu0 %v2907
    %v2943 = vpop.f32.mrb[0].mxu0
    %v2944 = vadd.f32 %v127, %v2943
    %v2945 = vpop.f32.mrb[0].mxu0
    %v2946 = vpop.f32.mrb[0].mxu0
    %v2947 = vpop.f32.mrb[0].mxu0
    %2948 = vdwg.mxu0
    %v2949 = vmax.f32 %v2944, 0.0
    %v2950 = vpack.c.bf16 %v2949, %v2949
    %v2952 = vsel %vm236, %v2950, 0
    %2954 = vmatprep.subr.bf16.mxu0 0
    %2955 = vmatpush1.bf16.msra.mxu0 %v483
    %2956 = vmatprep.subr.bf16.mxu0 0
    %2957 = vmatpush1.bf16.msra.mxu0 %v484
    %2958 = vmatprep.subr.bf16.mxu0 0
    %2959 = vmatpush1.bf16.msra.mxu0 %v485
    %2960 = vmatprep.subr.bf16.mxu0 0
    %2961 = vmatpush1.bf16.msra.mxu0 %v486
    %2962 = vmatprep.subr.bf16.mxu0 0
    %2963 = vmatpush1.bf16.msra.mxu0 0
    %2964 = vmatprep.subr.bf16.mxu0 0
    %2965 = vmatpush1.bf16.msra.mxu0 0
    %2966 = vmatprep.subr.bf16.mxu0 0
    %2967 = vmatpush1.bf16.msra.mxu0 0
    %2968 = vmatprep.subr.bf16.mxu0 0
    %2969 = vmatpush1.bf16.msra.mxu0 0
    %2970 = vmatprep.subr.bf16.mxu0 0
    %2971 = vmatpush1.bf16.msra.mxu0 0
    %2972 = vmatprep.subr.bf16.mxu0 0
    %2973 = vmatpush1.bf16.msra.mxu0 0
    %2974 = vmatprep.subr.bf16.mxu0 0
    %2975 = vmatpush1.bf16.msra.mxu0 0
    %2976 = vmatprep.subr.bf16.mxu0 0
    %2977 = vmatpush1.bf16.msra.mxu0 0
    %2978 = vmatprep.subr.bf16.mxu0 0
    %2979 = vmatpush1.bf16.msra.mxu0 0
    %2980 = vmatprep.subr.bf16.mxu0 0
    %2981 = vmatpush1.bf16.msra.mxu0 0
    %2982 = vmatprep.subr.bf16.mxu0 0
    %2983 = vmatpush1.bf16.msra.mxu0 0
    %2984 = vmatprep.subr.bf16.mxu0 0
    %2985 = vmatpush1.bf16.msra.mxu0 0
    %2986 = vmatprep.mubr.bf16.mxu0 0
    %2987 = vmatmul.mubr.bf16.gmra.mrb[0].mxu0 %v2952
    %v2988 = vpop.f32.mrb[0].mxu0
    %v2989 = vadd.f32 %v131, %v2988
    %v2990 = vpop.f32.mrb[0].mxu0
    %v2991 = vpop.f32.mrb[0].mxu0
    %v2992 = vpop.f32.mrb[0].mxu0
    %2993 = vdwg.mxu0
    %v2994 = vmax.f32 %v2989, 0.0
    %vm2995 = vcmp.ne.f32.partialorder %v2989, %v2989
    %v2996 = vadd.f32 %v2989, 0.0
    %v2997 = vand.u32 2147483647, %v2989
    %v2998 = vsub.f32 0.0, %v2997
    %v2999 = vmul.f32 %v2998, 1.442695
    %v3000 = vpow.pop %v2999
    %v3001 = vadd.f32 %v3000, 1.0
    %v3002 = vlog2.pop %v3001
    %v3003 = vmul.f32 %v3002, 0.6931472
    %v3004 = vmul.f32 -0.5, %v3000
    %v3005 = vadd.f32 %v3004, 1.0
    %v3006 = vmul.f32 %v3005, %v3000
    %v3007 = vand.u32 2147483647, %v3000
    %vm3008 = vcmp.lt.f32.partialorder %v3007, 0.0004427343
    %v3009 = vsel %vm3008, %v3006, %v3003
    %v3010 = vadd.f32 %v2994, %v3009
    %v3011 = vsel %vm2995, %v2996, %v3010
    %v3012 = vadd.f32 %v3011, 0.1
    %3014 = vrot.lane.b32.xlu0 %v2696, 24
    %v3015 = vpop.permute.xlu0 %3014
    %v3017 = vmul.f32 %v3012, %v3015
    %3019 = vrot.lane.b32.xlu0 %v3017, 120
    %v3020 = vpop.permute.xlu0 %3019
    %v3022 = vadd.f32 %v2989, %v3020
    %3024 = vrot.lane.b32.xlu0 %v2989, 32
    %v3025 = vpop.permute.xlu0 %3024
    %3028 = vrot.lane.b32.xlu0 %v3012, 32
    %v3029 = vpop.permute.xlu0 %3028
    %3032 = vrot.lane.b32.xlu0 %v3022, 48
    %v3033 = vpop.permute.xlu0 %3032
    %v3035 = vsel %vm209, %v2898, %v3025
    %v3036 = vsel %vm576, %v3035, %v3029
    %v3037 = vsel %vm578, %v3036, %v3025
    %v3038 = vsel %vm580, %v3037, %v3029
    %v3039 = vsel %vm236, %v3038, %v3033
    %v3040 = vsel %vm583, %v3039, 0.0
    %s3041 = scalar_lea.vmem %s7, 56
    %3042 = vst [vmem:[%s3041] sm:$0xff] %v3040
    // Predicated region
    $region42: #{rssm_sequence_forward.1} parent=1 // pred_check
      _
    $region43: #{rssm_sequence_forward.1} parent=1 // pred_check_branch
      %3044 = sbr.rel (0) target = $region45
    $region44: #{rssm_sequence_forward.1} parent=1 // pred_region
      _
    $region45: #{rssm_sequence_forward.1} parent=1 // pred_fallthru
      _
    // Predicated region
    $region46: #{rssm_sequence_forward.1} parent=1 // pred_check
      _
    $region47: #{rssm_sequence_forward.1} parent=1 // pred_check_branch
      %3046 = sbr.rel (0) target = $region49
    $region48: #{rssm_sequence_forward.1} parent=1 // pred_region
      _
    $region49: #{rssm_sequence_forward.1} parent=1 // pred_fallthru
      _
    %3047 = vsyncpa [#allocation3], 1
    %3048 = vsyncpa [#allocation5], 1

</llo_original>
